<compile_context>
chip_gen: v7x
topology: tpu7x:2x2x1
jax: 0.10.0
libtpu: 0.0.40
codegen_flags: <defaults>
</compile_context>

<pallas_src>
import jax
import jax.numpy as jnp
from jax.experimental import pallas as pl
from jax.experimental.pallas import tpu as pltpu


def mlp_kernel(x_ref, w1_ref, b1_ref, w2_ref, b2_ref, w3_ref, b3_ref, o_ref):
    # In-kernel cast f32 -> bf16 (VPU work hidden under the MXU).
    x = x_ref[...].astype(jnp.bfloat16)
    # Layer 1: Linear(num_inputs -> 512) + ReLU   (Dropout = identity, eval mode)
    h1 = jnp.dot(x, w1_ref[...], preferred_element_type=jnp.float32)
    h1 = jnp.maximum(h1 + b1_ref[...], 0.0).astype(jnp.bfloat16)
    # Layer 2: Linear(512 -> 512) + ReLU
    h2 = jnp.dot(h1, w2_ref[...], preferred_element_type=jnp.float32)
    h2 = jnp.maximum(h2 + b2_ref[...], 0.0).astype(jnp.bfloat16)
    # Layer 3: Linear(512 -> 256) + ReLU, cast at the store (bf16 output)
    h3 = jnp.dot(h2, w3_ref[...], preferred_element_type=jnp.float32)
    o_ref[...] = jnp.maximum(h3 + b3_ref[...], 0.0).astype(o_ref.dtype)


def _pick_batch_tile(batch, max_tile=512, min_tile=128):
    """Largest tile (power-of-two halvings of max_tile, all multiples of 16)
    that still gives a grid of >= 2 when the batch allows it, so the
    'parallel' axis shards across both v7x TensorCores."""
    tile = max_tile
    while tile > min_tile and pl.cdiv(batch, tile) < 2:
        tile //= 2
    return tile


def amazon_base_forward(x, params, *, max_batch_tile=512, out_dtype=jnp.bfloat16):
    """x: (B, num_inputs) float32. Returns (B, 256) `out_dtype` (bf16 default).

    Weights in `params` are pre-transposed (in_features, out_features), bf16.
    Biases are (1, out_features) f32. num_inputs must be a multiple of 128
    (true for the module default 4096 and the test's 512); pad at param-prep
    time otherwise.
    """
    w1, b1, w2, b2, w3, b3 = params
    B, D_in = x.shape
    H1 = w1.shape[1]   # 512
    H2 = w2.shape[1]   # 512
    H3 = w3.shape[1]   # 256

    batch_tile = _pick_batch_tile(B, max_tile=max_batch_tile)
    assert batch_tile % 16 == 0, "bf16 sublane packing needs batch_tile % 16 == 0"
    num_tiles = pl.cdiv(B, batch_tile)   # ragged last tile handled by Pallas

    # Advisory cost estimate: helps XLA schedule this short call when embedded
    # in a larger model.
    flops = 2 * B * (D_in * H1 + H1 * H2 + H2 * H3)
    bytes_accessed = (
        B * D_in * x.dtype.itemsize
        + B * H3 * jnp.dtype(out_dtype).itemsize
        + sum(int(p.size) * p.dtype.itemsize for p in params)
    )
    cost = pl.CostEstimate(flops=flops, transcendentals=0,
                           bytes_accessed=bytes_accessed)

    out = pl.pallas_call(
        mlp_kernel,
        out_shape=jax.ShapeDtypeStruct((B, H3), out_dtype),
        grid=(num_tiles,),
        in_specs=[
            # batch-tiled input slab (streamed across the grid), f32 from HBM
            pl.BlockSpec((batch_tile, D_in), lambda i: (i, 0)),
            # full weights / biases, resident across the batch grid
            pl.BlockSpec((D_in, H1), lambda i: (0, 0)),
            pl.BlockSpec((1, H1), lambda i: (0, 0)),
            pl.BlockSpec((H1, H2), lambda i: (0, 0)),
            pl.BlockSpec((1, H2), lambda i: (0, 0)),
            pl.BlockSpec((H2, H3), lambda i: (0, 0)),
            pl.BlockSpec((1, H3), lambda i: (0, 0)),
        ],
        out_specs=pl.BlockSpec((batch_tile, H3), lambda i: (i, 0)),
        compiler_params=pltpu.CompilerParams(
            dimension_semantics=("parallel",),
        ),
        cost_estimate=cost,
    )(x, w1, b1, w2, b2, w3, b3)
    # NOTE: rows of the (possibly ragged) last tile beyond B are never written
    # (masked writeback); every in-kernel op is row-independent, so garbage
    # rows in the last *input* block cannot contaminate valid rows.
    return out


def init_params(key, num_inputs):
    """Deterministic init mirroring nn.Linear's U(-1/sqrt(fan_in), 1/sqrt(fan_in)).
    Weights stored transposed (in_features, out_features) in bf16; biases f32."""
    dims = [(num_inputs, 512), (512, 512), (512, 256)]
    params = []
    for (fan_in, fan_out) in dims:
        key, kw, kb = jax.random.split(key, 3)
        bound = 1.0 / jnp.sqrt(jnp.float32(fan_in))
        w_t = jax.random.uniform(kw, (fan_in, fan_out), jnp.float32, -bound, bound)
        b = jax.random.uniform(kb, (1, fan_out), jnp.float32, -bound, bound)
        params += [w_t.astype(jnp.bfloat16), b]
    return tuple(params)


def reference_forward(x, params):
    """Pure-JAX reference replicating the kernel's dtype path (bf16 operands,
    f32 accumulate), returned in f32 before the final output cast."""
    w1, b1, w2, b2, w3, b3 = params
    h = x.astype(jnp.bfloat16)
    h = jnp.maximum(jnp.dot(h, w1, preferred_element_type=jnp.float32) + b1, 0.0)
    h = h.astype(jnp.bfloat16)
    h = jnp.maximum(jnp.dot(h, w2, preferred_element_type=jnp.float32) + b2, 0.0)
    h = h.astype(jnp.bfloat16)
    return jnp.maximum(jnp.dot(h, w3, preferred_element_type=jnp.float32) + b3, 0.0)


if __name__ == "__main__":
    # Small, module-consistent shapes: AmazonBase(num_inputs=512), batch=200.
    # B=200 is deliberately NOT a multiple of the tile so the ragged-last-block
    # path is exercised; _pick_batch_tile selects 128 here -> grid=(2,), both
    # v7x TCs get a tile, and the second tile's OOB rows are masked on store.
    B, NUM_INPUTS = 200, 512
    key = jax.random.PRNGKey(0)
    key, kx = jax.random.split(key)
    x = jax.random.normal(kx, (B, NUM_INPUTS), jnp.float32)
    params = init_params(key, NUM_INPUTS)

    out = amazon_base_forward(x, params)
    out = jax.block_until_ready(out)

    ref = reference_forward(x, params)
    assert out.shape == (B, 256), out.shape
    assert out.dtype == jnp.bfloat16, out.dtype
    # bf16 output rounding (~0.4% rel) on top of the bf16/f32 compute path.
    assert jnp.allclose(out.astype(jnp.float32), ref, atol=5e-2, rtol=2e-2), \
        "mismatch vs JAX reference"

    print("KERNEL_OK")
</pallas_src>

<mosaic_0001>
module attributes {stable_mosaic.version = 11 : i64} {
  func.func @mlp_kernel(%arg0: i32, %arg1: memref<128x512xf32, #tpu.memory_space<vmem>>, %arg2: memref<512x512xbf16, #tpu.memory_space<vmem>>, %arg3: memref<1x512xf32, #tpu.memory_space<vmem>>, %arg4: memref<512x512xbf16, #tpu.memory_space<vmem>>, %arg5: memref<1x512xf32, #tpu.memory_space<vmem>>, %arg6: memref<512x256xbf16, #tpu.memory_space<vmem>>, %arg7: memref<1x256xf32, #tpu.memory_space<vmem>>, %arg8: memref<128x256xbf16, #tpu.memory_space<vmem>>) attributes {dimension_semantics = [#tpu.dimension_semantics<parallel>], iteration_bounds = array<i64: 2>, scalar_prefetch = 0 : i64, scratch_operands = 0 : i64, tpu.core_type = #tpu.core_type<tc>, window_params = [{transform_indices = @transform_0, window_bounds = array<i64: 128, 512>}, {pipeline_mode = #tpu.pipeline_mode<synchronous>, transform_indices = @transform_1, window_bounds = array<i64: 512, 512>}, {pipeline_mode = #tpu.pipeline_mode<synchronous>, transform_indices = @transform_2, window_bounds = array<i64: 1, 512>}, {pipeline_mode = #tpu.pipeline_mode<synchronous>, transform_indices = @transform_3, window_bounds = array<i64: 512, 512>}, {pipeline_mode = #tpu.pipeline_mode<synchronous>, transform_indices = @transform_4, window_bounds = array<i64: 1, 512>}, {pipeline_mode = #tpu.pipeline_mode<synchronous>, transform_indices = @transform_5, window_bounds = array<i64: 512, 256>}, {pipeline_mode = #tpu.pipeline_mode<synchronous>, transform_indices = @transform_6, window_bounds = array<i64: 1, 256>}, {transform_indices = @transform_7, window_bounds = array<i64: 128, 256>}]} {
    %c0 = arith.constant 0 : index
    %c0_0 = arith.constant 0 : index
    %0 = vector.load %arg1[%c0, %c0_0] : memref<128x512xf32, #tpu.memory_space<vmem>>, vector<128x512xf32>
    %1 = arith.truncf %0 : vector<128x512xf32> to vector<128x512xbf16>
    %c0_1 = arith.constant 0 : index
    %c0_2 = arith.constant 0 : index
    %2 = vector.load %arg2[%c0_1, %c0_2] : memref<512x512xbf16, #tpu.memory_space<vmem>>, vector<512x512xbf16>
    %cst = arith.constant dense<0.000000e+00> : vector<128x512xf32>
    %3 = tpu.matmul %1, %2, %cst {dimension_numbers = #tpu.dot_dimension_numbers<[1], [0], [0], [1], [0, 0, 1, 1], [], []>} : vector<128x512xbf16>, vector<512x512xbf16>, vector<128x512xf32> -> vector<128x512xf32>
    %c0_3 = arith.constant 0 : index
    %c0_4 = arith.constant 0 : index
    %4 = vector.load %arg3[%c0_3, %c0_4] : memref<1x512xf32, #tpu.memory_space<vmem>>, vector<1x512xf32>
    %5 = vector.broadcast %4 : vector<1x512xf32> to vector<128x512xf32>
    %6 = arith.addf %3, %5 : vector<128x512xf32>
    %cst_5 = arith.constant 0.000000e+00 : f32
    %7 = vector.broadcast %cst_5 : f32 to vector<128x512xf32>
    %8 = arith.maximumf %6, %7 : vector<128x512xf32>
    %9 = arith.truncf %8 : vector<128x512xf32> to vector<128x512xbf16>
    %c0_6 = arith.constant 0 : index
    %c0_7 = arith.constant 0 : index
    %10 = vector.load %arg4[%c0_6, %c0_7] : memref<512x512xbf16, #tpu.memory_space<vmem>>, vector<512x512xbf16>
    %cst_8 = arith.constant dense<0.000000e+00> : vector<128x512xf32>
    %11 = tpu.matmul %9, %10, %cst_8 {dimension_numbers = #tpu.dot_dimension_numbers<[1], [0], [0], [1], [0, 0, 1, 1], [], []>} : vector<128x512xbf16>, vector<512x512xbf16>, vector<128x512xf32> -> vector<128x512xf32>
    %c0_9 = arith.constant 0 : index
    %c0_10 = arith.constant 0 : index
    %12 = vector.load %arg5[%c0_9, %c0_10] : memref<1x512xf32, #tpu.memory_space<vmem>>, vector<1x512xf32>
    %13 = vector.broadcast %12 : vector<1x512xf32> to vector<128x512xf32>
    %14 = arith.addf %11, %13 : vector<128x512xf32>
    %cst_11 = arith.constant 0.000000e+00 : f32
    %15 = vector.broadcast %cst_11 : f32 to vector<128x512xf32>
    %16 = arith.maximumf %14, %15 : vector<128x512xf32>
    %17 = arith.truncf %16 : vector<128x512xf32> to vector<128x512xbf16>
    %c0_12 = arith.constant 0 : index
    %c0_13 = arith.constant 0 : index
    %18 = vector.load %arg6[%c0_12, %c0_13] : memref<512x256xbf16, #tpu.memory_space<vmem>>, vector<512x256xbf16>
    %cst_14 = arith.constant dense<0.000000e+00> : vector<128x256xf32>
    %19 = tpu.matmul %17, %18, %cst_14 {dimension_numbers = #tpu.dot_dimension_numbers<[1], [0], [0], [1], [0, 0, 1, 1], [], []>} : vector<128x512xbf16>, vector<512x256xbf16>, vector<128x256xf32> -> vector<128x256xf32>
    %c0_15 = arith.constant 0 : index
    %c0_16 = arith.constant 0 : index
    %20 = vector.load %arg7[%c0_15, %c0_16] : memref<1x256xf32, #tpu.memory_space<vmem>>, vector<1x256xf32>
    %21 = vector.broadcast %20 : vector<1x256xf32> to vector<128x256xf32>
    %22 = arith.addf %19, %21 : vector<128x256xf32>
    %cst_17 = arith.constant 0.000000e+00 : f32
    %23 = vector.broadcast %cst_17 : f32 to vector<128x256xf32>
    %24 = arith.maximumf %22, %23 : vector<128x256xf32>
    %25 = arith.truncf %24 : vector<128x256xf32> to vector<128x256xbf16>
    %c0_18 = arith.constant 0 : index
    %c0_19 = arith.constant 0 : index
    %26 = vector.load %arg8[%c0_18, %c0_19] : memref<128x256xbf16, #tpu.memory_space<vmem>>, vector<128x256xbf16>
    tpu.vector_store %arg8[%c0_18, %c0_19], %25 {strides = array<i32>} : memref<128x256xbf16, #tpu.memory_space<vmem>>, vector<128x256xbf16>,
    return
  }
  func.func @transform_0(%arg0: i32) -> (i32, i32) {
    %c0_i32 = arith.constant 0 : i32
    %c0_i32_0 = arith.constant 0 : i32
    return %arg0, %c0_i32 : i32, i32
  }
  func.func @transform_1(%arg0: i32) -> (i32, i32) {
    %c0_i32 = arith.constant 0 : i32
    %c0_i32_0 = arith.constant 0 : i32
    %c0_i32_1 = arith.constant 0 : i32
    return %c0_i32, %c0_i32_0 : i32, i32
  }
  func.func @transform_2(%arg0: i32) -> (i32, i32) {
    %c0_i32 = arith.constant 0 : i32
    %c0_i32_0 = arith.constant 0 : i32
    %c0_i32_1 = arith.constant 0 : i32
    return %c0_i32, %c0_i32_0 : i32, i32
  }
  func.func @transform_3(%arg0: i32) -> (i32, i32) {
    %c0_i32 = arith.constant 0 : i32
    %c0_i32_0 = arith.constant 0 : i32
    %c0_i32_1 = arith.constant 0 : i32
    return %c0_i32, %c0_i32_0 : i32, i32
  }
  func.func @transform_4(%arg0: i32) -> (i32, i32) {
    %c0_i32 = arith.constant 0 : i32
    %c0_i32_0 = arith.constant 0 : i32
    %c0_i32_1 = arith.constant 0 : i32
    return %c0_i32, %c0_i32_0 : i32, i32
  }
  func.func @transform_5(%arg0: i32) -> (i32, i32) {
    %c0_i32 = arith.constant 0 : i32
    %c0_i32_0 = arith.constant 0 : i32
    %c0_i32_1 = arith.constant 0 : i32
    return %c0_i32, %c0_i32_0 : i32, i32
  }
  func.func @transform_6(%arg0: i32) -> (i32, i32) {
    %c0_i32 = arith.constant 0 : i32
    %c0_i32_0 = arith.constant 0 : i32
    %c0_i32_1 = arith.constant 0 : i32
    return %c0_i32, %c0_i32_0 : i32, i32
  }
  func.func @transform_7(%arg0: i32) -> (i32, i32) {
    %c0_i32 = arith.constant 0 : i32
    %c0_i32_0 = arith.constant 0 : i32
    return %arg0, %c0_i32 : i32, i32
  }
}

</mosaic_0001>

<llo_original>
// kernel: tpu_custom_call.1
$region0: #{tpu_custom_call.1}
  #allocation0 [shape = 'u32[]', space=smem, size = 0x4, offset = 0x4, fixed_abs, tag = 'smem constant byte address 0x4 - core index']
  #allocation1 [shape = 'u32[144,128]{1,0:T(1,128)}', space=vmem, size = 0x12000, scoped, tag = 'internal scratch']
  %s0 = inlined_call_operand.hbm [shape: f32[200,512], index: 0, kind: input, shape index: {}]
  %s1 = inlined_call_operand.hbm [shape: bf16[512,512], index: 1, kind: input, shape index: {}]
  %s2 = inlined_call_operand.vmem [shape: f32[1,512], index: 2, kind: input, shape index: {}]
  %s3 = inlined_call_operand.hbm [shape: bf16[512,512], index: 3, kind: input, shape index: {}]
  %s4 = inlined_call_operand.vmem [shape: f32[1,512], index: 4, kind: input, shape index: {}]
  %s5 = inlined_call_operand.hbm [shape: bf16[512,256], index: 5, kind: input, shape index: {}]
  %s6 = inlined_call_operand.vmem [shape: f32[1,256], index: 6, kind: input, shape index: {}]
  %s7 = inlined_call_operand.hbm [shape: bf16[200,256], index: 7, kind: output, shape index: {}]
  %s8 = sld [smem:[#allocation0]]
  $region77: #{tpu_custom_call.1} parent=0
    _
  %s10 = ssub.s32 1, %s8
  %s11 = scalar_select 0, %s10, %s8
  $region1: #{tpu_custom_call.1} parent=0
    #allocation2 [shape = 'u8[524288]{0}', space=vmem, size = 0x80000, scoped, tag = 'input window, operand 0']
    #allocation3 [shape = 's32[2]{0}', space=sflag, size = 0x8, scoped, tag = 'scoped memory for tpu_custom_call.1']
    #allocation4 [shape = 's32[2]{0}', space=sflag, size = 0x8, scoped, tag = 'scoped memory for tpu_custom_call.1']
    #allocation5 [shape = 'u8[524288]{0}', space=vmem, size = 0x80000, scoped, tag = 'input window, operand 1, single buffered']
    #allocation6 [shape = 's32[1]{0}', space=sflag, size = 0x4, scoped, tag = 'scoped memory for tpu_custom_call.1']
    #allocation7 [shape = 'u8[524288]{0}', space=vmem, size = 0x80000, scoped, tag = 'input window, operand 3, single buffered']
    #allocation8 [shape = 'u8[262144]{0}', space=vmem, size = 0x40000, scoped, tag = 'input window, operand 5, single buffered']
    #allocation9 [shape = 's32[1]{0}', space=sflag, size = 0x4, scoped, tag = 'scoped memory for tpu_custom_call.1']
    #allocation10 [shape = 'u8[131072]{0}', space=vmem, size = 0x20000, scoped, tag = 'output window, operand 0']
    %12 = vsyncpa [#allocation3], 0
    %s13 = scalar_lea.sflag [#allocation3], 1
    %14 = vsyncpa %s13, 0
    %15 = vsyncpa [#allocation6], 0
    %16 = vsyncpa [#allocation9], 0
    %17 = vsyncpa [#allocation4], 0
    %s18 = scalar_lea.sflag [#allocation4], 1
    %19 = vsyncpa %s18, 0
    loop: start=0, step=1, limit=4
    $region2: #{tpu_custom_call.1} parent=1 // loop_pre_header
      _
    $region3: #{tpu_custom_call.1} parent=1 // loop_header
      %s21 = sphi 0, %s25
      %p22 = scmp.ge.s32.totalorder %s21, 4
      %s31 = sphi 0, %s33
      %s34 = sphi 0, %s31
      %s35 = sphi 0, %s34
      %s51 = sphi 0, %s35
      %s55 = sphi 0, %s55
      %s57 = sphi 0, %s55
      %s58 = sphi 0, %s57
      %s72 = sphi 0, %s58
      %s76 = sphi 0, %s76
      %s78 = sphi 0, %s76
      %s79 = sphi 0, %s78
      %s93 = sphi 0, %s79
      %s97 = sphi 0, %s97
      %s99 = sphi 0, %s97
      %s100 = sphi 0, %s99
      %s114 = sphi 0, %s100
      %s118 = sphi 0, %s118
      %s120 = sphi 0, %s118
      %s121 = sphi 0, %s120
      %s135 = sphi 0, %s121
      %s139 = sphi 0, %s139
      %s141 = sphi 0, %s139
      %s142 = sphi 0, %s141
      %s156 = sphi 0, %s142
      %s160 = sphi 0, %s160
      %s162 = sphi 0, %s160
      %s163 = sphi 0, %s162
      %s177 = sphi 0, %s163
      %s183 = sphi 0, %s185
      %s186 = sphi 0, %s183
      %s187 = sphi 0, %s186
      %s203 = sphi 0, %s187
    $region4: #{tpu_custom_call.1} parent=1 // loop_header_branch
      %24 = sbr.rel (%p22) target = $region8
    $region5: #{tpu_custom_call.1} parent=1 // loop_body
      %s26 = ssub.s32 %s21, 1
      %s27 = ssub.s32 %s21, 2
      %s28 = sadd.s32 %s21, 1
      %s29 = ssub.s32 %s21, %s28
      %p30 = scmp.eq.s32.totalorder %s29, 0
      %s32 = sadd.s32 %s31, 1
      %s33 = scalar_select %p30, %s31, %s32
      %p36 = pneg %p30
      %p37 = scmp.eq.s32.totalorder %s21, 1
      %p38 = por %p36, %p37
      %p39 = scmp.ne.s32.totalorder %s31, %s34
      %p40 = scmp.eq.s32.totalorder %s21, 0
      %p41 = por %p39, %p40
      %p42 = scmp.ne.s32.totalorder %s31, %s34
      %p43 = scmp.eq.s32.totalorder %s26, 1
      %p44 = por %p42, %p43
      %p45 = scmp.ne.s32.totalorder %s34, %s35
      %p46 = scmp.eq.s32.totalorder %s26, 0
      %p47 = por %p45, %p46
      %p48 = scmp.ne.s32.totalorder %s34, %s35
      %p49 = scmp.eq.s32.totalorder %s27, 1
      %p50 = por %p48, %p49
      %p52 = scmp.ne.s32.totalorder %s35, %s51
      %p53 = scmp.eq.s32.totalorder %s27, 0
      %p54 = por %p52, %p53
      %s56 = sadd.s32 %s55, 1
      %p59 = scmp.eq.s32.totalorder %s21, 1
      %p60 = scmp.ne.s32.totalorder %s55, %s57
      %p61 = scmp.eq.s32.totalorder %s21, 0
      %p62 = por %p60, %p61
      %p63 = scmp.ne.s32.totalorder %s55, %s57
      %p64 = scmp.eq.s32.totalorder %s26, 1
      %p65 = por %p63, %p64
      %p66 = scmp.ne.s32.totalorder %s57, %s58
      %p67 = scmp.eq.s32.totalorder %s26, 0
      %p68 = por %p66, %p67
      %p69 = scmp.ne.s32.totalorder %s57, %s58
      %p70 = scmp.eq.s32.totalorder %s27, 1
      %p71 = por %p69, %p70
      %p73 = scmp.ne.s32.totalorder %s58, %s72
      %p74 = scmp.eq.s32.totalorder %s27, 0
      %p75 = por %p73, %p74
      %s77 = sadd.s32 %s76, 1
      %p80 = scmp.eq.s32.totalorder %s21, 1
      %p81 = scmp.ne.s32.totalorder %s76, %s78
      %p82 = scmp.eq.s32.totalorder %s21, 0
      %p83 = por %p81, %p82
      %p84 = scmp.ne.s32.totalorder %s76, %s78
      %p85 = scmp.eq.s32.totalorder %s26, 1
      %p86 = por %p84, %p85
      %p87 = scmp.ne.s32.totalorder %s78, %s79
      %p88 = scmp.eq.s32.totalorder %s26, 0
      %p89 = por %p87, %p88
      %p90 = scmp.ne.s32.totalorder %s78, %s79
      %p91 = scmp.eq.s32.totalorder %s27, 1
      %p92 = por %p90, %p91
      %p94 = scmp.ne.s32.totalorder %s79, %s93
      %p95 = scmp.eq.s32.totalorder %s27, 0
      %p96 = por %p94, %p95
      %s98 = sadd.s32 %s97, 1
      %p101 = scmp.eq.s32.totalorder %s21, 1
      %p102 = scmp.ne.s32.totalorder %s97, %s99
      %p103 = scmp.eq.s32.totalorder %s21, 0
      %p104 = por %p102, %p103
      %p105 = scmp.ne.s32.totalorder %s97, %s99
      %p106 = scmp.eq.s32.totalorder %s26, 1
      %p107 = por %p105, %p106
      %p108 = scmp.ne.s32.totalorder %s99, %s100
      %p109 = scmp.eq.s32.totalorder %s26, 0
      %p110 = por %p108, %p109
      %p111 = scmp.ne.s32.totalorder %s99, %s100
      %p112 = scmp.eq.s32.totalorder %s27, 1
      %p113 = por %p111, %p112
      %p115 = scmp.ne.s32.totalorder %s100, %s114
      %p116 = scmp.eq.s32.totalorder %s27, 0
      %p117 = por %p115, %p116
      %s119 = sadd.s32 %s118, 1
      %p122 = scmp.eq.s32.totalorder %s21, 1
      %p123 = scmp.ne.s32.totalorder %s118, %s120
      %p124 = scmp.eq.s32.totalorder %s21, 0
      %p125 = por %p123, %p124
      %p126 = scmp.ne.s32.totalorder %s118, %s120
      %p127 = scmp.eq.s32.totalorder %s26, 1
      %p128 = por %p126, %p127
      %p129 = scmp.ne.s32.totalorder %s120, %s121
      %p130 = scmp.eq.s32.totalorder %s26, 0
      %p131 = por %p129, %p130
      %p132 = scmp.ne.s32.totalorder %s120, %s121
      %p133 = scmp.eq.s32.totalorder %s27, 1
      %p134 = por %p132, %p133
      %p136 = scmp.ne.s32.totalorder %s121, %s135
      %p137 = scmp.eq.s32.totalorder %s27, 0
      %p138 = por %p136, %p137
      %s140 = sadd.s32 %s139, 1
      %p143 = scmp.eq.s32.totalorder %s21, 1
      %p144 = scmp.ne.s32.totalorder %s139, %s141
      %p145 = scmp.eq.s32.totalorder %s21, 0
      %p146 = por %p144, %p145
      %p147 = scmp.ne.s32.totalorder %s139, %s141
      %p148 = scmp.eq.s32.totalorder %s26, 1
      %p149 = por %p147, %p148
      %p150 = scmp.ne.s32.totalorder %s141, %s142
      %p151 = scmp.eq.s32.totalorder %s26, 0
      %p152 = por %p150, %p151
      %p153 = scmp.ne.s32.totalorder %s141, %s142
      %p154 = scmp.eq.s32.totalorder %s27, 1
      %p155 = por %p153, %p154
      %p157 = scmp.ne.s32.totalorder %s142, %s156
      %p158 = scmp.eq.s32.totalorder %s27, 0
      %p159 = por %p157, %p158
      %s161 = sadd.s32 %s160, 1
      %p164 = scmp.eq.s32.totalorder %s21, 1
      %p165 = scmp.ne.s32.totalorder %s160, %s162
      %p166 = scmp.eq.s32.totalorder %s21, 0
      %p167 = por %p165, %p166
      %p168 = scmp.ne.s32.totalorder %s160, %s162
      %p169 = scmp.eq.s32.totalorder %s26, 1
      %p170 = por %p168, %p169
      %p171 = scmp.ne.s32.totalorder %s162, %s163
      %p172 = scmp.eq.s32.totalorder %s26, 0
      %p173 = por %p171, %p172
      %p174 = scmp.ne.s32.totalorder %s162, %s163
      %p175 = scmp.eq.s32.totalorder %s27, 1
      %p176 = por %p174, %p175
      %p178 = scmp.ne.s32.totalorder %s163, %s177
      %p179 = scmp.eq.s32.totalorder %s27, 0
      %p180 = por %p178, %p179
      %s181 = ssub.s32 %s21, %s28
      %p182 = scmp.eq.s32.totalorder %s181, 0
      %s184 = sadd.s32 %s183, 1
      %s185 = scalar_select %p182, %s183, %s184
      %p188 = pneg %p182
      %p189 = scmp.eq.s32.totalorder %s21, 1
      %p190 = por %p188, %p189
      %p191 = scmp.ne.s32.totalorder %s183, %s186
      %p192 = scmp.eq.s32.totalorder %s21, 0
      %p193 = por %p191, %p192
      %p194 = scmp.ne.s32.totalorder %s183, %s186
      %p195 = scmp.eq.s32.totalorder %s26, 1
      %p196 = por %p194, %p195
      %p197 = scmp.ne.s32.totalorder %s186, %s187
      %p198 = scmp.eq.s32.totalorder %s26, 0
      %p199 = por %p197, %p198
      %p200 = scmp.ne.s32.totalorder %s186, %s187
      %p201 = scmp.eq.s32.totalorder %s27, 1
      %p202 = por %p200, %p201
      %p204 = scmp.ne.s32.totalorder %s187, %s203
      %p205 = scmp.eq.s32.totalorder %s27, 0
      %p206 = por %p204, %p205
      %p207 = scmp.le.s32.totalorder 1, %s21
      %p208 = scmp.lt.s32.totalorder %s21, 3
      %p209 = pnand %p207, %p208
      %p210 = pneg %p209
      // Predicated region
      $region9: #{tpu_custom_call.1} parent=5 // pred_check
        _
      $region10: #{tpu_custom_call.1} parent=5 // pred_check_branch
        %212 = sbr.rel (%p209) target = $region12
      $region11: #{tpu_custom_call.1} parent=5 // pred_region
        %s213 = ssub.s32 %s21, 1
        // Predicated region
        $region13: #{tpu_custom_call.1} parent=11 // pred_check
          %p214 = pneg %p68
        $region14: #{tpu_custom_call.1} parent=11 // pred_check_branch
          %216 = sbr.rel (%p214) target = $region16
        $region15: #{tpu_custom_call.1} parent=11 // pred_region
          %s218 = ssub.s32 16384, 16384
          %219 = vsyncadd [#allocation6], %s218
          %s220 = sshll.u32 [#allocation5], 4
          %s221 = int_to_ptr.vmem [resolvable:$true] %s220
          %226 = dma.hbm_to_vmem [thread:$0]  %s1, 16384, %s221, [#allocation6], 256, 256, 16
        $region16: #{tpu_custom_call.1} parent=11 // pred_fallthru
          _
        // Predicated region
        $region17: #{tpu_custom_call.1} parent=11 // pred_check
          %p227 = pneg %p89
        $region18: #{tpu_custom_call.1} parent=11 // pred_check_branch
          %229 = sbr.rel (%p227) target = $region20
        $region19: #{tpu_custom_call.1} parent=11 // pred_region
          _
        $region20: #{tpu_custom_call.1} parent=11 // pred_fallthru
          _
        // Predicated region
        $region21: #{tpu_custom_call.1} parent=11 // pred_check
          %p230 = pneg %p110
        $region22: #{tpu_custom_call.1} parent=11 // pred_check_branch
          %232 = sbr.rel (%p230) target = $region24
        $region23: #{tpu_custom_call.1} parent=11 // pred_region
          %s234 = ssub.s32 16384, 16384
          %235 = vsyncadd [#allocation6], %s234
          %s236 = sshll.u32 [#allocation7], 4
          %s237 = int_to_ptr.vmem [resolvable:$true] %s236
          %242 = dma.hbm_to_vmem [thread:$0]  %s3, 16384, %s237, [#allocation6], 256, 256, 16
        $region24: #{tpu_custom_call.1} parent=11 // pred_fallthru
          _
        // Predicated region
        $region25: #{tpu_custom_call.1} parent=11 // pred_check
          %p243 = pneg %p131
        $region26: #{tpu_custom_call.1} parent=11 // pred_check_branch
          %245 = sbr.rel (%p243) target = $region28
        $region27: #{tpu_custom_call.1} parent=11 // pred_region
          _
        $region28: #{tpu_custom_call.1} parent=11 // pred_fallthru
          _
        // Predicated region
        $region29: #{tpu_custom_call.1} parent=11 // pred_check
          %p246 = pneg %p152
        $region30: #{tpu_custom_call.1} parent=11 // pred_check_branch
          %248 = sbr.rel (%p246) target = $region32
        $region31: #{tpu_custom_call.1} parent=11 // pred_region
          %s250 = ssub.s32 8192, 8192
          %251 = vsyncadd [#allocation9], %s250
          %s252 = sshll.u32 [#allocation8], 4
          %s253 = int_to_ptr.vmem [resolvable:$true] %s252
          %258 = dma.hbm_to_vmem [thread:$0]  %s5, 8192, %s253, [#allocation9], 128, 128, 8
        $region32: #{tpu_custom_call.1} parent=11 // pred_fallthru
          _
        // Predicated region
        $region33: #{tpu_custom_call.1} parent=11 // pred_check
          %p259 = pneg %p173
        $region34: #{tpu_custom_call.1} parent=11 // pred_check_branch
          %261 = sbr.rel (%p259) target = $region36
        $region35: #{tpu_custom_call.1} parent=11 // pred_region
          _
        $region36: #{tpu_custom_call.1} parent=11 // pred_fallthru
          _
      $region12: #{tpu_custom_call.1} parent=5 // pred_fallthru
        _
      %p262 = scmp.lt.s32.totalorder %s21, 2
      // Predicated region
      $region37: #{tpu_custom_call.1} parent=5 // pred_check
        %p263 = pneg %p262
      $region38: #{tpu_custom_call.1} parent=5 // pred_check_branch
        %265 = sbr.rel (%p263) target = $region40
      $region39: #{tpu_custom_call.1} parent=5 // pred_region
        // Predicated region
        $region41: #{tpu_custom_call.1} parent=39 // pred_check
          %p266 = pneg %p41
        $region42: #{tpu_custom_call.1} parent=39 // pred_check_branch
          %268 = sbr.rel (%p266) target = $region44
        $region43: #{tpu_custom_call.1} parent=39 // pred_region
          %s269 = sand.u32 %s31, 1
          %s270 = scalar_lea.sflag [#allocation3], %s269
          %s271 = sand.u32 %s31, 1
          %s272 = smul.addr %s271, 512
          %s273 = scalar_lea.vmem [#allocation2], %s272
          %s274 = smul.u32 16, %s21
          %s275 = ssub.s32 25, %s274
          %p276 = scmp.lt.s32.totalorder %s275, 16
          %s277 = scalar_select %p276, %s275, 16
          %s278 = smul.u32 128, %s277
          %s279 = smul.u32 %s278, 4
          %s281 = ssub.s32 8192, %s279
          %282 = vsyncadd %s270, %s281
          %p283 = scmp.ne.s32.totalorder 0, %s279
          %s284 = smul.addr %s274, 4
          %s285 = smul.addr %s284, 128
          %s286 = scalar_lea.hbm %s0, %s285
          %s287 = smul.u32 32, %s277
          %s288 = sshll.u32 %s273, 4
          %s289 = int_to_ptr.vmem [resolvable:$true] %s288
          %s290 = sshll.u32 %s287, 4
          %294 = dma.hbm_to_vmem [thread:$0]  (%p283), %s286, %s290, %s289, %s270, 512, 512, 32
        $region44: #{tpu_custom_call.1} parent=39 // pred_fallthru
          _
      $region40: #{tpu_custom_call.1} parent=5 // pred_fallthru
        _
      %p295 = scmp.le.s32.totalorder 1, %s21
      %p296 = scmp.lt.s32.totalorder %s21, 3
      %p297 = pnand %p295, %p296
      %p298 = pneg %p297
      // Predicated region
      $region45: #{tpu_custom_call.1} parent=5 // pred_check
        _
      $region46: #{tpu_custom_call.1} parent=5 // pred_check_branch
        %300 = sbr.rel (%p297) target = $region48
      $region47: #{tpu_custom_call.1} parent=5 // pred_region
        %s301 = ssub.s32 %s21, 1
        %s302 = sand.u32 %s34, 1
        %s303 = scalar_lea.sflag [#allocation3], %s302
        %s304 = sand.u32 %s34, 1
        %s305 = smul.addr %s304, 512
        %s306 = scalar_lea.vmem [#allocation2], %s305
        // Predicated region
        $region49: #{tpu_custom_call.1} parent=47 // pred_check
          %p307 = pneg %p47
        $region50: #{tpu_custom_call.1} parent=47 // pred_check_branch
          %309 = sbr.rel (%p307) target = $region52
        $region51: #{tpu_custom_call.1} parent=47 // pred_region
          %310 = dma.done %s303, 8192
        $region52: #{tpu_custom_call.1} parent=47 // pred_fallthru
          _
        // Predicated region
        $region53: #{tpu_custom_call.1} parent=47 // pred_check
          %p311 = pneg %p68
        $region54: #{tpu_custom_call.1} parent=47 // pred_check_branch
          %313 = sbr.rel (%p311) target = $region56
        $region55: #{tpu_custom_call.1} parent=47 // pred_region
          %314 = dma.done [#allocation6], 16384
        $region56: #{tpu_custom_call.1} parent=47 // pred_fallthru
          _
        // Predicated region
        $region57: #{tpu_custom_call.1} parent=47 // pred_check
          %p315 = pneg %p110
        $region58: #{tpu_custom_call.1} parent=47 // pred_check_branch
          %317 = sbr.rel (%p315) target = $region60
        $region59: #{tpu_custom_call.1} parent=47 // pred_region
          %318 = dma.done [#allocation6], 16384
        $region60: #{tpu_custom_call.1} parent=47 // pred_fallthru
          _
        // Predicated region
        $region61: #{tpu_custom_call.1} parent=47 // pred_check
          %p319 = pneg %p152
        $region62: #{tpu_custom_call.1} parent=47 // pred_check_branch
          %321 = sbr.rel (%p319) target = $region64
        $region63: #{tpu_custom_call.1} parent=47 // pred_region
          %322 = dma.done [#allocation9], 8192
        $region64: #{tpu_custom_call.1} parent=47 // pred_fallthru
          _
        %s323 = sand.u32 %s34, 1
        %s324 = scalar_lea.sflag [#allocation3], %s323
        %s325 = sand.u32 %s34, 1
        %s326 = smul.addr %s325, 512
        %s327 = scalar_lea.vmem [#allocation2], %s326
        %p328 = pneg %p47
        %p329 = pneg %p44
        %p330 = pneg %p68
        %p331 = pneg %p65
        %p332 = pneg %p89
        %p333 = pneg %p86
        %p334 = pneg %p110
        %p335 = pneg %p107
        %p336 = pneg %p131
        %p337 = pneg %p128
        %p338 = pneg %p152
        %p339 = pneg %p149
        %p340 = pneg %p173
        %p341 = pneg %p170
        %p342 = pneg %p199
        %p343 = pneg %p196
        %s344 = sand.u32 %s186, 1
        %s345 = scalar_lea.sflag [#allocation4], %s344
        %s346 = sand.u32 %s186, 1
        %s347 = smul.addr %s346, 128
        %s348 = scalar_lea.vmem [#allocation10], %s347
        %s349 = smul.u32 16, %s26
        %s350 = ssub.s32 25, %s349
        %p351 = scmp.lt.s32.totalorder %s350, 16
        %s352 = scalar_select %p351, %s350, 16
        %s353 = smul.u32 128, %s352
        %s354 = smul.u32 %s353, 4
        %s355 = smul.u32 16, %s26
        %s356 = ssub.s32 25, %s355
        %p357 = scmp.lt.s32.totalorder %s356, 16
        %s358 = scalar_select %p357, %s356, 16
        %s359 = smul.u32 64, %s358
        %s360 = smul.u32 %s359, 2
        %v361 = vld [vmem:[%s306] sm:$0xff]
        %v362 = vld [vmem:[%s306 + $0x8] sm:$0xff]
        %v363 = vld [vmem:[%s306 + $0x10] sm:$0xff]
        %v364 = vld [vmem:[%s306 + $0x18] sm:$0xff]
        %v365 = vld [vmem:[%s306 + $0x20] sm:$0xff]
        %v366 = vld [vmem:[%s306 + $0x28] sm:$0xff]
        %v367 = vld [vmem:[%s306 + $0x30] sm:$0xff]
        %v368 = vld [vmem:[%s306 + $0x38] sm:$0xff]
        %v369 = vld [vmem:[%s306 + $0x40] sm:$0xff]
        %v370 = vld [vmem:[%s306 + $0x48] sm:$0xff]
        %v371 = vld [vmem:[%s306 + $0x50] sm:$0xff]
        %v372 = vld [vmem:[%s306 + $0x58] sm:$0xff]
        %v373 = vld [vmem:[%s306 + $0x60] sm:$0xff]
        %v374 = vld [vmem:[%s306 + $0x68] sm:$0xff]
        %v375 = vld [vmem:[%s306 + $0x70] sm:$0xff]
        %v376 = vld [vmem:[%s306 + $0x78] sm:$0xff]
        %v377 = vld [vmem:[%s306 + $0x80] sm:$0xff]
        %v378 = vld [vmem:[%s306 + $0x88] sm:$0xff]
        %v379 = vld [vmem:[%s306 + $0x90] sm:$0xff]
        %v380 = vld [vmem:[%s306 + $0x98] sm:$0xff]
        %v381 = vld [vmem:[%s306 + $0xa0] sm:$0xff]
        %v382 = vld [vmem:[%s306 + $0xa8] sm:$0xff]
        %v383 = vld [vmem:[%s306 + $0xb0] sm:$0xff]
        %v384 = vld [vmem:[%s306 + $0xb8] sm:$0xff]
        %v385 = vld [vmem:[%s306 + $0xc0] sm:$0xff]
        %v386 = vld [vmem:[%s306 + $0xc8] sm:$0xff]
        %v387 = vld [vmem:[%s306 + $0xd0] sm:$0xff]
        %v388 = vld [vmem:[%s306 + $0xd8] sm:$0xff]
        %v389 = vld [vmem:[%s306 + $0xe0] sm:$0xff]
        %v390 = vld [vmem:[%s306 + $0xe8] sm:$0xff]
        %v391 = vld [vmem:[%s306 + $0xf0] sm:$0xff]
        %v392 = vld [vmem:[%s306 + $0xf8] sm:$0xff]
        %v393 = vld [vmem:[%s306 + $0x100] sm:$0xff]
        %v394 = vld [vmem:[%s306 + $0x108] sm:$0xff]
        %v395 = vld [vmem:[%s306 + $0x110] sm:$0xff]
        %v396 = vld [vmem:[%s306 + $0x118] sm:$0xff]
        %v397 = vld [vmem:[%s306 + $0x120] sm:$0xff]
        %v398 = vld [vmem:[%s306 + $0x128] sm:$0xff]
        %v399 = vld [vmem:[%s306 + $0x130] sm:$0xff]
        %v400 = vld [vmem:[%s306 + $0x138] sm:$0xff]
        %v401 = vld [vmem:[%s306 + $0x140] sm:$0xff]
        %v402 = vld [vmem:[%s306 + $0x148] sm:$0xff]
        %v403 = vld [vmem:[%s306 + $0x150] sm:$0xff]
        %v404 = vld [vmem:[%s306 + $0x158] sm:$0xff]
        %v405 = vld [vmem:[%s306 + $0x160] sm:$0xff]
        %v406 = vld [vmem:[%s306 + $0x168] sm:$0xff]
        %v407 = vld [vmem:[%s306 + $0x170] sm:$0xff]
        %v408 = vld [vmem:[%s306 + $0x178] sm:$0xff]
        %v409 = vld [vmem:[%s306 + $0x180] sm:$0xff]
        %v410 = vld [vmem:[%s306 + $0x188] sm:$0xff]
        %v411 = vld [vmem:[%s306 + $0x190] sm:$0xff]
        %v412 = vld [vmem:[%s306 + $0x198] sm:$0xff]
        %v413 = vld [vmem:[%s306 + $0x1a0] sm:$0xff]
        %v414 = vld [vmem:[%s306 + $0x1a8] sm:$0xff]
        %v415 = vld [vmem:[%s306 + $0x1b0] sm:$0xff]
        %v416 = vld [vmem:[%s306 + $0x1b8] sm:$0xff]
        %v417 = vld [vmem:[%s306 + $0x1c0] sm:$0xff]
        %v418 = vld [vmem:[%s306 + $0x1c8] sm:$0xff]
        %v419 = vld [vmem:[%s306 + $0x1d0] sm:$0xff]
        %v420 = vld [vmem:[%s306 + $0x1d8] sm:$0xff]
        %v421 = vld [vmem:[%s306 + $0x1e0] sm:$0xff]
        %v422 = vld [vmem:[%s306 + $0x1e8] sm:$0xff]
        %v423 = vld [vmem:[%s306 + $0x1f0] sm:$0xff]
        %v424 = vld [vmem:[%s306 + $0x1f8] sm:$0xff]
        %v425 = vpack.c.bf16 %v365, %v361
        %v426 = vpack.c.bf16 %v366, %v362
        %v427 = vpack.c.bf16 %v367, %v363
        %v428 = vpack.c.bf16 %v368, %v364
        %v429 = vpack.c.bf16 %v373, %v369
        %v430 = vpack.c.bf16 %v374, %v370
        %v431 = vpack.c.bf16 %v375, %v371
        %v432 = vpack.c.bf16 %v376, %v372
        %v433 = vpack.c.bf16 %v381, %v377
        %v434 = vpack.c.bf16 %v382, %v378
        %v435 = vpack.c.bf16 %v383, %v379
        %v436 = vpack.c.bf16 %v384, %v380
        %v437 = vpack.c.bf16 %v389, %v385
        %v438 = vpack.c.bf16 %v390, %v386
        %v439 = vpack.c.bf16 %v391, %v387
        %v440 = vpack.c.bf16 %v392, %v388
        %v441 = vpack.c.bf16 %v397, %v393
        %v442 = vpack.c.bf16 %v398, %v394
        %v443 = vpack.c.bf16 %v399, %v395
        %v444 = vpack.c.bf16 %v400, %v396
        %v445 = vpack.c.bf16 %v405, %v401
        %v446 = vpack.c.bf16 %v406, %v402
        %v447 = vpack.c.bf16 %v407, %v403
        %v448 = vpack.c.bf16 %v408, %v404
        %v449 = vpack.c.bf16 %v413, %v409
        %v450 = vpack.c.bf16 %v414, %v410
        %v451 = vpack.c.bf16 %v415, %v411
        %v452 = vpack.c.bf16 %v416, %v412
        %v453 = vpack.c.bf16 %v421, %v417
        %v454 = vpack.c.bf16 %v422, %v418
        %v455 = vpack.c.bf16 %v423, %v419
        %v456 = vpack.c.bf16 %v424, %v420
        %v457 = vld [vmem:[#allocation5] sm:$0xff]
        %v458 = vld [vmem:[#allocation5 + $0x8] sm:$0xff]
        %v459 = vld [vmem:[#allocation5 + $0x10] sm:$0xff]
        %v460 = vld [vmem:[#allocation5 + $0x18] sm:$0xff]
        %v461 = vld [vmem:[#allocation5 + $0x20] sm:$0xff]
        %v462 = vld [vmem:[#allocation5 + $0x28] sm:$0xff]
        %v463 = vld [vmem:[#allocation5 + $0x30] sm:$0xff]
        %v464 = vld [vmem:[#allocation5 + $0x38] sm:$0xff]
        %v465 = vld [vmem:[#allocation5 + $0x40] sm:$0xff]
        %v466 = vld [vmem:[#allocation5 + $0x48] sm:$0xff]
        %v467 = vld [vmem:[#allocation5 + $0x50] sm:$0xff]
        %v468 = vld [vmem:[#allocation5 + $0x58] sm:$0xff]
        %v469 = vld [vmem:[#allocation5 + $0x60] sm:$0xff]
        %v470 = vld [vmem:[#allocation5 + $0x68] sm:$0xff]
        %v471 = vld [vmem:[#allocation5 + $0x70] sm:$0xff]
        %v472 = vld [vmem:[#allocation5 + $0x78] sm:$0xff]
        %v473 = vld [vmem:[#allocation5 + $0x80] sm:$0xff]
        %v474 = vld [vmem:[#allocation5 + $0x88] sm:$0xff]
        %v475 = vld [vmem:[#allocation5 + $0x90] sm:$0xff]
        %v476 = vld [vmem:[#allocation5 + $0x98] sm:$0xff]
        %v477 = vld [vmem:[#allocation5 + $0xa0] sm:$0xff]
        %v478 = vld [vmem:[#allocation5 + $0xa8] sm:$0xff]
        %v479 = vld [vmem:[#allocation5 + $0xb0] sm:$0xff]
        %v480 = vld [vmem:[#allocation5 + $0xb8] sm:$0xff]
        %v481 = vld [vmem:[#allocation5 + $0xc0] sm:$0xff]
        %v482 = vld [vmem:[#allocation5 + $0xc8] sm:$0xff]
        %v483 = vld [vmem:[#allocation5 + $0xd0] sm:$0xff]
        %v484 = vld [vmem:[#allocation5 + $0xd8] sm:$0xff]
        %v485 = vld [vmem:[#allocation5 + $0xe0] sm:$0xff]
        %v486 = vld [vmem:[#allocation5 + $0xe8] sm:$0xff]
        %v487 = vld [vmem:[#allocation5 + $0xf0] sm:$0xff]
        %v488 = vld [vmem:[#allocation5 + $0xf8] sm:$0xff]
        %v489 = vld [vmem:[#allocation5 + $0x100] sm:$0xff]
        %v490 = vld [vmem:[#allocation5 + $0x108] sm:$0xff]
        %v491 = vld [vmem:[#allocation5 + $0x110] sm:$0xff]
        %v492 = vld [vmem:[#allocation5 + $0x118] sm:$0xff]
        %v493 = vld [vmem:[#allocation5 + $0x120] sm:$0xff]
        %v494 = vld [vmem:[#allocation5 + $0x128] sm:$0xff]
        %v495 = vld [vmem:[#allocation5 + $0x130] sm:$0xff]
        %v496 = vld [vmem:[#allocation5 + $0x138] sm:$0xff]
        %v497 = vld [vmem:[#allocation5 + $0x140] sm:$0xff]
        %v498 = vld [vmem:[#allocation5 + $0x148] sm:$0xff]
        %v499 = vld [vmem:[#allocation5 + $0x150] sm:$0xff]
        %v500 = vld [vmem:[#allocation5 + $0x158] sm:$0xff]
        %v501 = vld [vmem:[#allocation5 + $0x160] sm:$0xff]
        %v502 = vld [vmem:[#allocation5 + $0x168] sm:$0xff]
        %v503 = vld [vmem:[#allocation5 + $0x170] sm:$0xff]
        %v504 = vld [vmem:[#allocation5 + $0x178] sm:$0xff]
        %v505 = vld [vmem:[#allocation5 + $0x180] sm:$0xff]
        %v506 = vld [vmem:[#allocation5 + $0x188] sm:$0xff]
        %v507 = vld [vmem:[#allocation5 + $0x190] sm:$0xff]
        %v508 = vld [vmem:[#allocation5 + $0x198] sm:$0xff]
        %v509 = vld [vmem:[#allocation5 + $0x1a0] sm:$0xff]
        %v510 = vld [vmem:[#allocation5 + $0x1a8] sm:$0xff]
        %v511 = vld [vmem:[#allocation5 + $0x1b0] sm:$0xff]
        %v512 = vld [vmem:[#allocation5 + $0x1b8] sm:$0xff]
        %v513 = vld [vmem:[#allocation5 + $0x1c0] sm:$0xff]
        %v514 = vld [vmem:[#allocation5 + $0x1c8] sm:$0xff]
        %v515 = vld [vmem:[#allocation5 + $0x1d0] sm:$0xff]
        %v516 = vld [vmem:[#allocation5 + $0x1d8] sm:$0xff]
        %v517 = vld [vmem:[#allocation5 + $0x1e0] sm:$0xff]
        %v518 = vld [vmem:[#allocation5 + $0x1e8] sm:$0xff]
        %v519 = vld [vmem:[#allocation5 + $0x1f0] sm:$0xff]
        %v520 = vld [vmem:[#allocation5 + $0x1f8] sm:$0xff]
        %v521 = vld [vmem:[#allocation5 + $0x200] sm:$0xff]
        %v522 = vld [vmem:[#allocation5 + $0x208] sm:$0xff]
        %v523 = vld [vmem:[#allocation5 + $0x210] sm:$0xff]
        %v524 = vld [vmem:[#allocation5 + $0x218] sm:$0xff]
        %v525 = vld [vmem:[#allocation5 + $0x220] sm:$0xff]
        %v526 = vld [vmem:[#allocation5 + $0x228] sm:$0xff]
        %v527 = vld [vmem:[#allocation5 + $0x230] sm:$0xff]
        %v528 = vld [vmem:[#allocation5 + $0x238] sm:$0xff]
        %v529 = vld [vmem:[#allocation5 + $0x240] sm:$0xff]
        %v530 = vld [vmem:[#allocation5 + $0x248] sm:$0xff]
        %v531 = vld [vmem:[#allocation5 + $0x250] sm:$0xff]
        %v532 = vld [vmem:[#allocation5 + $0x258] sm:$0xff]
        %v533 = vld [vmem:[#allocation5 + $0x260] sm:$0xff]
        %v534 = vld [vmem:[#allocation5 + $0x268] sm:$0xff]
        %v535 = vld [vmem:[#allocation5 + $0x270] sm:$0xff]
        %v536 = vld [vmem:[#allocation5 + $0x278] sm:$0xff]
        %v537 = vld [vmem:[#allocation5 + $0x280] sm:$0xff]
        %v538 = vld [vmem:[#allocation5 + $0x288] sm:$0xff]
        %v539 = vld [vmem:[#allocation5 + $0x290] sm:$0xff]
        %v540 = vld [vmem:[#allocation5 + $0x298] sm:$0xff]
        %v541 = vld [vmem:[#allocation5 + $0x2a0] sm:$0xff]
        %v542 = vld [vmem:[#allocation5 + $0x2a8] sm:$0xff]
        %v543 = vld [vmem:[#allocation5 + $0x2b0] sm:$0xff]
        %v544 = vld [vmem:[#allocation5 + $0x2b8] sm:$0xff]
        %v545 = vld [vmem:[#allocation5 + $0x2c0] sm:$0xff]
        %v546 = vld [vmem:[#allocation5 + $0x2c8] sm:$0xff]
        %v547 = vld [vmem:[#allocation5 + $0x2d0] sm:$0xff]
        %v548 = vld [vmem:[#allocation5 + $0x2d8] sm:$0xff]
        %v549 = vld [vmem:[#allocation5 + $0x2e0] sm:$0xff]
        %v550 = vld [vmem:[#allocation5 + $0x2e8] sm:$0xff]
        %v551 = vld [vmem:[#allocation5 + $0x2f0] sm:$0xff]
        %v552 = vld [vmem:[#allocation5 + $0x2f8] sm:$0xff]
        %v553 = vld [vmem:[#allocation5 + $0x300] sm:$0xff]
        %v554 = vld [vmem:[#allocation5 + $0x308] sm:$0xff]
        %v555 = vld [vmem:[#allocation5 + $0x310] sm:$0xff]
        %v556 = vld [vmem:[#allocation5 + $0x318] sm:$0xff]
        %v557 = vld [vmem:[#allocation5 + $0x320] sm:$0xff]
        %v558 = vld [vmem:[#allocation5 + $0x328] sm:$0xff]
        %v559 = vld [vmem:[#allocation5 + $0x330] sm:$0xff]
        %v560 = vld [vmem:[#allocation5 + $0x338] sm:$0xff]
        %v561 = vld [vmem:[#allocation5 + $0x340] sm:$0xff]
        %v562 = vld [vmem:[#allocation5 + $0x348] sm:$0xff]
        %v563 = vld [vmem:[#allocation5 + $0x350] sm:$0xff]
        %v564 = vld [vmem:[#allocation5 + $0x358] sm:$0xff]
        %v565 = vld [vmem:[#allocation5 + $0x360] sm:$0xff]
        %v566 = vld [vmem:[#allocation5 + $0x368] sm:$0xff]
        %v567 = vld [vmem:[#allocation5 + $0x370] sm:$0xff]
        %v568 = vld [vmem:[#allocation5 + $0x378] sm:$0xff]
        %v569 = vld [vmem:[#allocation5 + $0x380] sm:$0xff]
        %v570 = vld [vmem:[#allocation5 + $0x388] sm:$0xff]
        %v571 = vld [vmem:[#allocation5 + $0x390] sm:$0xff]
        %v572 = vld [vmem:[#allocation5 + $0x398] sm:$0xff]
        %v573 = vld [vmem:[#allocation5 + $0x3a0] sm:$0xff]
        %v574 = vld [vmem:[#allocation5 + $0x3a8] sm:$0xff]
        %v575 = vld [vmem:[#allocation5 + $0x3b0] sm:$0xff]
        %v576 = vld [vmem:[#allocation5 + $0x3b8] sm:$0xff]
        %v577 = vld [vmem:[#allocation5 + $0x3c0] sm:$0xff]
        %v578 = vld [vmem:[#allocation5 + $0x3c8] sm:$0xff]
        %v579 = vld [vmem:[#allocation5 + $0x3d0] sm:$0xff]
        %v580 = vld [vmem:[#allocation5 + $0x3d8] sm:$0xff]
        %v581 = vld [vmem:[#allocation5 + $0x3e0] sm:$0xff]
        %v582 = vld [vmem:[#allocation5 + $0x3e8] sm:$0xff]
        %v583 = vld [vmem:[#allocation5 + $0x3f0] sm:$0xff]
        %v584 = vld [vmem:[#allocation5 + $0x3f8] sm:$0xff]
        %v585 = vld [vmem:[%s2] sm:$0xf]
        %v587 = vlaneseq
        %v588 = vshrl.u32 %v587, 7
        %v589 = vsub.s32 0, %v588
        %v590 = vrot.slane %v585, %v589
        %v591 = vlaneseq
        %v592 = vshrl.u32 %v591, 7
        %v593 = vsub.s32 1, %v592
        %v594 = vrot.slane %v585, %v593
        %v595 = vlaneseq
        %v596 = vshrl.u32 %v595, 7
        %v597 = vsub.s32 2, %v596
        %v598 = vrot.slane %v585, %v597
        %v599 = vlaneseq
        %v600 = vshrl.u32 %v599, 7
        %v601 = vsub.s32 3, %v600
        %v602 = vrot.slane %v585, %v601
        %v735 = vunpack.c.l.b16 %v457
        %v736 = vunpack.c.h.b16 %v457
        %v737 = vunpack.c.l.b16 %v458
        %v738 = vunpack.c.h.b16 %v458
        %v739 = vunpack.c.l.b16 %v459
        %v740 = vunpack.c.h.b16 %v459
        %v741 = vunpack.c.l.b16 %v460
        %v742 = vunpack.c.h.b16 %v460
        %v743 = vunpack.c.l.b16 %v461
        %v744 = vunpack.c.h.b16 %v461
        %v745 = vunpack.c.l.b16 %v462
        %v746 = vunpack.c.h.b16 %v462
        %v747 = vunpack.c.l.b16 %v463
        %v748 = vunpack.c.h.b16 %v463
        %v749 = vunpack.c.l.b16 %v464
        %v750 = vunpack.c.h.b16 %v464
        %v751 = vunpack.c.l.b16 %v465
        %v752 = vunpack.c.h.b16 %v465
        %v753 = vunpack.c.l.b16 %v466
        %v754 = vunpack.c.h.b16 %v466
        %v755 = vunpack.c.l.b16 %v467
        %v756 = vunpack.c.h.b16 %v467
        %v757 = vunpack.c.l.b16 %v468
        %v758 = vunpack.c.h.b16 %v468
        %v759 = vunpack.c.l.b16 %v469
        %v760 = vunpack.c.h.b16 %v469
        %v761 = vunpack.c.l.b16 %v470
        %v762 = vunpack.c.h.b16 %v470
        %v763 = vunpack.c.l.b16 %v471
        %v764 = vunpack.c.h.b16 %v471
        %v765 = vunpack.c.l.b16 %v472
        %v766 = vunpack.c.h.b16 %v472
        %v767 = vunpack.c.l.b16 %v473
        %v768 = vunpack.c.h.b16 %v473
        %v769 = vunpack.c.l.b16 %v474
        %v770 = vunpack.c.h.b16 %v474
        %v771 = vunpack.c.l.b16 %v475
        %v772 = vunpack.c.h.b16 %v475
        %v773 = vunpack.c.l.b16 %v476
        %v774 = vunpack.c.h.b16 %v476
        %v775 = vunpack.c.l.b16 %v477
        %v776 = vunpack.c.h.b16 %v477
        %v777 = vunpack.c.l.b16 %v478
        %v778 = vunpack.c.h.b16 %v478
        %v779 = vunpack.c.l.b16 %v479
        %v780 = vunpack.c.h.b16 %v479
        %v781 = vunpack.c.l.b16 %v480
        %v782 = vunpack.c.h.b16 %v480
        %v783 = vunpack.c.l.b16 %v481
        %v784 = vunpack.c.h.b16 %v481
        %v785 = vunpack.c.l.b16 %v482
        %v786 = vunpack.c.h.b16 %v482
        %v787 = vunpack.c.l.b16 %v483
        %v788 = vunpack.c.h.b16 %v483
        %v789 = vunpack.c.l.b16 %v484
        %v790 = vunpack.c.h.b16 %v484
        %v791 = vunpack.c.l.b16 %v485
        %v792 = vunpack.c.h.b16 %v485
        %v793 = vunpack.c.l.b16 %v486
        %v794 = vunpack.c.h.b16 %v486
        %v795 = vunpack.c.l.b16 %v487
        %v796 = vunpack.c.h.b16 %v487
        %v797 = vunpack.c.l.b16 %v488
        %v798 = vunpack.c.h.b16 %v488
        %v799 = vunpack.c.l.b16 %v489
        %v800 = vunpack.c.h.b16 %v489
        %v801 = vunpack.c.l.b16 %v490
        %v802 = vunpack.c.h.b16 %v490
        %v803 = vunpack.c.l.b16 %v491
        %v804 = vunpack.c.h.b16 %v491
        %v805 = vunpack.c.l.b16 %v492
        %v806 = vunpack.c.h.b16 %v492
        %v807 = vunpack.c.l.b16 %v493
        %v808 = vunpack.c.h.b16 %v493
        %v809 = vunpack.c.l.b16 %v494
        %v810 = vunpack.c.h.b16 %v494
        %v811 = vunpack.c.l.b16 %v495
        %v812 = vunpack.c.h.b16 %v495
        %v813 = vunpack.c.l.b16 %v496
        %v814 = vunpack.c.h.b16 %v496
        %v815 = vunpack.c.l.b16 %v497
        %v816 = vunpack.c.h.b16 %v497
        %v817 = vunpack.c.l.b16 %v498
        %v818 = vunpack.c.h.b16 %v498
        %v819 = vunpack.c.l.b16 %v499
        %v820 = vunpack.c.h.b16 %v499
        %v821 = vunpack.c.l.b16 %v500
        %v822 = vunpack.c.h.b16 %v500
        %v823 = vunpack.c.l.b16 %v501
        %v824 = vunpack.c.h.b16 %v501
        %v825 = vunpack.c.l.b16 %v502
        %v826 = vunpack.c.h.b16 %v502
        %v827 = vunpack.c.l.b16 %v503
        %v828 = vunpack.c.h.b16 %v503
        %v829 = vunpack.c.l.b16 %v504
        %v830 = vunpack.c.h.b16 %v504
        %v831 = vunpack.c.l.b16 %v505
        %v832 = vunpack.c.h.b16 %v505
        %v833 = vunpack.c.l.b16 %v506
        %v834 = vunpack.c.h.b16 %v506
        %v835 = vunpack.c.l.b16 %v507
        %v836 = vunpack.c.h.b16 %v507
        %v837 = vunpack.c.l.b16 %v508
        %v838 = vunpack.c.h.b16 %v508
        %v839 = vunpack.c.l.b16 %v509
        %v840 = vunpack.c.h.b16 %v509
        %v841 = vunpack.c.l.b16 %v510
        %v842 = vunpack.c.h.b16 %v510
        %v843 = vunpack.c.l.b16 %v511
        %v844 = vunpack.c.h.b16 %v511
        %v845 = vunpack.c.l.b16 %v512
        %v846 = vunpack.c.h.b16 %v512
        %v847 = vunpack.c.l.b16 %v513
        %v848 = vunpack.c.h.b16 %v513
        %v849 = vunpack.c.l.b16 %v514
        %v850 = vunpack.c.h.b16 %v514
        %v851 = vunpack.c.l.b16 %v515
        %v852 = vunpack.c.h.b16 %v515
        %v853 = vunpack.c.l.b16 %v516
        %v854 = vunpack.c.h.b16 %v516
        %v855 = vunpack.c.l.b16 %v517
        %v856 = vunpack.c.h.b16 %v517
        %v857 = vunpack.c.l.b16 %v518
        %v858 = vunpack.c.h.b16 %v518
        %v859 = vunpack.c.l.b16 %v519
        %v860 = vunpack.c.h.b16 %v519
        %v861 = vunpack.c.l.b16 %v520
        %v862 = vunpack.c.h.b16 %v520
        %v863 = vunpack.c.l.b16 %v521
        %v864 = vunpack.c.h.b16 %v521
        %v865 = vunpack.c.l.b16 %v522
        %v866 = vunpack.c.h.b16 %v522
        %v867 = vunpack.c.l.b16 %v523
        %v868 = vunpack.c.h.b16 %v523
        %v869 = vunpack.c.l.b16 %v524
        %v870 = vunpack.c.h.b16 %v524
        %v871 = vunpack.c.l.b16 %v525
        %v872 = vunpack.c.h.b16 %v525
        %v873 = vunpack.c.l.b16 %v526
        %v874 = vunpack.c.h.b16 %v526
        %v875 = vunpack.c.l.b16 %v527
        %v876 = vunpack.c.h.b16 %v527
        %v877 = vunpack.c.l.b16 %v528
        %v878 = vunpack.c.h.b16 %v528
        %v879 = vunpack.c.l.b16 %v529
        %v880 = vunpack.c.h.b16 %v529
        %v881 = vunpack.c.l.b16 %v530
        %v882 = vunpack.c.h.b16 %v530
        %v883 = vunpack.c.l.b16 %v531
        %v884 = vunpack.c.h.b16 %v531
        %v885 = vunpack.c.l.b16 %v532
        %v886 = vunpack.c.h.b16 %v532
        %v887 = vunpack.c.l.b16 %v533
        %v888 = vunpack.c.h.b16 %v533
        %v889 = vunpack.c.l.b16 %v534
        %v890 = vunpack.c.h.b16 %v534
        %v891 = vunpack.c.l.b16 %v535
        %v892 = vunpack.c.h.b16 %v535
        %v893 = vunpack.c.l.b16 %v536
        %v894 = vunpack.c.h.b16 %v536
        %v895 = vunpack.c.l.b16 %v537
        %v896 = vunpack.c.h.b16 %v537
        %v897 = vunpack.c.l.b16 %v538
        %v898 = vunpack.c.h.b16 %v538
        %v899 = vunpack.c.l.b16 %v539
        %v900 = vunpack.c.h.b16 %v539
        %v901 = vunpack.c.l.b16 %v540
        %v902 = vunpack.c.h.b16 %v540
        %v903 = vunpack.c.l.b16 %v541
        %v904 = vunpack.c.h.b16 %v541
        %v905 = vunpack.c.l.b16 %v542
        %v906 = vunpack.c.h.b16 %v542
        %v907 = vunpack.c.l.b16 %v543
        %v908 = vunpack.c.h.b16 %v543
        %v909 = vunpack.c.l.b16 %v544
        %v910 = vunpack.c.h.b16 %v544
        %v911 = vunpack.c.l.b16 %v545
        %v912 = vunpack.c.h.b16 %v545
        %v913 = vunpack.c.l.b16 %v546
        %v914 = vunpack.c.h.b16 %v546
        %v915 = vunpack.c.l.b16 %v547
        %v916 = vunpack.c.h.b16 %v547
        %v917 = vunpack.c.l.b16 %v548
        %v918 = vunpack.c.h.b16 %v548
        %v919 = vunpack.c.l.b16 %v549
        %v920 = vunpack.c.h.b16 %v549
        %v921 = vunpack.c.l.b16 %v550
        %v922 = vunpack.c.h.b16 %v550
        %v923 = vunpack.c.l.b16 %v551
        %v924 = vunpack.c.h.b16 %v551
        %v925 = vunpack.c.l.b16 %v552
        %v926 = vunpack.c.h.b16 %v552
        %v927 = vunpack.c.l.b16 %v553
        %v928 = vunpack.c.h.b16 %v553
        %v929 = vunpack.c.l.b16 %v554
        %v930 = vunpack.c.h.b16 %v554
        %v931 = vunpack.c.l.b16 %v555
        %v932 = vunpack.c.h.b16 %v555
        %v933 = vunpack.c.l.b16 %v556
        %v934 = vunpack.c.h.b16 %v556
        %v935 = vunpack.c.l.b16 %v557
        %v936 = vunpack.c.h.b16 %v557
        %v937 = vunpack.c.l.b16 %v558
        %v938 = vunpack.c.h.b16 %v558
        %v939 = vunpack.c.l.b16 %v559
        %v940 = vunpack.c.h.b16 %v559
        %v941 = vunpack.c.l.b16 %v560
        %v942 = vunpack.c.h.b16 %v560
        %v943 = vunpack.c.l.b16 %v561
        %v944 = vunpack.c.h.b16 %v561
        %v945 = vunpack.c.l.b16 %v562
        %v946 = vunpack.c.h.b16 %v562
        %v947 = vunpack.c.l.b16 %v563
        %v948 = vunpack.c.h.b16 %v563
        %v949 = vunpack.c.l.b16 %v564
        %v950 = vunpack.c.h.b16 %v564
        %v951 = vunpack.c.l.b16 %v565
        %v952 = vunpack.c.h.b16 %v565
        %v953 = vunpack.c.l.b16 %v566
        %v954 = vunpack.c.h.b16 %v566
        %v955 = vunpack.c.l.b16 %v567
        %v956 = vunpack.c.h.b16 %v567
        %v957 = vunpack.c.l.b16 %v568
        %v958 = vunpack.c.h.b16 %v568
        %v959 = vunpack.c.l.b16 %v569
        %v960 = vunpack.c.h.b16 %v569
        %v961 = vunpack.c.l.b16 %v570
        %v962 = vunpack.c.h.b16 %v570
        %v963 = vunpack.c.l.b16 %v571
        %v964 = vunpack.c.h.b16 %v571
        %v965 = vunpack.c.l.b16 %v572
        %v966 = vunpack.c.h.b16 %v572
        %v967 = vunpack.c.l.b16 %v573
        %v968 = vunpack.c.h.b16 %v573
        %v969 = vunpack.c.l.b16 %v574
        %v970 = vunpack.c.h.b16 %v574
        %v971 = vunpack.c.l.b16 %v575
        %v972 = vunpack.c.h.b16 %v575
        %v973 = vunpack.c.l.b16 %v576
        %v974 = vunpack.c.h.b16 %v576
        %v975 = vunpack.c.l.b16 %v577
        %v976 = vunpack.c.h.b16 %v577
        %v977 = vunpack.c.l.b16 %v578
        %v978 = vunpack.c.h.b16 %v578
        %v979 = vunpack.c.l.b16 %v579
        %v980 = vunpack.c.h.b16 %v579
        %v981 = vunpack.c.l.b16 %v580
        %v982 = vunpack.c.h.b16 %v580
        %v983 = vunpack.c.l.b16 %v581
        %v984 = vunpack.c.h.b16 %v581
        %v985 = vunpack.c.l.b16 %v582
        %v986 = vunpack.c.h.b16 %v582
        %v987 = vunpack.c.l.b16 %v583
        %v988 = vunpack.c.h.b16 %v583
        %v989 = vunpack.c.l.b16 %v584
        %v990 = vunpack.c.h.b16 %v584
        %v991 = vpack.c.b16 %v739, %v735
        %v992 = vpack.c.b16 %v740, %v736
        %v993 = vpack.c.b16 %v741, %v737
        %v994 = vpack.c.b16 %v742, %v738
        %v995 = vpack.c.b16 %v747, %v743
        %v996 = vpack.c.b16 %v748, %v744
        %v997 = vpack.c.b16 %v749, %v745
        %v998 = vpack.c.b16 %v750, %v746
        %v999 = vpack.c.b16 %v755, %v751
        %v1000 = vpack.c.b16 %v756, %v752
        %v1001 = vpack.c.b16 %v757, %v753
        %v1002 = vpack.c.b16 %v758, %v754
        %v1003 = vpack.c.b16 %v763, %v759
        %v1004 = vpack.c.b16 %v764, %v760
        %v1005 = vpack.c.b16 %v765, %v761
        %v1006 = vpack.c.b16 %v766, %v762
        %v1007 = vpack.c.b16 %v771, %v767
        %v1008 = vpack.c.b16 %v772, %v768
        %v1009 = vpack.c.b16 %v773, %v769
        %v1010 = vpack.c.b16 %v774, %v770
        %v1011 = vpack.c.b16 %v779, %v775
        %v1012 = vpack.c.b16 %v780, %v776
        %v1013 = vpack.c.b16 %v781, %v777
        %v1014 = vpack.c.b16 %v782, %v778
        %v1015 = vpack.c.b16 %v787, %v783
        %v1016 = vpack.c.b16 %v788, %v784
        %v1017 = vpack.c.b16 %v789, %v785
        %v1018 = vpack.c.b16 %v790, %v786
        %v1019 = vpack.c.b16 %v795, %v791
        %v1020 = vpack.c.b16 %v796, %v792
        %v1021 = vpack.c.b16 %v797, %v793
        %v1022 = vpack.c.b16 %v798, %v794
        %v1023 = vpack.c.b16 %v803, %v799
        %v1024 = vpack.c.b16 %v804, %v800
        %v1025 = vpack.c.b16 %v805, %v801
        %v1026 = vpack.c.b16 %v806, %v802
        %v1027 = vpack.c.b16 %v811, %v807
        %v1028 = vpack.c.b16 %v812, %v808
        %v1029 = vpack.c.b16 %v813, %v809
        %v1030 = vpack.c.b16 %v814, %v810
        %v1031 = vpack.c.b16 %v819, %v815
        %v1032 = vpack.c.b16 %v820, %v816
        %v1033 = vpack.c.b16 %v821, %v817
        %v1034 = vpack.c.b16 %v822, %v818
        %v1035 = vpack.c.b16 %v827, %v823
        %v1036 = vpack.c.b16 %v828, %v824
        %v1037 = vpack.c.b16 %v829, %v825
        %v1038 = vpack.c.b16 %v830, %v826
        %v1039 = vpack.c.b16 %v835, %v831
        %v1040 = vpack.c.b16 %v836, %v832
        %v1041 = vpack.c.b16 %v837, %v833
        %v1042 = vpack.c.b16 %v838, %v834
        %v1043 = vpack.c.b16 %v843, %v839
        %v1044 = vpack.c.b16 %v844, %v840
        %v1045 = vpack.c.b16 %v845, %v841
        %v1046 = vpack.c.b16 %v846, %v842
        %v1047 = vpack.c.b16 %v851, %v847
        %v1048 = vpack.c.b16 %v852, %v848
        %v1049 = vpack.c.b16 %v853, %v849
        %v1050 = vpack.c.b16 %v854, %v850
        %v1051 = vpack.c.b16 %v859, %v855
        %v1052 = vpack.c.b16 %v860, %v856
        %v1053 = vpack.c.b16 %v861, %v857
        %v1054 = vpack.c.b16 %v862, %v858
        %v1055 = vpack.c.b16 %v867, %v863
        %v1056 = vpack.c.b16 %v868, %v864
        %v1057 = vpack.c.b16 %v869, %v865
        %v1058 = vpack.c.b16 %v870, %v866
        %v1059 = vpack.c.b16 %v875, %v871
        %v1060 = vpack.c.b16 %v876, %v872
        %v1061 = vpack.c.b16 %v877, %v873
        %v1062 = vpack.c.b16 %v878, %v874
        %v1063 = vpack.c.b16 %v883, %v879
        %v1064 = vpack.c.b16 %v884, %v880
        %v1065 = vpack.c.b16 %v885, %v881
        %v1066 = vpack.c.b16 %v886, %v882
        %v1067 = vpack.c.b16 %v891, %v887
        %v1068 = vpack.c.b16 %v892, %v888
        %v1069 = vpack.c.b16 %v893, %v889
        %v1070 = vpack.c.b16 %v894, %v890
        %v1071 = vpack.c.b16 %v899, %v895
        %v1072 = vpack.c.b16 %v900, %v896
        %v1073 = vpack.c.b16 %v901, %v897
        %v1074 = vpack.c.b16 %v902, %v898
        %v1075 = vpack.c.b16 %v907, %v903
        %v1076 = vpack.c.b16 %v908, %v904
        %v1077 = vpack.c.b16 %v909, %v905
        %v1078 = vpack.c.b16 %v910, %v906
        %v1079 = vpack.c.b16 %v915, %v911
        %v1080 = vpack.c.b16 %v916, %v912
        %v1081 = vpack.c.b16 %v917, %v913
        %v1082 = vpack.c.b16 %v918, %v914
        %v1083 = vpack.c.b16 %v923, %v919
        %v1084 = vpack.c.b16 %v924, %v920
        %v1085 = vpack.c.b16 %v925, %v921
        %v1086 = vpack.c.b16 %v926, %v922
        %v1087 = vpack.c.b16 %v931, %v927
        %v1088 = vpack.c.b16 %v932, %v928
        %v1089 = vpack.c.b16 %v933, %v929
        %v1090 = vpack.c.b16 %v934, %v930
        %v1091 = vpack.c.b16 %v939, %v935
        %v1092 = vpack.c.b16 %v940, %v936
        %v1093 = vpack.c.b16 %v941, %v937
        %v1094 = vpack.c.b16 %v942, %v938
        %v1095 = vpack.c.b16 %v947, %v943
        %v1096 = vpack.c.b16 %v948, %v944
        %v1097 = vpack.c.b16 %v949, %v945
        %v1098 = vpack.c.b16 %v950, %v946
        %v1099 = vpack.c.b16 %v955, %v951
        %v1100 = vpack.c.b16 %v956, %v952
        %v1101 = vpack.c.b16 %v957, %v953
        %v1102 = vpack.c.b16 %v958, %v954
        %v1103 = vpack.c.b16 %v963, %v959
        %v1104 = vpack.c.b16 %v964, %v960
        %v1105 = vpack.c.b16 %v965, %v961
        %v1106 = vpack.c.b16 %v966, %v962
        %v1107 = vpack.c.b16 %v971, %v967
        %v1108 = vpack.c.b16 %v972, %v968
        %v1109 = vpack.c.b16 %v973, %v969
        %v1110 = vpack.c.b16 %v974, %v970
        %v1111 = vpack.c.b16 %v979, %v975
        %v1112 = vpack.c.b16 %v980, %v976
        %v1113 = vpack.c.b16 %v981, %v977
        %v1114 = vpack.c.b16 %v982, %v978
        %v1115 = vpack.c.b16 %v987, %v983
        %v1116 = vpack.c.b16 %v988, %v984
        %v1117 = vpack.c.b16 %v989, %v985
        %v1118 = vpack.c.b16 %v990, %v986
        %1247 = vmatprep.subr.bf16.mxu0 %v992
        %1248 = vmatpush1.bf16.msra.mxu0 %v991
        %1249 = vmatprep.subr.bf16.mxu0 %v996
        %1250 = vmatpush1.bf16.msra.mxu0 %v995
        %1251 = vmatprep.subr.bf16.mxu0 %v1000
        %1252 = vmatpush1.bf16.msra.mxu0 %v999
        %1253 = vmatprep.subr.bf16.mxu0 %v1004
        %1254 = vmatpush1.bf16.msra.mxu0 %v1003
        %1255 = vmatprep.subr.bf16.mxu0 %v1008
        %1256 = vmatpush1.bf16.msra.mxu0 %v1007
        %1257 = vmatprep.subr.bf16.mxu0 %v1012
        %1258 = vmatpush1.bf16.msra.mxu0 %v1011
        %1259 = vmatprep.subr.bf16.mxu0 %v1016
        %1260 = vmatpush1.bf16.msra.mxu0 %v1015
        %1261 = vmatprep.subr.bf16.mxu0 %v1020
        %1262 = vmatpush1.bf16.msra.mxu0 %v1019
        %1263 = vmatprep.subr.bf16.mxu0 %v1024
        %1264 = vmatpush1.bf16.msra.mxu0 %v1023
        %1265 = vmatprep.subr.bf16.mxu0 %v1028
        %1266 = vmatpush1.bf16.msra.mxu0 %v1027
        %1267 = vmatprep.subr.bf16.mxu0 %v1032
        %1268 = vmatpush1.bf16.msra.mxu0 %v1031
        %1269 = vmatprep.subr.bf16.mxu0 %v1036
        %1270 = vmatpush1.bf16.msra.mxu0 %v1035
        %1271 = vmatprep.subr.bf16.mxu0 %v1040
        %1272 = vmatpush1.bf16.msra.mxu0 %v1039
        %1273 = vmatprep.subr.bf16.mxu0 %v1044
        %1274 = vmatpush1.bf16.msra.mxu0 %v1043
        %1275 = vmatprep.subr.bf16.mxu0 %v1048
        %1276 = vmatpush1.bf16.msra.mxu0 %v1047
        %1277 = vmatprep.subr.bf16.mxu0 %v1052
        %1278 = vmatpush1.bf16.msra.mxu0 %v1051
        %1279 = vmatprep.mubr.bf16.mxu0 %v426
        %1280 = vmatmul.mubr.bf16.gmra.mrb[0].mxu0 %v425
        %v1281 = vpop.f32.mrb[0].mxu0
        %v1282 = vadd.f32 %v590, %v1281
        %v1283 = vpop.f32.mrb[0].mxu0
        %v1284 = vadd.f32 %v594, %v1283
        %v1285 = vpop.f32.mrb[0].mxu0
        %v1286 = vadd.f32 %v590, %v1285
        %v1287 = vpop.f32.mrb[0].mxu0
        %v1288 = vadd.f32 %v594, %v1287
        %1289 = vmatprep.mubr.bf16.mxu0 %v430
        %1290 = vmatmul.mubr.bf16.gmra.mrb[0].mxu0 %v429
        %v1291 = vpop.f32.mrb[0].mxu0
        %v1292 = vadd.f32 %v590, %v1291
        %v1293 = vpop.f32.mrb[0].mxu0
        %v1294 = vadd.f32 %v594, %v1293
        %v1295 = vpop.f32.mrb[0].mxu0
        %v1296 = vadd.f32 %v590, %v1295
        %v1297 = vpop.f32.mrb[0].mxu0
        %v1298 = vadd.f32 %v594, %v1297
        %1299 = vmatprep.mubr.bf16.mxu0 %v434
        %1300 = vmatmul.mubr.bf16.gmra.mrb[0].mxu0 %v433
        %v1301 = vpop.f32.mrb[0].mxu0
        %v1302 = vadd.f32 %v590, %v1301
        %v1303 = vpop.f32.mrb[0].mxu0
        %v1304 = vadd.f32 %v594, %v1303
        %v1305 = vpop.f32.mrb[0].mxu0
        %v1306 = vadd.f32 %v590, %v1305
        %v1307 = vpop.f32.mrb[0].mxu0
        %v1308 = vadd.f32 %v594, %v1307
        %1309 = vmatprep.mubr.bf16.mxu0 %v438
        %1310 = vmatmul.mubr.bf16.gmra.mrb[0].mxu0 %v437
        %v1311 = vpop.f32.mrb[0].mxu0
        %v1312 = vadd.f32 %v590, %v1311
        %v1313 = vpop.f32.mrb[0].mxu0
        %v1314 = vadd.f32 %v594, %v1313
        %v1315 = vpop.f32.mrb[0].mxu0
        %v1316 = vadd.f32 %v590, %v1315
        %v1317 = vpop.f32.mrb[0].mxu0
        %v1318 = vadd.f32 %v594, %v1317
        %1319 = vmatprep.mubr.bf16.mxu0 %v442
        %1320 = vmatmul.mubr.bf16.gmra.mrb[0].mxu0 %v441
        %v1321 = vpop.f32.mrb[0].mxu0
        %v1322 = vadd.f32 %v590, %v1321
        %v1323 = vpop.f32.mrb[0].mxu0
        %v1324 = vadd.f32 %v594, %v1323
        %v1325 = vpop.f32.mrb[0].mxu0
        %v1326 = vadd.f32 %v590, %v1325
        %v1327 = vpop.f32.mrb[0].mxu0
        %v1328 = vadd.f32 %v594, %v1327
        %1329 = vmatprep.mubr.bf16.mxu0 %v446
        %1330 = vmatmul.mubr.bf16.gmra.mrb[0].mxu0 %v445
        %v1331 = vpop.f32.mrb[0].mxu0
        %v1332 = vadd.f32 %v590, %v1331
        %v1333 = vpop.f32.mrb[0].mxu0
        %v1334 = vadd.f32 %v594, %v1333
        %v1335 = vpop.f32.mrb[0].mxu0
        %v1336 = vadd.f32 %v590, %v1335
        %v1337 = vpop.f32.mrb[0].mxu0
        %v1338 = vadd.f32 %v594, %v1337
        %1339 = vmatprep.mubr.bf16.mxu0 %v450
        %1340 = vmatmul.mubr.bf16.gmra.mrb[0].mxu0 %v449
        %v1341 = vpop.f32.mrb[0].mxu0
        %v1342 = vadd.f32 %v590, %v1341
        %v1343 = vpop.f32.mrb[0].mxu0
        %v1344 = vadd.f32 %v594, %v1343
        %v1345 = vpop.f32.mrb[0].mxu0
        %v1346 = vadd.f32 %v590, %v1345
        %v1347 = vpop.f32.mrb[0].mxu0
        %v1348 = vadd.f32 %v594, %v1347
        %1349 = vmatprep.mubr.bf16.mxu0 %v454
        %1350 = vmatmul.mubr.bf16.gmra.mrb[0].mxu0 %v453
        %v1351 = vpop.f32.mrb[0].mxu0
        %v1352 = vadd.f32 %v590, %v1351
        %v1353 = vpop.f32.mrb[0].mxu0
        %v1354 = vadd.f32 %v594, %v1353
        %v1355 = vpop.f32.mrb[0].mxu0
        %v1356 = vadd.f32 %v590, %v1355
        %v1357 = vpop.f32.mrb[0].mxu0
        %v1358 = vadd.f32 %v594, %v1357
        %1359 = vdwg.mxu0
        %1360 = vmatprep.subr.bf16.mxu0 %v1056
        %1361 = vmatpush1.bf16.msra.mxu0 %v1055
        %1362 = vmatprep.subr.bf16.mxu0 %v1060
        %1363 = vmatpush1.bf16.msra.mxu0 %v1059
        %1364 = vmatprep.subr.bf16.mxu0 %v1064
        %1365 = vmatpush1.bf16.msra.mxu0 %v1063
        %1366 = vmatprep.subr.bf16.mxu0 %v1068
        %1367 = vmatpush1.bf16.msra.mxu0 %v1067
        %1368 = vmatprep.subr.bf16.mxu0 %v1072
        %1369 = vmatpush1.bf16.msra.mxu0 %v1071
        %1370 = vmatprep.subr.bf16.mxu0 %v1076
        %1371 = vmatpush1.bf16.msra.mxu0 %v1075
        %1372 = vmatprep.subr.bf16.mxu0 %v1080
        %1373 = vmatpush1.bf16.msra.mxu0 %v1079
        %1374 = vmatprep.subr.bf16.mxu0 %v1084
        %1375 = vmatpush1.bf16.msra.mxu0 %v1083
        %1376 = vmatprep.subr.bf16.mxu0 %v1088
        %1377 = vmatpush1.bf16.msra.mxu0 %v1087
        %1378 = vmatprep.subr.bf16.mxu0 %v1092
        %1379 = vmatpush1.bf16.msra.mxu0 %v1091
        %1380 = vmatprep.subr.bf16.mxu0 %v1096
        %1381 = vmatpush1.bf16.msra.mxu0 %v1095
        %1382 = vmatprep.subr.bf16.mxu0 %v1100
        %1383 = vmatpush1.bf16.msra.mxu0 %v1099
        %1384 = vmatprep.subr.bf16.mxu0 %v1104
        %1385 = vmatpush1.bf16.msra.mxu0 %v1103
        %1386 = vmatprep.subr.bf16.mxu0 %v1108
        %1387 = vmatpush1.bf16.msra.mxu0 %v1107
        %1388 = vmatprep.subr.bf16.mxu0 %v1112
        %1389 = vmatpush1.bf16.msra.mxu0 %v1111
        %1390 = vmatprep.subr.bf16.mxu0 %v1116
        %1391 = vmatpush1.bf16.msra.mxu0 %v1115
        %1392 = vmatprep.mubr.bf16.mxu0 %v428
        %1393 = vmatmul.mubr.bf16.gmra.mrb[0].mxu0 %v427
        %v1394 = vpop.f32.mrb[0].mxu0
        %v1395 = vadd.f32 %v1282, %v1394
        %v1396 = vpop.f32.mrb[0].mxu0
        %v1397 = vadd.f32 %v1284, %v1396
        %v1398 = vpop.f32.mrb[0].mxu0
        %v1399 = vadd.f32 %v1286, %v1398
        %v1400 = vpop.f32.mrb[0].mxu0
        %v1401 = vadd.f32 %v1288, %v1400
        %1402 = vmatprep.mubr.bf16.mxu0 %v432
        %1403 = vmatmul.mubr.bf16.gmra.mrb[0].mxu0 %v431
        %v1404 = vpop.f32.mrb[0].mxu0
        %v1405 = vadd.f32 %v1292, %v1404
        %v1406 = vpop.f32.mrb[0].mxu0
        %v1407 = vadd.f32 %v1294, %v1406
        %v1408 = vpop.f32.mrb[0].mxu0
        %v1409 = vadd.f32 %v1296, %v1408
        %v1410 = vpop.f32.mrb[0].mxu0
        %v1411 = vadd.f32 %v1298, %v1410
        %1412 = vmatprep.mubr.bf16.mxu0 %v436
        %1413 = vmatmul.mubr.bf16.gmra.mrb[0].mxu0 %v435
        %v1414 = vpop.f32.mrb[0].mxu0
        %v1415 = vadd.f32 %v1302, %v1414
        %v1416 = vpop.f32.mrb[0].mxu0
        %v1417 = vadd.f32 %v1304, %v1416
        %v1418 = vpop.f32.mrb[0].mxu0
        %v1419 = vadd.f32 %v1306, %v1418
        %v1420 = vpop.f32.mrb[0].mxu0
        %v1421 = vadd.f32 %v1308, %v1420
        %1422 = vmatprep.mubr.bf16.mxu0 %v440
        %1423 = vmatmul.mubr.bf16.gmra.mrb[0].mxu0 %v439
        %v1424 = vpop.f32.mrb[0].mxu0
        %v1425 = vadd.f32 %v1312, %v1424
        %v1426 = vpop.f32.mrb[0].mxu0
        %v1427 = vadd.f32 %v1314, %v1426
        %v1428 = vpop.f32.mrb[0].mxu0
        %v1429 = vadd.f32 %v1316, %v1428
        %v1430 = vpop.f32.mrb[0].mxu0
        %v1431 = vadd.f32 %v1318, %v1430
        %1432 = vmatprep.mubr.bf16.mxu0 %v444
        %1433 = vmatmul.mubr.bf16.gmra.mrb[0].mxu0 %v443
        %v1434 = vpop.f32.mrb[0].mxu0
        %v1435 = vadd.f32 %v1322, %v1434
        %v1436 = vpop.f32.mrb[0].mxu0
        %v1437 = vadd.f32 %v1324, %v1436
        %v1438 = vpop.f32.mrb[0].mxu0
        %v1439 = vadd.f32 %v1326, %v1438
        %v1440 = vpop.f32.mrb[0].mxu0
        %v1441 = vadd.f32 %v1328, %v1440
        %1442 = vmatprep.mubr.bf16.mxu0 %v448
        %1443 = vmatmul.mubr.bf16.gmra.mrb[0].mxu0 %v447
        %v1444 = vpop.f32.mrb[0].mxu0
        %v1445 = vadd.f32 %v1332, %v1444
        %v1446 = vpop.f32.mrb[0].mxu0
        %v1447 = vadd.f32 %v1334, %v1446
        %v1448 = vpop.f32.mrb[0].mxu0
        %v1449 = vadd.f32 %v1336, %v1448
        %v1450 = vpop.f32.mrb[0].mxu0
        %v1451 = vadd.f32 %v1338, %v1450
        %1452 = vmatprep.mubr.bf16.mxu0 %v452
        %1453 = vmatmul.mubr.bf16.gmra.mrb[0].mxu0 %v451
        %v1454 = vpop.f32.mrb[0].mxu0
        %v1455 = vadd.f32 %v1342, %v1454
        %v1456 = vpop.f32.mrb[0].mxu0
        %v1457 = vadd.f32 %v1344, %v1456
        %v1458 = vpop.f32.mrb[0].mxu0
        %v1459 = vadd.f32 %v1346, %v1458
        %v1460 = vpop.f32.mrb[0].mxu0
        %v1461 = vadd.f32 %v1348, %v1460
        %1462 = vmatprep.mubr.bf16.mxu0 %v456
        %1463 = vmatmul.mubr.bf16.gmra.mrb[0].mxu0 %v455
        %v1464 = vpop.f32.mrb[0].mxu0
        %v1465 = vadd.f32 %v1352, %v1464
        %v1466 = vpop.f32.mrb[0].mxu0
        %v1467 = vadd.f32 %v1354, %v1466
        %v1468 = vpop.f32.mrb[0].mxu0
        %v1469 = vadd.f32 %v1356, %v1468
        %v1470 = vpop.f32.mrb[0].mxu0
        %v1471 = vadd.f32 %v1358, %v1470
        %1472 = vdwg.mxu0
        %1473 = vmatprep.subr.bf16.mxu0 %v994
        %1474 = vmatpush1.bf16.msra.mxu0 %v993
        %1475 = vmatprep.subr.bf16.mxu0 %v998
        %1476 = vmatpush1.bf16.msra.mxu0 %v997
        %1477 = vmatprep.subr.bf16.mxu0 %v1002
        %1478 = vmatpush1.bf16.msra.mxu0 %v1001
        %1479 = vmatprep.subr.bf16.mxu0 %v1006
        %1480 = vmatpush1.bf16.msra.mxu0 %v1005
        %1481 = vmatprep.subr.bf16.mxu0 %v1010
        %1482 = vmatpush1.bf16.msra.mxu0 %v1009
        %1483 = vmatprep.subr.bf16.mxu0 %v1014
        %1484 = vmatpush1.bf16.msra.mxu0 %v1013
        %1485 = vmatprep.subr.bf16.mxu0 %v1018
        %1486 = vmatpush1.bf16.msra.mxu0 %v1017
        %1487 = vmatprep.subr.bf16.mxu0 %v1022
        %1488 = vmatpush1.bf16.msra.mxu0 %v1021
        %1489 = vmatprep.subr.bf16.mxu0 %v1026
        %1490 = vmatpush1.bf16.msra.mxu0 %v1025
        %1491 = vmatprep.subr.bf16.mxu0 %v1030
        %1492 = vmatpush1.bf16.msra.mxu0 %v1029
        %1493 = vmatprep.subr.bf16.mxu0 %v1034
        %1494 = vmatpush1.bf16.msra.mxu0 %v1033
        %1495 = vmatprep.subr.bf16.mxu0 %v1038
        %1496 = vmatpush1.bf16.msra.mxu0 %v1037
        %1497 = vmatprep.subr.bf16.mxu0 %v1042
        %1498 = vmatpush1.bf16.msra.mxu0 %v1041
        %1499 = vmatprep.subr.bf16.mxu0 %v1046
        %1500 = vmatpush1.bf16.msra.mxu0 %v1045
        %1501 = vmatprep.subr.bf16.mxu0 %v1050
        %1502 = vmatpush1.bf16.msra.mxu0 %v1049
        %1503 = vmatprep.subr.bf16.mxu0 %v1054
        %1504 = vmatpush1.bf16.msra.mxu0 %v1053
        %1505 = vmatprep.mubr.bf16.mxu0 %v426
        %1506 = vmatmul.mubr.bf16.gmra.mrb[0].mxu0 %v425
        %v1507 = vpop.f32.mrb[0].mxu0
        %v1508 = vadd.f32 %v598, %v1507
        %v1509 = vpop.f32.mrb[0].mxu0
        %v1510 = vadd.f32 %v602, %v1509
        %v1511 = vpop.f32.mrb[0].mxu0
        %v1512 = vadd.f32 %v598, %v1511
        %v1513 = vpop.f32.mrb[0].mxu0
        %v1514 = vadd.f32 %v602, %v1513
        %1515 = vmatprep.mubr.bf16.mxu0 %v430
        %1516 = vmatmul.mubr.bf16.gmra.mrb[0].mxu0 %v429
        %v1517 = vpop.f32.mrb[0].mxu0
        %v1518 = vadd.f32 %v598, %v1517
        %v1519 = vpop.f32.mrb[0].mxu0
        %v1520 = vadd.f32 %v602, %v1519
        %v1521 = vpop.f32.mrb[0].mxu0
        %v1522 = vadd.f32 %v598, %v1521
        %v1523 = vpop.f32.mrb[0].mxu0
        %v1524 = vadd.f32 %v602, %v1523
        %1525 = vmatprep.mubr.bf16.mxu0 %v434
        %1526 = vmatmul.mubr.bf16.gmra.mrb[0].mxu0 %v433
        %v1527 = vpop.f32.mrb[0].mxu0
        %v1528 = vadd.f32 %v598, %v1527
        %v1529 = vpop.f32.mrb[0].mxu0
        %v1530 = vadd.f32 %v602, %v1529
        %v1531 = vpop.f32.mrb[0].mxu0
        %v1532 = vadd.f32 %v598, %v1531
        %v1533 = vpop.f32.mrb[0].mxu0
        %v1534 = vadd.f32 %v602, %v1533
        %1535 = vmatprep.mubr.bf16.mxu0 %v438
        %1536 = vmatmul.mubr.bf16.gmra.mrb[0].mxu0 %v437
        %v1537 = vpop.f32.mrb[0].mxu0
        %v1538 = vadd.f32 %v598, %v1537
        %v1539 = vpop.f32.mrb[0].mxu0
        %v1540 = vadd.f32 %v602, %v1539
        %v1541 = vpop.f32.mrb[0].mxu0
        %v1542 = vadd.f32 %v598, %v1541
        %v1543 = vpop.f32.mrb[0].mxu0
        %v1544 = vadd.f32 %v602, %v1543
        %1545 = vmatprep.mubr.bf16.mxu0 %v442
        %1546 = vmatmul.mubr.bf16.gmra.mrb[0].mxu0 %v441
        %v1547 = vpop.f32.mrb[0].mxu0
        %v1548 = vadd.f32 %v598, %v1547
        %v1549 = vpop.f32.mrb[0].mxu0
        %v1550 = vadd.f32 %v602, %v1549
        %v1551 = vpop.f32.mrb[0].mxu0
        %v1552 = vadd.f32 %v598, %v1551
        %v1553 = vpop.f32.mrb[0].mxu0
        %v1554 = vadd.f32 %v602, %v1553
        %1555 = vmatprep.mubr.bf16.mxu0 %v446
        %1556 = vmatmul.mubr.bf16.gmra.mrb[0].mxu0 %v445
        %v1557 = vpop.f32.mrb[0].mxu0
        %v1558 = vadd.f32 %v598, %v1557
        %v1559 = vpop.f32.mrb[0].mxu0
        %v1560 = vadd.f32 %v602, %v1559
        %v1561 = vpop.f32.mrb[0].mxu0
        %v1562 = vadd.f32 %v598, %v1561
        %v1563 = vpop.f32.mrb[0].mxu0
        %v1564 = vadd.f32 %v602, %v1563
        %1565 = vmatprep.mubr.bf16.mxu0 %v450
        %1566 = vmatmul.mubr.bf16.gmra.mrb[0].mxu0 %v449
        %v1567 = vpop.f32.mrb[0].mxu0
        %v1568 = vadd.f32 %v598, %v1567
        %v1569 = vpop.f32.mrb[0].mxu0
        %v1570 = vadd.f32 %v602, %v1569
        %v1571 = vpop.f32.mrb[0].mxu0
        %v1572 = vadd.f32 %v598, %v1571
        %v1573 = vpop.f32.mrb[0].mxu0
        %v1574 = vadd.f32 %v602, %v1573
        %1575 = vmatprep.mubr.bf16.mxu0 %v454
        %1576 = vmatmul.mubr.bf16.gmra.mrb[0].mxu0 %v453
        %v1577 = vpop.f32.mrb[0].mxu0
        %v1578 = vadd.f32 %v598, %v1577
        %v1579 = vpop.f32.mrb[0].mxu0
        %v1580 = vadd.f32 %v602, %v1579
        %v1581 = vpop.f32.mrb[0].mxu0
        %v1582 = vadd.f32 %v598, %v1581
        %v1583 = vpop.f32.mrb[0].mxu0
        %v1584 = vadd.f32 %v602, %v1583
        %1585 = vdwg.mxu0
        %1586 = vmatprep.subr.bf16.mxu0 %v1058
        %1587 = vmatpush1.bf16.msra.mxu0 %v1057
        %1588 = vmatprep.subr.bf16.mxu0 %v1062
        %1589 = vmatpush1.bf16.msra.mxu0 %v1061
        %1590 = vmatprep.subr.bf16.mxu0 %v1066
        %1591 = vmatpush1.bf16.msra.mxu0 %v1065
        %1592 = vmatprep.subr.bf16.mxu0 %v1070
        %1593 = vmatpush1.bf16.msra.mxu0 %v1069
        %1594 = vmatprep.subr.bf16.mxu0 %v1074
        %1595 = vmatpush1.bf16.msra.mxu0 %v1073
        %1596 = vmatprep.subr.bf16.mxu0 %v1078
        %1597 = vmatpush1.bf16.msra.mxu0 %v1077
        %1598 = vmatprep.subr.bf16.mxu0 %v1082
        %1599 = vmatpush1.bf16.msra.mxu0 %v1081
        %1600 = vmatprep.subr.bf16.mxu0 %v1086
        %1601 = vmatpush1.bf16.msra.mxu0 %v1085
        %1602 = vmatprep.subr.bf16.mxu0 %v1090
        %1603 = vmatpush1.bf16.msra.mxu0 %v1089
        %1604 = vmatprep.subr.bf16.mxu0 %v1094
        %1605 = vmatpush1.bf16.msra.mxu0 %v1093
        %1606 = vmatprep.subr.bf16.mxu0 %v1098
        %1607 = vmatpush1.bf16.msra.mxu0 %v1097
        %1608 = vmatprep.subr.bf16.mxu0 %v1102
        %1609 = vmatpush1.bf16.msra.mxu0 %v1101
        %1610 = vmatprep.subr.bf16.mxu0 %v1106
        %1611 = vmatpush1.bf16.msra.mxu0 %v1105
        %1612 = vmatprep.subr.bf16.mxu0 %v1110
        %1613 = vmatpush1.bf16.msra.mxu0 %v1109
        %1614 = vmatprep.subr.bf16.mxu0 %v1114
        %1615 = vmatpush1.bf16.msra.mxu0 %v1113
        %1616 = vmatprep.subr.bf16.mxu0 %v1118
        %1617 = vmatpush1.bf16.msra.mxu0 %v1117
        %1618 = vmatprep.mubr.bf16.mxu0 %v428
        %1619 = vmatmul.mubr.bf16.gmra.mrb[0].mxu0 %v427
        %v1620 = vpop.f32.mrb[0].mxu0
        %v1621 = vadd.f32 %v1508, %v1620
        %v1622 = vpop.f32.mrb[0].mxu0
        %v1623 = vadd.f32 %v1510, %v1622
        %v1624 = vpop.f32.mrb[0].mxu0
        %v1625 = vadd.f32 %v1512, %v1624
        %v1626 = vpop.f32.mrb[0].mxu0
        %v1627 = vadd.f32 %v1514, %v1626
        %1628 = vmatprep.mubr.bf16.mxu0 %v432
        %1629 = vmatmul.mubr.bf16.gmra.mrb[0].mxu0 %v431
        %v1630 = vpop.f32.mrb[0].mxu0
        %v1631 = vadd.f32 %v1518, %v1630
        %v1632 = vpop.f32.mrb[0].mxu0
        %v1633 = vadd.f32 %v1520, %v1632
        %v1634 = vpop.f32.mrb[0].mxu0
        %v1635 = vadd.f32 %v1522, %v1634
        %v1636 = vpop.f32.mrb[0].mxu0
        %v1637 = vadd.f32 %v1524, %v1636
        %1638 = vmatprep.mubr.bf16.mxu0 %v436
        %1639 = vmatmul.mubr.bf16.gmra.mrb[0].mxu0 %v435
        %v1640 = vpop.f32.mrb[0].mxu0
        %v1641 = vadd.f32 %v1528, %v1640
        %v1642 = vpop.f32.mrb[0].mxu0
        %v1643 = vadd.f32 %v1530, %v1642
        %v1644 = vpop.f32.mrb[0].mxu0
        %v1645 = vadd.f32 %v1532, %v1644
        %v1646 = vpop.f32.mrb[0].mxu0
        %v1647 = vadd.f32 %v1534, %v1646
        %1648 = vmatprep.mubr.bf16.mxu0 %v440
        %1649 = vmatmul.mubr.bf16.gmra.mrb[0].mxu0 %v439
        %v1650 = vpop.f32.mrb[0].mxu0
        %v1651 = vadd.f32 %v1538, %v1650
        %v1652 = vpop.f32.mrb[0].mxu0
        %v1653 = vadd.f32 %v1540, %v1652
        %v1654 = vpop.f32.mrb[0].mxu0
        %v1655 = vadd.f32 %v1542, %v1654
        %v1656 = vpop.f32.mrb[0].mxu0
        %v1657 = vadd.f32 %v1544, %v1656
        %1658 = vmatprep.mubr.bf16.mxu0 %v444
        %1659 = vmatmul.mubr.bf16.gmra.mrb[0].mxu0 %v443
        %v1660 = vpop.f32.mrb[0].mxu0
        %v1661 = vadd.f32 %v1548, %v1660
        %v1662 = vpop.f32.mrb[0].mxu0
        %v1663 = vadd.f32 %v1550, %v1662
        %v1664 = vpop.f32.mrb[0].mxu0
        %v1665 = vadd.f32 %v1552, %v1664
        %v1666 = vpop.f32.mrb[0].mxu0
        %v1667 = vadd.f32 %v1554, %v1666
        %1668 = vmatprep.mubr.bf16.mxu0 %v448
        %1669 = vmatmul.mubr.bf16.gmra.mrb[0].mxu0 %v447
        %v1670 = vpop.f32.mrb[0].mxu0
        %v1671 = vadd.f32 %v1558, %v1670
        %v1672 = vpop.f32.mrb[0].mxu0
        %v1673 = vadd.f32 %v1560, %v1672
        %v1674 = vpop.f32.mrb[0].mxu0
        %v1675 = vadd.f32 %v1562, %v1674
        %v1676 = vpop.f32.mrb[0].mxu0
        %v1677 = vadd.f32 %v1564, %v1676
        %1678 = vmatprep.mubr.bf16.mxu0 %v452
        %1679 = vmatmul.mubr.bf16.gmra.mrb[0].mxu0 %v451
        %v1680 = vpop.f32.mrb[0].mxu0
        %v1681 = vadd.f32 %v1568, %v1680
        %v1682 = vpop.f32.mrb[0].mxu0
        %v1683 = vadd.f32 %v1570, %v1682
        %v1684 = vpop.f32.mrb[0].mxu0
        %v1685 = vadd.f32 %v1572, %v1684
        %v1686 = vpop.f32.mrb[0].mxu0
        %v1687 = vadd.f32 %v1574, %v1686
        %1688 = vmatprep.mubr.bf16.mxu0 %v456
        %1689 = vmatmul.mubr.bf16.gmra.mrb[0].mxu0 %v455
        %v1690 = vpop.f32.mrb[0].mxu0
        %v1691 = vadd.f32 %v1578, %v1690
        %v1692 = vpop.f32.mrb[0].mxu0
        %v1693 = vadd.f32 %v1580, %v1692
        %v1694 = vpop.f32.mrb[0].mxu0
        %v1695 = vadd.f32 %v1582, %v1694
        %v1696 = vpop.f32.mrb[0].mxu0
        %v1697 = vadd.f32 %v1584, %v1696
        %1698 = vdwg.mxu0
        %v1699 = vmax.f32 %v1395, 0.0
        %v1700 = vmax.f32 %v1397, 0.0
        %v1701 = vmax.f32 %v1621, 0.0
        %v1702 = vmax.f32 %v1623, 0.0
        %v1703 = vmax.f32 %v1399, 0.0
        %v1704 = vmax.f32 %v1401, 0.0
        %v1705 = vmax.f32 %v1625, 0.0
        %v1706 = vmax.f32 %v1627, 0.0
        %v1707 = vmax.f32 %v1405, 0.0
        %v1708 = vmax.f32 %v1407, 0.0
        %v1709 = vmax.f32 %v1631, 0.0
        %v1710 = vmax.f32 %v1633, 0.0
        %v1711 = vmax.f32 %v1409, 0.0
        %v1712 = vmax.f32 %v1411, 0.0
        %v1713 = vmax.f32 %v1635, 0.0
        %v1714 = vmax.f32 %v1637, 0.0
        %v1715 = vmax.f32 %v1415, 0.0
        %v1716 = vmax.f32 %v1417, 0.0
        %v1717 = vmax.f32 %v1641, 0.0
        %v1718 = vmax.f32 %v1643, 0.0
        %v1719 = vmax.f32 %v1419, 0.0
        %v1720 = vmax.f32 %v1421, 0.0
        %v1721 = vmax.f32 %v1645, 0.0
        %v1722 = vmax.f32 %v1647, 0.0
        %v1723 = vmax.f32 %v1425, 0.0
        %v1724 = vmax.f32 %v1427, 0.0
        %v1725 = vmax.f32 %v1651, 0.0
        %v1726 = vmax.f32 %v1653, 0.0
        %v1727 = vmax.f32 %v1429, 0.0
        %v1728 = vmax.f32 %v1431, 0.0
        %v1729 = vmax.f32 %v1655, 0.0
        %v1730 = vmax.f32 %v1657, 0.0
        %v1731 = vmax.f32 %v1435, 0.0
        %v1732 = vmax.f32 %v1437, 0.0
        %v1733 = vmax.f32 %v1661, 0.0
        %v1734 = vmax.f32 %v1663, 0.0
        %v1735 = vmax.f32 %v1439, 0.0
        %v1736 = vmax.f32 %v1441, 0.0
        %v1737 = vmax.f32 %v1665, 0.0
        %v1738 = vmax.f32 %v1667, 0.0
        %v1739 = vmax.f32 %v1445, 0.0
        %v1740 = vmax.f32 %v1447, 0.0
        %v1741 = vmax.f32 %v1671, 0.0
        %v1742 = vmax.f32 %v1673, 0.0
        %v1743 = vmax.f32 %v1449, 0.0
        %v1744 = vmax.f32 %v1451, 0.0
        %v1745 = vmax.f32 %v1675, 0.0
        %v1746 = vmax.f32 %v1677, 0.0
        %v1747 = vmax.f32 %v1455, 0.0
        %v1748 = vmax.f32 %v1457, 0.0
        %v1749 = vmax.f32 %v1681, 0.0
        %v1750 = vmax.f32 %v1683, 0.0
        %v1751 = vmax.f32 %v1459, 0.0
        %v1752 = vmax.f32 %v1461, 0.0
        %v1753 = vmax.f32 %v1685, 0.0
        %v1754 = vmax.f32 %v1687, 0.0
        %v1755 = vmax.f32 %v1465, 0.0
        %v1756 = vmax.f32 %v1467, 0.0
        %v1757 = vmax.f32 %v1691, 0.0
        %v1758 = vmax.f32 %v1693, 0.0
        %v1759 = vmax.f32 %v1469, 0.0
        %v1760 = vmax.f32 %v1471, 0.0
        %v1761 = vmax.f32 %v1695, 0.0
        %v1762 = vmax.f32 %v1697, 0.0
        %v1763 = vpack.c.bf16 %v1703, %v1699
        %v1764 = vpack.c.bf16 %v1704, %v1700
        %v1765 = vpack.c.bf16 %v1705, %v1701
        %v1766 = vpack.c.bf16 %v1706, %v1702
        %v1767 = vpack.c.bf16 %v1711, %v1707
        %v1768 = vpack.c.bf16 %v1712, %v1708
        %v1769 = vpack.c.bf16 %v1713, %v1709
        %v1770 = vpack.c.bf16 %v1714, %v1710
        %v1771 = vpack.c.bf16 %v1719, %v1715
        %v1772 = vpack.c.bf16 %v1720, %v1716
        %v1773 = vpack.c.bf16 %v1721, %v1717
        %v1774 = vpack.c.bf16 %v1722, %v1718
        %v1775 = vpack.c.bf16 %v1727, %v1723
        %v1776 = vpack.c.bf16 %v1728, %v1724
        %v1777 = vpack.c.bf16 %v1729, %v1725
        %v1778 = vpack.c.bf16 %v1730, %v1726
        %v1779 = vpack.c.bf16 %v1735, %v1731
        %v1780 = vpack.c.bf16 %v1736, %v1732
        %v1781 = vpack.c.bf16 %v1737, %v1733
        %v1782 = vpack.c.bf16 %v1738, %v1734
        %v1783 = vpack.c.bf16 %v1743, %v1739
        %v1784 = vpack.c.bf16 %v1744, %v1740
        %v1785 = vpack.c.bf16 %v1745, %v1741
        %v1786 = vpack.c.bf16 %v1746, %v1742
        %v1787 = vpack.c.bf16 %v1751, %v1747
        %v1788 = vpack.c.bf16 %v1752, %v1748
        %v1789 = vpack.c.bf16 %v1753, %v1749
        %v1790 = vpack.c.bf16 %v1754, %v1750
        %v1791 = vpack.c.bf16 %v1759, %v1755
        %v1792 = vpack.c.bf16 %v1760, %v1756
        %v1793 = vpack.c.bf16 %v1761, %v1757
        %v1794 = vpack.c.bf16 %v1762, %v1758
        %v1795 = vld [vmem:[#allocation7] sm:$0xff]
        %v1796 = vld [vmem:[#allocation7 + $0x8] sm:$0xff]
        %v1797 = vld [vmem:[#allocation7 + $0x10] sm:$0xff]
        %v1798 = vld [vmem:[#allocation7 + $0x18] sm:$0xff]
        %v1799 = vld [vmem:[#allocation7 + $0x20] sm:$0xff]
        %v1800 = vld [vmem:[#allocation7 + $0x28] sm:$0xff]
        %v1801 = vld [vmem:[#allocation7 + $0x30] sm:$0xff]
        %v1802 = vld [vmem:[#allocation7 + $0x38] sm:$0xff]
        %v1803 = vld [vmem:[#allocation7 + $0x40] sm:$0xff]
        %v1804 = vld [vmem:[#allocation7 + $0x48] sm:$0xff]
        %v1805 = vld [vmem:[#allocation7 + $0x50] sm:$0xff]
        %v1806 = vld [vmem:[#allocation7 + $0x58] sm:$0xff]
        %v1807 = vld [vmem:[#allocation7 + $0x60] sm:$0xff]
        %v1808 = vld [vmem:[#allocation7 + $0x68] sm:$0xff]
        %v1809 = vld [vmem:[#allocation7 + $0x70] sm:$0xff]
        %v1810 = vld [vmem:[#allocation7 + $0x78] sm:$0xff]
        %v1811 = vld [vmem:[#allocation7 + $0x80] sm:$0xff]
        %v1812 = vld [vmem:[#allocation7 + $0x88] sm:$0xff]
        %v1813 = vld [vmem:[#allocation7 + $0x90] sm:$0xff]
        %v1814 = vld [vmem:[#allocation7 + $0x98] sm:$0xff]
        %v1815 = vld [vmem:[#allocation7 + $0xa0] sm:$0xff]
        %v1816 = vld [vmem:[#allocation7 + $0xa8] sm:$0xff]
        %v1817 = vld [vmem:[#allocation7 + $0xb0] sm:$0xff]
        %v1818 = vld [vmem:[#allocation7 + $0xb8] sm:$0xff]
        %v1819 = vld [vmem:[#allocation7 + $0xc0] sm:$0xff]
        %v1820 = vld [vmem:[#allocation7 + $0xc8] sm:$0xff]
        %v1821 = vld [vmem:[#allocation7 + $0xd0] sm:$0xff]
        %v1822 = vld [vmem:[#allocation7 + $0xd8] sm:$0xff]
        %v1823 = vld [vmem:[#allocation7 + $0xe0] sm:$0xff]
        %v1824 = vld [vmem:[#allocation7 + $0xe8] sm:$0xff]
        %v1825 = vld [vmem:[#allocation7 + $0xf0] sm:$0xff]
        %v1826 = vld [vmem:[#allocation7 + $0xf8] sm:$0xff]
        %v1827 = vld [vmem:[#allocation7 + $0x100] sm:$0xff]
        %v1828 = vld [vmem:[#allocation7 + $0x108] sm:$0xff]
        %v1829 = vld [vmem:[#allocation7 + $0x110] sm:$0xff]
        %v1830 = vld [vmem:[#allocation7 + $0x118] sm:$0xff]
        %v1831 = vld [vmem:[#allocation7 + $0x120] sm:$0xff]
        %v1832 = vld [vmem:[#allocation7 + $0x128] sm:$0xff]
        %v1833 = vld [vmem:[#allocation7 + $0x130] sm:$0xff]
        %v1834 = vld [vmem:[#allocation7 + $0x138] sm:$0xff]
        %v1835 = vld [vmem:[#allocation7 + $0x140] sm:$0xff]
        %v1836 = vld [vmem:[#allocation7 + $0x148] sm:$0xff]
        %v1837 = vld [vmem:[#allocation7 + $0x150] sm:$0xff]
        %v1838 = vld [vmem:[#allocation7 + $0x158] sm:$0xff]
        %v1839 = vld [vmem:[#allocation7 + $0x160] sm:$0xff]
        %v1840 = vld [vmem:[#allocation7 + $0x168] sm:$0xff]
        %v1841 = vld [vmem:[#allocation7 + $0x170] sm:$0xff]
        %v1842 = vld [vmem:[#allocation7 + $0x178] sm:$0xff]
        %v1843 = vld [vmem:[#allocation7 + $0x180] sm:$0xff]
        %v1844 = vld [vmem:[#allocation7 + $0x188] sm:$0xff]
        %v1845 = vld [vmem:[#allocation7 + $0x190] sm:$0xff]
        %v1846 = vld [vmem:[#allocation7 + $0x198] sm:$0xff]
        %v1847 = vld [vmem:[#allocation7 + $0x1a0] sm:$0xff]
        %v1848 = vld [vmem:[#allocation7 + $0x1a8] sm:$0xff]
        %v1849 = vld [vmem:[#allocation7 + $0x1b0] sm:$0xff]
        %v1850 = vld [vmem:[#allocation7 + $0x1b8] sm:$0xff]
        %v1851 = vld [vmem:[#allocation7 + $0x1c0] sm:$0xff]
        %v1852 = vld [vmem:[#allocation7 + $0x1c8] sm:$0xff]
        %v1853 = vld [vmem:[#allocation7 + $0x1d0] sm:$0xff]
        %v1854 = vld [vmem:[#allocation7 + $0x1d8] sm:$0xff]
        %v1855 = vld [vmem:[#allocation7 + $0x1e0] sm:$0xff]
        %v1856 = vld [vmem:[#allocation7 + $0x1e8] sm:$0xff]
        %v1857 = vld [vmem:[#allocation7 + $0x1f0] sm:$0xff]
        %v1858 = vld [vmem:[#allocation7 + $0x1f8] sm:$0xff]
        %v1859 = vld [vmem:[#allocation7 + $0x200] sm:$0xff]
        %v1860 = vld [vmem:[#allocation7 + $0x208] sm:$0xff]
        %v1861 = vld [vmem:[#allocation7 + $0x210] sm:$0xff]
        %v1862 = vld [vmem:[#allocation7 + $0x218] sm:$0xff]
        %v1863 = vld [vmem:[#allocation7 + $0x220] sm:$0xff]
        %v1864 = vld [vmem:[#allocation7 + $0x228] sm:$0xff]
        %v1865 = vld [vmem:[#allocation7 + $0x230] sm:$0xff]
        %v1866 = vld [vmem:[#allocation7 + $0x238] sm:$0xff]
        %v1867 = vld [vmem:[#allocation7 + $0x240] sm:$0xff]
        %v1868 = vld [vmem:[#allocation7 + $0x248] sm:$0xff]
        %v1869 = vld [vmem:[#allocation7 + $0x250] sm:$0xff]
        %v1870 = vld [vmem:[#allocation7 + $0x258] sm:$0xff]
        %v1871 = vld [vmem:[#allocation7 + $0x260] sm:$0xff]
        %v1872 = vld [vmem:[#allocation7 + $0x268] sm:$0xff]
        %v1873 = vld [vmem:[#allocation7 + $0x270] sm:$0xff]
        %v1874 = vld [vmem:[#allocation7 + $0x278] sm:$0xff]
        %v1875 = vld [vmem:[#allocation7 + $0x280] sm:$0xff]
        %v1876 = vld [vmem:[#allocation7 + $0x288] sm:$0xff]
        %v1877 = vld [vmem:[#allocation7 + $0x290] sm:$0xff]
        %v1878 = vld [vmem:[#allocation7 + $0x298] sm:$0xff]
        %v1879 = vld [vmem:[#allocation7 + $0x2a0] sm:$0xff]
        %v1880 = vld [vmem:[#allocation7 + $0x2a8] sm:$0xff]
        %v1881 = vld [vmem:[#allocation7 + $0x2b0] sm:$0xff]
        %v1882 = vld [vmem:[#allocation7 + $0x2b8] sm:$0xff]
        %v1883 = vld [vmem:[#allocation7 + $0x2c0] sm:$0xff]
        %v1884 = vld [vmem:[#allocation7 + $0x2c8] sm:$0xff]
        %v1885 = vld [vmem:[#allocation7 + $0x2d0] sm:$0xff]
        %v1886 = vld [vmem:[#allocation7 + $0x2d8] sm:$0xff]
        %v1887 = vld [vmem:[#allocation7 + $0x2e0] sm:$0xff]
        %v1888 = vld [vmem:[#allocation7 + $0x2e8] sm:$0xff]
        %v1889 = vld [vmem:[#allocation7 + $0x2f0] sm:$0xff]
        %v1890 = vld [vmem:[#allocation7 + $0x2f8] sm:$0xff]
        %v1891 = vld [vmem:[#allocation7 + $0x300] sm:$0xff]
        %v1892 = vld [vmem:[#allocation7 + $0x308] sm:$0xff]
        %v1893 = vld [vmem:[#allocation7 + $0x310] sm:$0xff]
        %v1894 = vld [vmem:[#allocation7 + $0x318] sm:$0xff]
        %v1895 = vld [vmem:[#allocation7 + $0x320] sm:$0xff]
        %v1896 = vld [vmem:[#allocation7 + $0x328] sm:$0xff]
        %v1897 = vld [vmem:[#allocation7 + $0x330] sm:$0xff]
        %v1898 = vld [vmem:[#allocation7 + $0x338] sm:$0xff]
        %v1899 = vld [vmem:[#allocation7 + $0x340] sm:$0xff]
        %v1900 = vld [vmem:[#allocation7 + $0x348] sm:$0xff]
        %v1901 = vld [vmem:[#allocation7 + $0x350] sm:$0xff]
        %v1902 = vld [vmem:[#allocation7 + $0x358] sm:$0xff]
        %v1903 = vld [vmem:[#allocation7 + $0x360] sm:$0xff]
        %v1904 = vld [vmem:[#allocation7 + $0x368] sm:$0xff]
        %v1905 = vld [vmem:[#allocation7 + $0x370] sm:$0xff]
        %v1906 = vld [vmem:[#allocation7 + $0x378] sm:$0xff]
        %v1907 = vld [vmem:[#allocation7 + $0x380] sm:$0xff]
        %v1908 = vld [vmem:[#allocation7 + $0x388] sm:$0xff]
        %v1909 = vld [vmem:[#allocation7 + $0x390] sm:$0xff]
        %v1910 = vld [vmem:[#allocation7 + $0x398] sm:$0xff]
        %v1911 = vld [vmem:[#allocation7 + $0x3a0] sm:$0xff]
        %v1912 = vld [vmem:[#allocation7 + $0x3a8] sm:$0xff]
        %v1913 = vld [vmem:[#allocation7 + $0x3b0] sm:$0xff]
        %v1914 = vld [vmem:[#allocation7 + $0x3b8] sm:$0xff]
        %v1915 = vld [vmem:[#allocation7 + $0x3c0] sm:$0xff]
        %v1916 = vld [vmem:[#allocation7 + $0x3c8] sm:$0xff]
        %v1917 = vld [vmem:[#allocation7 + $0x3d0] sm:$0xff]
        %v1918 = vld [vmem:[#allocation7 + $0x3d8] sm:$0xff]
        %v1919 = vld [vmem:[#allocation7 + $0x3e0] sm:$0xff]
        %v1920 = vld [vmem:[#allocation7 + $0x3e8] sm:$0xff]
        %v1921 = vld [vmem:[#allocation7 + $0x3f0] sm:$0xff]
        %v1922 = vld [vmem:[#allocation7 + $0x3f8] sm:$0xff]
        %v1923 = vld [vmem:[%s4] sm:$0xf]
        %v1925 = vlaneseq
        %v1926 = vshrl.u32 %v1925, 7
        %v1927 = vsub.s32 0, %v1926
        %v1928 = vrot.slane %v1923, %v1927
        %v1929 = vlaneseq
        %v1930 = vshrl.u32 %v1929, 7
        %v1931 = vsub.s32 1, %v1930
        %v1932 = vrot.slane %v1923, %v1931
        %v1933 = vlaneseq
        %v1934 = vshrl.u32 %v1933, 7
        %v1935 = vsub.s32 2, %v1934
        %v1936 = vrot.slane %v1923, %v1935
        %v1937 = vlaneseq
        %v1938 = vshrl.u32 %v1937, 7
        %v1939 = vsub.s32 3, %v1938
        %v1940 = vrot.slane %v1923, %v1939
        %v2073 = vunpack.c.l.b16 %v1795
        %v2074 = vunpack.c.h.b16 %v1795
        %v2075 = vunpack.c.l.b16 %v1796
        %v2076 = vunpack.c.h.b16 %v1796
        %v2077 = vunpack.c.l.b16 %v1797
        %v2078 = vunpack.c.h.b16 %v1797
        %v2079 = vunpack.c.l.b16 %v1798
        %v2080 = vunpack.c.h.b16 %v1798
        %v2081 = vunpack.c.l.b16 %v1799
        %v2082 = vunpack.c.h.b16 %v1799
        %v2083 = vunpack.c.l.b16 %v1800
        %v2084 = vunpack.c.h.b16 %v1800
        %v2085 = vunpack.c.l.b16 %v1801
        %v2086 = vunpack.c.h.b16 %v1801
        %v2087 = vunpack.c.l.b16 %v1802
        %v2088 = vunpack.c.h.b16 %v1802
        %v2089 = vunpack.c.l.b16 %v1803
        %v2090 = vunpack.c.h.b16 %v1803
        %v2091 = vunpack.c.l.b16 %v1804
        %v2092 = vunpack.c.h.b16 %v1804
        %v2093 = vunpack.c.l.b16 %v1805
        %v2094 = vunpack.c.h.b16 %v1805
        %v2095 = vunpack.c.l.b16 %v1806
        %v2096 = vunpack.c.h.b16 %v1806
        %v2097 = vunpack.c.l.b16 %v1807
        %v2098 = vunpack.c.h.b16 %v1807
        %v2099 = vunpack.c.l.b16 %v1808
        %v2100 = vunpack.c.h.b16 %v1808
        %v2101 = vunpack.c.l.b16 %v1809
        %v2102 = vunpack.c.h.b16 %v1809
        %v2103 = vunpack.c.l.b16 %v1810
        %v2104 = vunpack.c.h.b16 %v1810
        %v2105 = vunpack.c.l.b16 %v1811
        %v2106 = vunpack.c.h.b16 %v1811
        %v2107 = vunpack.c.l.b16 %v1812
        %v2108 = vunpack.c.h.b16 %v1812
        %v2109 = vunpack.c.l.b16 %v1813
        %v2110 = vunpack.c.h.b16 %v1813
        %v2111 = vunpack.c.l.b16 %v1814
        %v2112 = vunpack.c.h.b16 %v1814
        %v2113 = vunpack.c.l.b16 %v1815
        %v2114 = vunpack.c.h.b16 %v1815
        %v2115 = vunpack.c.l.b16 %v1816
        %v2116 = vunpack.c.h.b16 %v1816
        %v2117 = vunpack.c.l.b16 %v1817
        %v2118 = vunpack.c.h.b16 %v1817
        %v2119 = vunpack.c.l.b16 %v1818
        %v2120 = vunpack.c.h.b16 %v1818
        %v2121 = vunpack.c.l.b16 %v1819
        %v2122 = vunpack.c.h.b16 %v1819
        %v2123 = vunpack.c.l.b16 %v1820
        %v2124 = vunpack.c.h.b16 %v1820
        %v2125 = vunpack.c.l.b16 %v1821
        %v2126 = vunpack.c.h.b16 %v1821
        %v2127 = vunpack.c.l.b16 %v1822
        %v2128 = vunpack.c.h.b16 %v1822
        %v2129 = vunpack.c.l.b16 %v1823
        %v2130 = vunpack.c.h.b16 %v1823
        %v2131 = vunpack.c.l.b16 %v1824
        %v2132 = vunpack.c.h.b16 %v1824
        %v2133 = vunpack.c.l.b16 %v1825
        %v2134 = vunpack.c.h.b16 %v1825
        %v2135 = vunpack.c.l.b16 %v1826
        %v2136 = vunpack.c.h.b16 %v1826
        %v2137 = vunpack.c.l.b16 %v1827
        %v2138 = vunpack.c.h.b16 %v1827
        %v2139 = vunpack.c.l.b16 %v1828
        %v2140 = vunpack.c.h.b16 %v1828
        %v2141 = vunpack.c.l.b16 %v1829
        %v2142 = vunpack.c.h.b16 %v1829
        %v2143 = vunpack.c.l.b16 %v1830
        %v2144 = vunpack.c.h.b16 %v1830
        %v2145 = vunpack.c.l.b16 %v1831
        %v2146 = vunpack.c.h.b16 %v1831
        %v2147 = vunpack.c.l.b16 %v1832
        %v2148 = vunpack.c.h.b16 %v1832
        %v2149 = vunpack.c.l.b16 %v1833
        %v2150 = vunpack.c.h.b16 %v1833
        %v2151 = vunpack.c.l.b16 %v1834
        %v2152 = vunpack.c.h.b16 %v1834
        %v2153 = vunpack.c.l.b16 %v1835
        %v2154 = vunpack.c.h.b16 %v1835
        %v2155 = vunpack.c.l.b16 %v1836
        %v2156 = vunpack.c.h.b16 %v1836
        %v2157 = vunpack.c.l.b16 %v1837
        %v2158 = vunpack.c.h.b16 %v1837
        %v2159 = vunpack.c.l.b16 %v1838
        %v2160 = vunpack.c.h.b16 %v1838
        %v2161 = vunpack.c.l.b16 %v1839
        %v2162 = vunpack.c.h.b16 %v1839
        %v2163 = vunpack.c.l.b16 %v1840
        %v2164 = vunpack.c.h.b16 %v1840
        %v2165 = vunpack.c.l.b16 %v1841
        %v2166 = vunpack.c.h.b16 %v1841
        %v2167 = vunpack.c.l.b16 %v1842
        %v2168 = vunpack.c.h.b16 %v1842
        %v2169 = vunpack.c.l.b16 %v1843
        %v2170 = vunpack.c.h.b16 %v1843
        %v2171 = vunpack.c.l.b16 %v1844
        %v2172 = vunpack.c.h.b16 %v1844
        %v2173 = vunpack.c.l.b16 %v1845
        %v2174 = vunpack.c.h.b16 %v1845
        %v2175 = vunpack.c.l.b16 %v1846
        %v2176 = vunpack.c.h.b16 %v1846
        %v2177 = vunpack.c.l.b16 %v1847
        %v2178 = vunpack.c.h.b16 %v1847
        %v2179 = vunpack.c.l.b16 %v1848
        %v2180 = vunpack.c.h.b16 %v1848
        %v2181 = vunpack.c.l.b16 %v1849
        %v2182 = vunpack.c.h.b16 %v1849
        %v2183 = vunpack.c.l.b16 %v1850
        %v2184 = vunpack.c.h.b16 %v1850
        %v2185 = vunpack.c.l.b16 %v1851
        %v2186 = vunpack.c.h.b16 %v1851
        %v2187 = vunpack.c.l.b16 %v1852
        %v2188 = vunpack.c.h.b16 %v1852
        %v2189 = vunpack.c.l.b16 %v1853
        %v2190 = vunpack.c.h.b16 %v1853
        %v2191 = vunpack.c.l.b16 %v1854
        %v2192 = vunpack.c.h.b16 %v1854
        %v2193 = vunpack.c.l.b16 %v1855
        %v2194 = vunpack.c.h.b16 %v1855
        %v2195 = vunpack.c.l.b16 %v1856
        %v2196 = vunpack.c.h.b16 %v1856
        %v2197 = vunpack.c.l.b16 %v1857
        %v2198 = vunpack.c.h.b16 %v1857
        %v2199 = vunpack.c.l.b16 %v1858
        %v2200 = vunpack.c.h.b16 %v1858
        %v2201 = vunpack.c.l.b16 %v1859
        %v2202 = vunpack.c.h.b16 %v1859
        %v2203 = vunpack.c.l.b16 %v1860
        %v2204 = vunpack.c.h.b16 %v1860
        %v2205 = vunpack.c.l.b16 %v1861
        %v2206 = vunpack.c.h.b16 %v1861
        %v2207 = vunpack.c.l.b16 %v1862
        %v2208 = vunpack.c.h.b16 %v1862
        %v2209 = vunpack.c.l.b16 %v1863
        %v2210 = vunpack.c.h.b16 %v1863
        %v2211 = vunpack.c.l.b16 %v1864
        %v2212 = vunpack.c.h.b16 %v1864
        %v2213 = vunpack.c.l.b16 %v1865
        %v2214 = vunpack.c.h.b16 %v1865
        %v2215 = vunpack.c.l.b16 %v1866
        %v2216 = vunpack.c.h.b16 %v1866
        %v2217 = vunpack.c.l.b16 %v1867
        %v2218 = vunpack.c.h.b16 %v1867
        %v2219 = vunpack.c.l.b16 %v1868
        %v2220 = vunpack.c.h.b16 %v1868
        %v2221 = vunpack.c.l.b16 %v1869
        %v2222 = vunpack.c.h.b16 %v1869
        %v2223 = vunpack.c.l.b16 %v1870
        %v2224 = vunpack.c.h.b16 %v1870
        %v2225 = vunpack.c.l.b16 %v1871
        %v2226 = vunpack.c.h.b16 %v1871
        %v2227 = vunpack.c.l.b16 %v1872
        %v2228 = vunpack.c.h.b16 %v1872
        %v2229 = vunpack.c.l.b16 %v1873
        %v2230 = vunpack.c.h.b16 %v1873
        %v2231 = vunpack.c.l.b16 %v1874
        %v2232 = vunpack.c.h.b16 %v1874
        %v2233 = vunpack.c.l.b16 %v1875
        %v2234 = vunpack.c.h.b16 %v1875
        %v2235 = vunpack.c.l.b16 %v1876
        %v2236 = vunpack.c.h.b16 %v1876
        %v2237 = vunpack.c.l.b16 %v1877
        %v2238 = vunpack.c.h.b16 %v1877
        %v2239 = vunpack.c.l.b16 %v1878
        %v2240 = vunpack.c.h.b16 %v1878
        %v2241 = vunpack.c.l.b16 %v1879
        %v2242 = vunpack.c.h.b16 %v1879
        %v2243 = vunpack.c.l.b16 %v1880
        %v2244 = vunpack.c.h.b16 %v1880
        %v2245 = vunpack.c.l.b16 %v1881
        %v2246 = vunpack.c.h.b16 %v1881
        %v2247 = vunpack.c.l.b16 %v1882
        %v2248 = vunpack.c.h.b16 %v1882
        %v2249 = vunpack.c.l.b16 %v1883
        %v2250 = vunpack.c.h.b16 %v1883
        %v2251 = vunpack.c.l.b16 %v1884
        %v2252 = vunpack.c.h.b16 %v1884
        %v2253 = vunpack.c.l.b16 %v1885
        %v2254 = vunpack.c.h.b16 %v1885
        %v2255 = vunpack.c.l.b16 %v1886
        %v2256 = vunpack.c.h.b16 %v1886
        %v2257 = vunpack.c.l.b16 %v1887
        %v2258 = vunpack.c.h.b16 %v1887
        %v2259 = vunpack.c.l.b16 %v1888
        %v2260 = vunpack.c.h.b16 %v1888
        %v2261 = vunpack.c.l.b16 %v1889
        %v2262 = vunpack.c.h.b16 %v1889
        %v2263 = vunpack.c.l.b16 %v1890
        %v2264 = vunpack.c.h.b16 %v1890
        %v2265 = vunpack.c.l.b16 %v1891
        %v2266 = vunpack.c.h.b16 %v1891
        %v2267 = vunpack.c.l.b16 %v1892
        %v2268 = vunpack.c.h.b16 %v1892
        %v2269 = vunpack.c.l.b16 %v1893
        %v2270 = vunpack.c.h.b16 %v1893
        %v2271 = vunpack.c.l.b16 %v1894
        %v2272 = vunpack.c.h.b16 %v1894
        %v2273 = vunpack.c.l.b16 %v1895
        %v2274 = vunpack.c.h.b16 %v1895
        %v2275 = vunpack.c.l.b16 %v1896
        %v2276 = vunpack.c.h.b16 %v1896
        %v2277 = vunpack.c.l.b16 %v1897
        %v2278 = vunpack.c.h.b16 %v1897
        %v2279 = vunpack.c.l.b16 %v1898
        %v2280 = vunpack.c.h.b16 %v1898
        %v2281 = vunpack.c.l.b16 %v1899
        %v2282 = vunpack.c.h.b16 %v1899
        %v2283 = vunpack.c.l.b16 %v1900
        %v2284 = vunpack.c.h.b16 %v1900
        %v2285 = vunpack.c.l.b16 %v1901
        %v2286 = vunpack.c.h.b16 %v1901
        %v2287 = vunpack.c.l.b16 %v1902
        %v2288 = vunpack.c.h.b16 %v1902
        %v2289 = vunpack.c.l.b16 %v1903
        %v2290 = vunpack.c.h.b16 %v1903
        %v2291 = vunpack.c.l.b16 %v1904
        %v2292 = vunpack.c.h.b16 %v1904
        %v2293 = vunpack.c.l.b16 %v1905
        %v2294 = vunpack.c.h.b16 %v1905
        %v2295 = vunpack.c.l.b16 %v1906
        %v2296 = vunpack.c.h.b16 %v1906
        %v2297 = vunpack.c.l.b16 %v1907
        %v2298 = vunpack.c.h.b16 %v1907
        %v2299 = vunpack.c.l.b16 %v1908
        %v2300 = vunpack.c.h.b16 %v1908
        %v2301 = vunpack.c.l.b16 %v1909
        %v2302 = vunpack.c.h.b16 %v1909
        %v2303 = vunpack.c.l.b16 %v1910
        %v2304 = vunpack.c.h.b16 %v1910
        %v2305 = vunpack.c.l.b16 %v1911
        %v2306 = vunpack.c.h.b16 %v1911
        %v2307 = vunpack.c.l.b16 %v1912
        %v2308 = vunpack.c.h.b16 %v1912
        %v2309 = vunpack.c.l.b16 %v1913
        %v2310 = vunpack.c.h.b16 %v1913
        %v2311 = vunpack.c.l.b16 %v1914
        %v2312 = vunpack.c.h.b16 %v1914
        %v2313 = vunpack.c.l.b16 %v1915
        %v2314 = vunpack.c.h.b16 %v1915
        %v2315 = vunpack.c.l.b16 %v1916
        %v2316 = vunpack.c.h.b16 %v1916
        %v2317 = vunpack.c.l.b16 %v1917
        %v2318 = vunpack.c.h.b16 %v1917
        %v2319 = vunpack.c.l.b16 %v1918
        %v2320 = vunpack.c.h.b16 %v1918
        %v2321 = vunpack.c.l.b16 %v1919
        %v2322 = vunpack.c.h.b16 %v1919
        %v2323 = vunpack.c.l.b16 %v1920
        %v2324 = vunpack.c.h.b16 %v1920
        %v2325 = vunpack.c.l.b16 %v1921
        %v2326 = vunpack.c.h.b16 %v1921
        %v2327 = vunpack.c.l.b16 %v1922
        %v2328 = vunpack.c.h.b16 %v1922
        %v2329 = vpack.c.b16 %v2077, %v2073
        %v2330 = vpack.c.b16 %v2078, %v2074
        %v2331 = vpack.c.b16 %v2079, %v2075
        %v2332 = vpack.c.b16 %v2080, %v2076
        %v2333 = vpack.c.b16 %v2085, %v2081
        %v2334 = vpack.c.b16 %v2086, %v2082
        %v2335 = vpack.c.b16 %v2087, %v2083
        %v2336 = vpack.c.b16 %v2088, %v2084
        %v2337 = vpack.c.b16 %v2093, %v2089
        %v2338 = vpack.c.b16 %v2094, %v2090
        %v2339 = vpack.c.b16 %v2095, %v2091
        %v2340 = vpack.c.b16 %v2096, %v2092
        %v2341 = vpack.c.b16 %v2101, %v2097
        %v2342 = vpack.c.b16 %v2102, %v2098
        %v2343 = vpack.c.b16 %v2103, %v2099
        %v2344 = vpack.c.b16 %v2104, %v2100
        %v2345 = vpack.c.b16 %v2109, %v2105
        %v2346 = vpack.c.b16 %v2110, %v2106
        %v2347 = vpack.c.b16 %v2111, %v2107
        %v2348 = vpack.c.b16 %v2112, %v2108
        %v2349 = vpack.c.b16 %v2117, %v2113
        %v2350 = vpack.c.b16 %v2118, %v2114
        %v2351 = vpack.c.b16 %v2119, %v2115
        %v2352 = vpack.c.b16 %v2120, %v2116
        %v2353 = vpack.c.b16 %v2125, %v2121
        %v2354 = vpack.c.b16 %v2126, %v2122
        %v2355 = vpack.c.b16 %v2127, %v2123
        %v2356 = vpack.c.b16 %v2128, %v2124
        %v2357 = vpack.c.b16 %v2133, %v2129
        %v2358 = vpack.c.b16 %v2134, %v2130
        %v2359 = vpack.c.b16 %v2135, %v2131
        %v2360 = vpack.c.b16 %v2136, %v2132
        %v2361 = vpack.c.b16 %v2141, %v2137
        %v2362 = vpack.c.b16 %v2142, %v2138
        %v2363 = vpack.c.b16 %v2143, %v2139
        %v2364 = vpack.c.b16 %v2144, %v2140
        %v2365 = vpack.c.b16 %v2149, %v2145
        %v2366 = vpack.c.b16 %v2150, %v2146
        %v2367 = vpack.c.b16 %v2151, %v2147
        %v2368 = vpack.c.b16 %v2152, %v2148
        %v2369 = vpack.c.b16 %v2157, %v2153
        %v2370 = vpack.c.b16 %v2158, %v2154
        %v2371 = vpack.c.b16 %v2159, %v2155
        %v2372 = vpack.c.b16 %v2160, %v2156
        %v2373 = vpack.c.b16 %v2165, %v2161
        %v2374 = vpack.c.b16 %v2166, %v2162
        %v2375 = vpack.c.b16 %v2167, %v2163
        %v2376 = vpack.c.b16 %v2168, %v2164
        %v2377 = vpack.c.b16 %v2173, %v2169
        %v2378 = vpack.c.b16 %v2174, %v2170
        %v2379 = vpack.c.b16 %v2175, %v2171
        %v2380 = vpack.c.b16 %v2176, %v2172
        %v2381 = vpack.c.b16 %v2181, %v2177
        %v2382 = vpack.c.b16 %v2182, %v2178
        %v2383 = vpack.c.b16 %v2183, %v2179
        %v2384 = vpack.c.b16 %v2184, %v2180
        %v2385 = vpack.c.b16 %v2189, %v2185
        %v2386 = vpack.c.b16 %v2190, %v2186
        %v2387 = vpack.c.b16 %v2191, %v2187
        %v2388 = vpack.c.b16 %v2192, %v2188
        %v2389 = vpack.c.b16 %v2197, %v2193
        %v2390 = vpack.c.b16 %v2198, %v2194
        %v2391 = vpack.c.b16 %v2199, %v2195
        %v2392 = vpack.c.b16 %v2200, %v2196
        %v2393 = vpack.c.b16 %v2205, %v2201
        %v2394 = vpack.c.b16 %v2206, %v2202
        %v2395 = vpack.c.b16 %v2207, %v2203
        %v2396 = vpack.c.b16 %v2208, %v2204
        %v2397 = vpack.c.b16 %v2213, %v2209
        %v2398 = vpack.c.b16 %v2214, %v2210
        %v2399 = vpack.c.b16 %v2215, %v2211
        %v2400 = vpack.c.b16 %v2216, %v2212
        %v2401 = vpack.c.b16 %v2221, %v2217
        %v2402 = vpack.c.b16 %v2222, %v2218
        %v2403 = vpack.c.b16 %v2223, %v2219
        %v2404 = vpack.c.b16 %v2224, %v2220
        %v2405 = vpack.c.b16 %v2229, %v2225
        %v2406 = vpack.c.b16 %v2230, %v2226
        %v2407 = vpack.c.b16 %v2231, %v2227
        %v2408 = vpack.c.b16 %v2232, %v2228
        %v2409 = vpack.c.b16 %v2237, %v2233
        %v2410 = vpack.c.b16 %v2238, %v2234
        %v2411 = vpack.c.b16 %v2239, %v2235
        %v2412 = vpack.c.b16 %v2240, %v2236
        %v2413 = vpack.c.b16 %v2245, %v2241
        %v2414 = vpack.c.b16 %v2246, %v2242
        %v2415 = vpack.c.b16 %v2247, %v2243
        %v2416 = vpack.c.b16 %v2248, %v2244
        %v2417 = vpack.c.b16 %v2253, %v2249
        %v2418 = vpack.c.b16 %v2254, %v2250
        %v2419 = vpack.c.b16 %v2255, %v2251
        %v2420 = vpack.c.b16 %v2256, %v2252
        %v2421 = vpack.c.b16 %v2261, %v2257
        %v2422 = vpack.c.b16 %v2262, %v2258
        %v2423 = vpack.c.b16 %v2263, %v2259
        %v2424 = vpack.c.b16 %v2264, %v2260
        %v2425 = vpack.c.b16 %v2269, %v2265
        %v2426 = vpack.c.b16 %v2270, %v2266
        %v2427 = vpack.c.b16 %v2271, %v2267
        %v2428 = vpack.c.b16 %v2272, %v2268
        %v2429 = vpack.c.b16 %v2277, %v2273
        %v2430 = vpack.c.b16 %v2278, %v2274
        %v2431 = vpack.c.b16 %v2279, %v2275
        %v2432 = vpack.c.b16 %v2280, %v2276
        %v2433 = vpack.c.b16 %v2285, %v2281
        %v2434 = vpack.c.b16 %v2286, %v2282
        %v2435 = vpack.c.b16 %v2287, %v2283
        %v2436 = vpack.c.b16 %v2288, %v2284
        %v2437 = vpack.c.b16 %v2293, %v2289
        %v2438 = vpack.c.b16 %v2294, %v2290
        %v2439 = vpack.c.b16 %v2295, %v2291
        %v2440 = vpack.c.b16 %v2296, %v2292
        %v2441 = vpack.c.b16 %v2301, %v2297
        %v2442 = vpack.c.b16 %v2302, %v2298
        %v2443 = vpack.c.b16 %v2303, %v2299
        %v2444 = vpack.c.b16 %v2304, %v2300
        %v2445 = vpack.c.b16 %v2309, %v2305
        %v2446 = vpack.c.b16 %v2310, %v2306
        %v2447 = vpack.c.b16 %v2311, %v2307
        %v2448 = vpack.c.b16 %v2312, %v2308
        %v2449 = vpack.c.b16 %v2317, %v2313
        %v2450 = vpack.c.b16 %v2318, %v2314
        %v2451 = vpack.c.b16 %v2319, %v2315
        %v2452 = vpack.c.b16 %v2320, %v2316
        %v2453 = vpack.c.b16 %v2325, %v2321
        %v2454 = vpack.c.b16 %v2326, %v2322
        %v2455 = vpack.c.b16 %v2327, %v2323
        %v2456 = vpack.c.b16 %v2328, %v2324
        %2585 = vmatprep.subr.bf16.mxu0 %v2330
        %2586 = vmatpush1.bf16.msra.mxu0 %v2329
        %2587 = vmatprep.subr.bf16.mxu0 %v2334
        %2588 = vmatpush1.bf16.msra.mxu0 %v2333
        %2589 = vmatprep.subr.bf16.mxu0 %v2338
        %2590 = vmatpush1.bf16.msra.mxu0 %v2337
        %2591 = vmatprep.subr.bf16.mxu0 %v2342
        %2592 = vmatpush1.bf16.msra.mxu0 %v2341
        %2593 = vmatprep.subr.bf16.mxu0 %v2346
        %2594 = vmatpush1.bf16.msra.mxu0 %v2345
        %2595 = vmatprep.subr.bf16.mxu0 %v2350
        %2596 = vmatpush1.bf16.msra.mxu0 %v2349
        %2597 = vmatprep.subr.bf16.mxu0 %v2354
        %2598 = vmatpush1.bf16.msra.mxu0 %v2353
        %2599 = vmatprep.subr.bf16.mxu0 %v2358
        %2600 = vmatpush1.bf16.msra.mxu0 %v2357
        %2601 = vmatprep.subr.bf16.mxu0 %v2362
        %2602 = vmatpush1.bf16.msra.mxu0 %v2361
        %2603 = vmatprep.subr.bf16.mxu0 %v2366
        %2604 = vmatpush1.bf16.msra.mxu0 %v2365
        %2605 = vmatprep.subr.bf16.mxu0 %v2370
        %2606 = vmatpush1.bf16.msra.mxu0 %v2369
        %2607 = vmatprep.subr.bf16.mxu0 %v2374
        %2608 = vmatpush1.bf16.msra.mxu0 %v2373
        %2609 = vmatprep.subr.bf16.mxu0 %v2378
        %2610 = vmatpush1.bf16.msra.mxu0 %v2377
        %2611 = vmatprep.subr.bf16.mxu0 %v2382
        %2612 = vmatpush1.bf16.msra.mxu0 %v2381
        %2613 = vmatprep.subr.bf16.mxu0 %v2386
        %2614 = vmatpush1.bf16.msra.mxu0 %v2385
        %2615 = vmatprep.subr.bf16.mxu0 %v2390
        %2616 = vmatpush1.bf16.msra.mxu0 %v2389
        %2617 = vmatprep.mubr.bf16.mxu0 %v1764
        %2618 = vmatmul.mubr.bf16.gmra.mrb[0].mxu0 %v1763
        %v2619 = vpop.f32.mrb[0].mxu0
        %v2620 = vadd.f32 %v1928, %v2619
        %v2621 = vpop.f32.mrb[0].mxu0
        %v2622 = vadd.f32 %v1932, %v2621
        %v2623 = vpop.f32.mrb[0].mxu0
        %v2624 = vadd.f32 %v1928, %v2623
        %v2625 = vpop.f32.mrb[0].mxu0
        %v2626 = vadd.f32 %v1932, %v2625
        %2627 = vmatprep.mubr.bf16.mxu0 %v1768
        %2628 = vmatmul.mubr.bf16.gmra.mrb[0].mxu0 %v1767
        %v2629 = vpop.f32.mrb[0].mxu0
        %v2630 = vadd.f32 %v1928, %v2629
        %v2631 = vpop.f32.mrb[0].mxu0
        %v2632 = vadd.f32 %v1932, %v2631
        %v2633 = vpop.f32.mrb[0].mxu0
        %v2634 = vadd.f32 %v1928, %v2633
        %v2635 = vpop.f32.mrb[0].mxu0
        %v2636 = vadd.f32 %v1932, %v2635
        %2637 = vmatprep.mubr.bf16.mxu0 %v1772
        %2638 = vmatmul.mubr.bf16.gmra.mrb[0].mxu0 %v1771
        %v2639 = vpop.f32.mrb[0].mxu0
        %v2640 = vadd.f32 %v1928, %v2639
        %v2641 = vpop.f32.mrb[0].mxu0
        %v2642 = vadd.f32 %v1932, %v2641
        %v2643 = vpop.f32.mrb[0].mxu0
        %v2644 = vadd.f32 %v1928, %v2643
        %v2645 = vpop.f32.mrb[0].mxu0
        %v2646 = vadd.f32 %v1932, %v2645
        %2647 = vmatprep.mubr.bf16.mxu0 %v1776
        %2648 = vmatmul.mubr.bf16.gmra.mrb[0].mxu0 %v1775
        %v2649 = vpop.f32.mrb[0].mxu0
        %v2650 = vadd.f32 %v1928, %v2649
        %v2651 = vpop.f32.mrb[0].mxu0
        %v2652 = vadd.f32 %v1932, %v2651
        %v2653 = vpop.f32.mrb[0].mxu0
        %v2654 = vadd.f32 %v1928, %v2653
        %v2655 = vpop.f32.mrb[0].mxu0
        %v2656 = vadd.f32 %v1932, %v2655
        %2657 = vmatprep.mubr.bf16.mxu0 %v1780
        %2658 = vmatmul.mubr.bf16.gmra.mrb[0].mxu0 %v1779
        %v2659 = vpop.f32.mrb[0].mxu0
        %v2660 = vadd.f32 %v1928, %v2659
        %v2661 = vpop.f32.mrb[0].mxu0
        %v2662 = vadd.f32 %v1932, %v2661
        %v2663 = vpop.f32.mrb[0].mxu0
        %v2664 = vadd.f32 %v1928, %v2663
        %v2665 = vpop.f32.mrb[0].mxu0
        %v2666 = vadd.f32 %v1932, %v2665
        %2667 = vmatprep.mubr.bf16.mxu0 %v1784
        %2668 = vmatmul.mubr.bf16.gmra.mrb[0].mxu0 %v1783
        %v2669 = vpop.f32.mrb[0].mxu0
        %v2670 = vadd.f32 %v1928, %v2669
        %v2671 = vpop.f32.mrb[0].mxu0
        %v2672 = vadd.f32 %v1932, %v2671
        %v2673 = vpop.f32.mrb[0].mxu0
        %v2674 = vadd.f32 %v1928, %v2673
        %v2675 = vpop.f32.mrb[0].mxu0
        %v2676 = vadd.f32 %v1932, %v2675
        %2677 = vmatprep.mubr.bf16.mxu0 %v1788
        %2678 = vmatmul.mubr.bf16.gmra.mrb[0].mxu0 %v1787
        %v2679 = vpop.f32.mrb[0].mxu0
        %v2680 = vadd.f32 %v1928, %v2679
        %v2681 = vpop.f32.mrb[0].mxu0
        %v2682 = vadd.f32 %v1932, %v2681
        %v2683 = vpop.f32.mrb[0].mxu0
        %v2684 = vadd.f32 %v1928, %v2683
        %v2685 = vpop.f32.mrb[0].mxu0
        %v2686 = vadd.f32 %v1932, %v2685
        %2687 = vmatprep.mubr.bf16.mxu0 %v1792
        %2688 = vmatmul.mubr.bf16.gmra.mrb[0].mxu0 %v1791
        %v2689 = vpop.f32.mrb[0].mxu0
        %v2690 = vadd.f32 %v1928, %v2689
        %v2691 = vpop.f32.mrb[0].mxu0
        %v2692 = vadd.f32 %v1932, %v2691
        %v2693 = vpop.f32.mrb[0].mxu0
        %v2694 = vadd.f32 %v1928, %v2693
        %v2695 = vpop.f32.mrb[0].mxu0
        %v2696 = vadd.f32 %v1932, %v2695
        %2697 = vdwg.mxu0
        %2698 = vmatprep.subr.bf16.mxu0 %v2394
        %2699 = vmatpush1.bf16.msra.mxu0 %v2393
        %2700 = vmatprep.subr.bf16.mxu0 %v2398
        %2701 = vmatpush1.bf16.msra.mxu0 %v2397
        %2702 = vmatprep.subr.bf16.mxu0 %v2402
        %2703 = vmatpush1.bf16.msra.mxu0 %v2401
        %2704 = vmatprep.subr.bf16.mxu0 %v2406
        %2705 = vmatpush1.bf16.msra.mxu0 %v2405
        %2706 = vmatprep.subr.bf16.mxu0 %v2410
        %2707 = vmatpush1.bf16.msra.mxu0 %v2409
        %2708 = vmatprep.subr.bf16.mxu0 %v2414
        %2709 = vmatpush1.bf16.msra.mxu0 %v2413
        %2710 = vmatprep.subr.bf16.mxu0 %v2418
        %2711 = vmatpush1.bf16.msra.mxu0 %v2417
        %2712 = vmatprep.subr.bf16.mxu0 %v2422
        %2713 = vmatpush1.bf16.msra.mxu0 %v2421
        %2714 = vmatprep.subr.bf16.mxu0 %v2426
        %2715 = vmatpush1.bf16.msra.mxu0 %v2425
        %2716 = vmatprep.subr.bf16.mxu0 %v2430
        %2717 = vmatpush1.bf16.msra.mxu0 %v2429
        %2718 = vmatprep.subr.bf16.mxu0 %v2434
        %2719 = vmatpush1.bf16.msra.mxu0 %v2433
        %2720 = vmatprep.subr.bf16.mxu0 %v2438
        %2721 = vmatpush1.bf16.msra.mxu0 %v2437
        %2722 = vmatprep.subr.bf16.mxu0 %v2442
        %2723 = vmatpush1.bf16.msra.mxu0 %v2441
        %2724 = vmatprep.subr.bf16.mxu0 %v2446
        %2725 = vmatpush1.bf16.msra.mxu0 %v2445
        %2726 = vmatprep.subr.bf16.mxu0 %v2450
        %2727 = vmatpush1.bf16.msra.mxu0 %v2449
        %2728 = vmatprep.subr.bf16.mxu0 %v2454
        %2729 = vmatpush1.bf16.msra.mxu0 %v2453
        %2730 = vmatprep.mubr.bf16.mxu0 %v1766
        %2731 = vmatmul.mubr.bf16.gmra.mrb[0].mxu0 %v1765
        %v2732 = vpop.f32.mrb[0].mxu0
        %v2733 = vadd.f32 %v2620, %v2732
        %v2734 = vpop.f32.mrb[0].mxu0
        %v2735 = vadd.f32 %v2622, %v2734
        %v2736 = vpop.f32.mrb[0].mxu0
        %v2737 = vadd.f32 %v2624, %v2736
        %v2738 = vpop.f32.mrb[0].mxu0
        %v2739 = vadd.f32 %v2626, %v2738
        %2740 = vmatprep.mubr.bf16.mxu0 %v1770
        %2741 = vmatmul.mubr.bf16.gmra.mrb[0].mxu0 %v1769
        %v2742 = vpop.f32.mrb[0].mxu0
        %v2743 = vadd.f32 %v2630, %v2742
        %v2744 = vpop.f32.mrb[0].mxu0
        %v2745 = vadd.f32 %v2632, %v2744
        %v2746 = vpop.f32.mrb[0].mxu0
        %v2747 = vadd.f32 %v2634, %v2746
        %v2748 = vpop.f32.mrb[0].mxu0
        %v2749 = vadd.f32 %v2636, %v2748
        %2750 = vmatprep.mubr.bf16.mxu0 %v1774
        %2751 = vmatmul.mubr.bf16.gmra.mrb[0].mxu0 %v1773
        %v2752 = vpop.f32.mrb[0].mxu0
        %v2753 = vadd.f32 %v2640, %v2752
        %v2754 = vpop.f32.mrb[0].mxu0
        %v2755 = vadd.f32 %v2642, %v2754
        %v2756 = vpop.f32.mrb[0].mxu0
        %v2757 = vadd.f32 %v2644, %v2756
        %v2758 = vpop.f32.mrb[0].mxu0
        %v2759 = vadd.f32 %v2646, %v2758
        %2760 = vmatprep.mubr.bf16.mxu0 %v1778
        %2761 = vmatmul.mubr.bf16.gmra.mrb[0].mxu0 %v1777
        %v2762 = vpop.f32.mrb[0].mxu0
        %v2763 = vadd.f32 %v2650, %v2762
        %v2764 = vpop.f32.mrb[0].mxu0
        %v2765 = vadd.f32 %v2652, %v2764
        %v2766 = vpop.f32.mrb[0].mxu0
        %v2767 = vadd.f32 %v2654, %v2766
        %v2768 = vpop.f32.mrb[0].mxu0
        %v2769 = vadd.f32 %v2656, %v2768
        %2770 = vmatprep.mubr.bf16.mxu0 %v1782
        %2771 = vmatmul.mubr.bf16.gmra.mrb[0].mxu0 %v1781
        %v2772 = vpop.f32.mrb[0].mxu0
        %v2773 = vadd.f32 %v2660, %v2772
        %v2774 = vpop.f32.mrb[0].mxu0
        %v2775 = vadd.f32 %v2662, %v2774
        %v2776 = vpop.f32.mrb[0].mxu0
        %v2777 = vadd.f32 %v2664, %v2776
        %v2778 = vpop.f32.mrb[0].mxu0
        %v2779 = vadd.f32 %v2666, %v2778
        %2780 = vmatprep.mubr.bf16.mxu0 %v1786
        %2781 = vmatmul.mubr.bf16.gmra.mrb[0].mxu0 %v1785
        %v2782 = vpop.f32.mrb[0].mxu0
        %v2783 = vadd.f32 %v2670, %v2782
        %v2784 = vpop.f32.mrb[0].mxu0
        %v2785 = vadd.f32 %v2672, %v2784
        %v2786 = vpop.f32.mrb[0].mxu0
        %v2787 = vadd.f32 %v2674, %v2786
        %v2788 = vpop.f32.mrb[0].mxu0
        %v2789 = vadd.f32 %v2676, %v2788
        %2790 = vmatprep.mubr.bf16.mxu0 %v1790
        %2791 = vmatmul.mubr.bf16.gmra.mrb[0].mxu0 %v1789
        %v2792 = vpop.f32.mrb[0].mxu0
        %v2793 = vadd.f32 %v2680, %v2792
        %v2794 = vpop.f32.mrb[0].mxu0
        %v2795 = vadd.f32 %v2682, %v2794
        %v2796 = vpop.f32.mrb[0].mxu0
        %v2797 = vadd.f32 %v2684, %v2796
        %v2798 = vpop.f32.mrb[0].mxu0
        %v2799 = vadd.f32 %v2686, %v2798
        %2800 = vmatprep.mubr.bf16.mxu0 %v1794
        %2801 = vmatmul.mubr.bf16.gmra.mrb[0].mxu0 %v1793
        %v2802 = vpop.f32.mrb[0].mxu0
        %v2803 = vadd.f32 %v2690, %v2802
        %v2804 = vpop.f32.mrb[0].mxu0
        %v2805 = vadd.f32 %v2692, %v2804
        %v2806 = vpop.f32.mrb[0].mxu0
        %v2807 = vadd.f32 %v2694, %v2806
        %v2808 = vpop.f32.mrb[0].mxu0
        %v2809 = vadd.f32 %v2696, %v2808
        %2810 = vdwg.mxu0
        %2811 = vmatprep.subr.bf16.mxu0 %v2332
        %2812 = vmatpush1.bf16.msra.mxu0 %v2331
        %2813 = vmatprep.subr.bf16.mxu0 %v2336
        %2814 = vmatpush1.bf16.msra.mxu0 %v2335
        %2815 = vmatprep.subr.bf16.mxu0 %v2340
        %2816 = vmatpush1.bf16.msra.mxu0 %v2339
        %2817 = vmatprep.subr.bf16.mxu0 %v2344
        %2818 = vmatpush1.bf16.msra.mxu0 %v2343
        %2819 = vmatprep.subr.bf16.mxu0 %v2348
        %2820 = vmatpush1.bf16.msra.mxu0 %v2347
        %2821 = vmatprep.subr.bf16.mxu0 %v2352
        %2822 = vmatpush1.bf16.msra.mxu0 %v2351
        %2823 = vmatprep.subr.bf16.mxu0 %v2356
        %2824 = vmatpush1.bf16.msra.mxu0 %v2355
        %2825 = vmatprep.subr.bf16.mxu0 %v2360
        %2826 = vmatpush1.bf16.msra.mxu0 %v2359
        %2827 = vmatprep.subr.bf16.mxu0 %v2364
        %2828 = vmatpush1.bf16.msra.mxu0 %v2363
        %2829 = vmatprep.subr.bf16.mxu0 %v2368
        %2830 = vmatpush1.bf16.msra.mxu0 %v2367
        %2831 = vmatprep.subr.bf16.mxu0 %v2372
        %2832 = vmatpush1.bf16.msra.mxu0 %v2371
        %2833 = vmatprep.subr.bf16.mxu0 %v2376
        %2834 = vmatpush1.bf16.msra.mxu0 %v2375
        %2835 = vmatprep.subr.bf16.mxu0 %v2380
        %2836 = vmatpush1.bf16.msra.mxu0 %v2379
        %2837 = vmatprep.subr.bf16.mxu0 %v2384
        %2838 = vmatpush1.bf16.msra.mxu0 %v2383
        %2839 = vmatprep.subr.bf16.mxu0 %v2388
        %2840 = vmatpush1.bf16.msra.mxu0 %v2387
        %2841 = vmatprep.subr.bf16.mxu0 %v2392
        %2842 = vmatpush1.bf16.msra.mxu0 %v2391
        %2843 = vmatprep.mubr.bf16.mxu0 %v1764
        %2844 = vmatmul.mubr.bf16.gmra.mrb[0].mxu0 %v1763
        %v2845 = vpop.f32.mrb[0].mxu0
        %v2846 = vadd.f32 %v1936, %v2845
        %v2847 = vpop.f32.mrb[0].mxu0
        %v2848 = vadd.f32 %v1940, %v2847
        %v2849 = vpop.f32.mrb[0].mxu0
        %v2850 = vadd.f32 %v1936, %v2849
        %v2851 = vpop.f32.mrb[0].mxu0
        %v2852 = vadd.f32 %v1940, %v2851
        %2853 = vmatprep.mubr.bf16.mxu0 %v1768
        %2854 = vmatmul.mubr.bf16.gmra.mrb[0].mxu0 %v1767
        %v2855 = vpop.f32.mrb[0].mxu0
        %v2856 = vadd.f32 %v1936, %v2855
        %v2857 = vpop.f32.mrb[0].mxu0
        %v2858 = vadd.f32 %v1940, %v2857
        %v2859 = vpop.f32.mrb[0].mxu0
        %v2860 = vadd.f32 %v1936, %v2859
        %v2861 = vpop.f32.mrb[0].mxu0
        %v2862 = vadd.f32 %v1940, %v2861
        %2863 = vmatprep.mubr.bf16.mxu0 %v1772
        %2864 = vmatmul.mubr.bf16.gmra.mrb[0].mxu0 %v1771
        %v2865 = vpop.f32.mrb[0].mxu0
        %v2866 = vadd.f32 %v1936, %v2865
        %v2867 = vpop.f32.mrb[0].mxu0
        %v2868 = vadd.f32 %v1940, %v2867
        %v2869 = vpop.f32.mrb[0].mxu0
        %v2870 = vadd.f32 %v1936, %v2869
        %v2871 = vpop.f32.mrb[0].mxu0
        %v2872 = vadd.f32 %v1940, %v2871
        %2873 = vmatprep.mubr.bf16.mxu0 %v1776
        %2874 = vmatmul.mubr.bf16.gmra.mrb[0].mxu0 %v1775
        %v2875 = vpop.f32.mrb[0].mxu0
        %v2876 = vadd.f32 %v1936, %v2875
        %v2877 = vpop.f32.mrb[0].mxu0
        %v2878 = vadd.f32 %v1940, %v2877
        %v2879 = vpop.f32.mrb[0].mxu0
        %v2880 = vadd.f32 %v1936, %v2879
        %v2881 = vpop.f32.mrb[0].mxu0
        %v2882 = vadd.f32 %v1940, %v2881
        %2883 = vmatprep.mubr.bf16.mxu0 %v1780
        %2884 = vmatmul.mubr.bf16.gmra.mrb[0].mxu0 %v1779
        %v2885 = vpop.f32.mrb[0].mxu0
        %v2886 = vadd.f32 %v1936, %v2885
        %v2887 = vpop.f32.mrb[0].mxu0
        %v2888 = vadd.f32 %v1940, %v2887
        %v2889 = vpop.f32.mrb[0].mxu0
        %v2890 = vadd.f32 %v1936, %v2889
        %v2891 = vpop.f32.mrb[0].mxu0
        %v2892 = vadd.f32 %v1940, %v2891
        %2893 = vmatprep.mubr.bf16.mxu0 %v1784
        %2894 = vmatmul.mubr.bf16.gmra.mrb[0].mxu0 %v1783
        %v2895 = vpop.f32.mrb[0].mxu0
        %v2896 = vadd.f32 %v1936, %v2895
        %v2897 = vpop.f32.mrb[0].mxu0
        %v2898 = vadd.f32 %v1940, %v2897
        %v2899 = vpop.f32.mrb[0].mxu0
        %v2900 = vadd.f32 %v1936, %v2899
        %v2901 = vpop.f32.mrb[0].mxu0
        %v2902 = vadd.f32 %v1940, %v2901
        %2903 = vmatprep.mubr.bf16.mxu0 %v1788
        %2904 = vmatmul.mubr.bf16.gmra.mrb[0].mxu0 %v1787
        %v2905 = vpop.f32.mrb[0].mxu0
        %v2906 = vadd.f32 %v1936, %v2905
        %v2907 = vpop.f32.mrb[0].mxu0
        %v2908 = vadd.f32 %v1940, %v2907
        %v2909 = vpop.f32.mrb[0].mxu0
        %v2910 = vadd.f32 %v1936, %v2909
        %v2911 = vpop.f32.mrb[0].mxu0
        %v2912 = vadd.f32 %v1940, %v2911
        %2913 = vmatprep.mubr.bf16.mxu0 %v1792
        %2914 = vmatmul.mubr.bf16.gmra.mrb[0].mxu0 %v1791
        %v2915 = vpop.f32.mrb[0].mxu0
        %v2916 = vadd.f32 %v1936, %v2915
        %v2917 = vpop.f32.mrb[0].mxu0
        %v2918 = vadd.f32 %v1940, %v2917
        %v2919 = vpop.f32.mrb[0].mxu0
        %v2920 = vadd.f32 %v1936, %v2919
        %v2921 = vpop.f32.mrb[0].mxu0
        %v2922 = vadd.f32 %v1940, %v2921
        %2923 = vdwg.mxu0
        %2924 = vmatprep.subr.bf16.mxu0 %v2396
        %2925 = vmatpush1.bf16.msra.mxu0 %v2395
        %2926 = vmatprep.subr.bf16.mxu0 %v2400
        %2927 = vmatpush1.bf16.msra.mxu0 %v2399
        %2928 = vmatprep.subr.bf16.mxu0 %v2404
        %2929 = vmatpush1.bf16.msra.mxu0 %v2403
        %2930 = vmatprep.subr.bf16.mxu0 %v2408
        %2931 = vmatpush1.bf16.msra.mxu0 %v2407
        %2932 = vmatprep.subr.bf16.mxu0 %v2412
        %2933 = vmatpush1.bf16.msra.mxu0 %v2411
        %2934 = vmatprep.subr.bf16.mxu0 %v2416
        %2935 = vmatpush1.bf16.msra.mxu0 %v2415
        %2936 = vmatprep.subr.bf16.mxu0 %v2420
        %2937 = vmatpush1.bf16.msra.mxu0 %v2419
        %2938 = vmatprep.subr.bf16.mxu0 %v2424
        %2939 = vmatpush1.bf16.msra.mxu0 %v2423
        %2940 = vmatprep.subr.bf16.mxu0 %v2428
        %2941 = vmatpush1.bf16.msra.mxu0 %v2427
        %2942 = vmatprep.subr.bf16.mxu0 %v2432
        %2943 = vmatpush1.bf16.msra.mxu0 %v2431
        %2944 = vmatprep.subr.bf16.mxu0 %v2436
        %2945 = vmatpush1.bf16.msra.mxu0 %v2435
        %2946 = vmatprep.subr.bf16.mxu0 %v2440
        %2947 = vmatpush1.bf16.msra.mxu0 %v2439
        %2948 = vmatprep.subr.bf16.mxu0 %v2444
        %2949 = vmatpush1.bf16.msra.mxu0 %v2443
        %2950 = vmatprep.subr.bf16.mxu0 %v2448
        %2951 = vmatpush1.bf16.msra.mxu0 %v2447
        %2952 = vmatprep.subr.bf16.mxu0 %v2452
        %2953 = vmatpush1.bf16.msra.mxu0 %v2451
        %2954 = vmatprep.subr.bf16.mxu0 %v2456
        %2955 = vmatpush1.bf16.msra.mxu0 %v2455
        %2956 = vmatprep.mubr.bf16.mxu0 %v1766
        %2957 = vmatmul.mubr.bf16.gmra.mrb[0].mxu0 %v1765
        %v2958 = vpop.f32.mrb[0].mxu0
        %v2959 = vadd.f32 %v2846, %v2958
        %v2960 = vpop.f32.mrb[0].mxu0
        %v2961 = vadd.f32 %v2848, %v2960
        %v2962 = vpop.f32.mrb[0].mxu0
        %v2963 = vadd.f32 %v2850, %v2962
        %v2964 = vpop.f32.mrb[0].mxu0
        %v2965 = vadd.f32 %v2852, %v2964
        %2966 = vmatprep.mubr.bf16.mxu0 %v1770
        %2967 = vmatmul.mubr.bf16.gmra.mrb[0].mxu0 %v1769
        %v2968 = vpop.f32.mrb[0].mxu0
        %v2969 = vadd.f32 %v2856, %v2968
        %v2970 = vpop.f32.mrb[0].mxu0
        %v2971 = vadd.f32 %v2858, %v2970
        %v2972 = vpop.f32.mrb[0].mxu0
        %v2973 = vadd.f32 %v2860, %v2972
        %v2974 = vpop.f32.mrb[0].mxu0
        %v2975 = vadd.f32 %v2862, %v2974
        %2976 = vmatprep.mubr.bf16.mxu0 %v1774
        %2977 = vmatmul.mubr.bf16.gmra.mrb[0].mxu0 %v1773
        %v2978 = vpop.f32.mrb[0].mxu0
        %v2979 = vadd.f32 %v2866, %v2978
        %v2980 = vpop.f32.mrb[0].mxu0
        %v2981 = vadd.f32 %v2868, %v2980
        %v2982 = vpop.f32.mrb[0].mxu0
        %v2983 = vadd.f32 %v2870, %v2982
        %v2984 = vpop.f32.mrb[0].mxu0
        %v2985 = vadd.f32 %v2872, %v2984
        %2986 = vmatprep.mubr.bf16.mxu0 %v1778
        %2987 = vmatmul.mubr.bf16.gmra.mrb[0].mxu0 %v1777
        %v2988 = vpop.f32.mrb[0].mxu0
        %v2989 = vadd.f32 %v2876, %v2988
        %v2990 = vpop.f32.mrb[0].mxu0
        %v2991 = vadd.f32 %v2878, %v2990
        %v2992 = vpop.f32.mrb[0].mxu0
        %v2993 = vadd.f32 %v2880, %v2992
        %v2994 = vpop.f32.mrb[0].mxu0
        %v2995 = vadd.f32 %v2882, %v2994
        %2996 = vmatprep.mubr.bf16.mxu0 %v1782
        %2997 = vmatmul.mubr.bf16.gmra.mrb[0].mxu0 %v1781
        %v2998 = vpop.f32.mrb[0].mxu0
        %v2999 = vadd.f32 %v2886, %v2998
        %v3000 = vpop.f32.mrb[0].mxu0
        %v3001 = vadd.f32 %v2888, %v3000
        %v3002 = vpop.f32.mrb[0].mxu0
        %v3003 = vadd.f32 %v2890, %v3002
        %v3004 = vpop.f32.mrb[0].mxu0
        %v3005 = vadd.f32 %v2892, %v3004
        %3006 = vmatprep.mubr.bf16.mxu0 %v1786
        %3007 = vmatmul.mubr.bf16.gmra.mrb[0].mxu0 %v1785
        %v3008 = vpop.f32.mrb[0].mxu0
        %v3009 = vadd.f32 %v2896, %v3008
        %v3010 = vpop.f32.mrb[0].mxu0
        %v3011 = vadd.f32 %v2898, %v3010
        %v3012 = vpop.f32.mrb[0].mxu0
        %v3013 = vadd.f32 %v2900, %v3012
        %v3014 = vpop.f32.mrb[0].mxu0
        %v3015 = vadd.f32 %v2902, %v3014
        %3016 = vmatprep.mubr.bf16.mxu0 %v1790
        %3017 = vmatmul.mubr.bf16.gmra.mrb[0].mxu0 %v1789
        %v3018 = vpop.f32.mrb[0].mxu0
        %v3019 = vadd.f32 %v2906, %v3018
        %v3020 = vpop.f32.mrb[0].mxu0
        %v3021 = vadd.f32 %v2908, %v3020
        %v3022 = vpop.f32.mrb[0].mxu0
        %v3023 = vadd.f32 %v2910, %v3022
        %v3024 = vpop.f32.mrb[0].mxu0
        %v3025 = vadd.f32 %v2912, %v3024
        %3026 = vmatprep.mubr.bf16.mxu0 %v1794
        %3027 = vmatmul.mubr.bf16.gmra.mrb[0].mxu0 %v1793
        %v3028 = vpop.f32.mrb[0].mxu0
        %v3029 = vadd.f32 %v2916, %v3028
        %v3030 = vpop.f32.mrb[0].mxu0
        %v3031 = vadd.f32 %v2918, %v3030
        %v3032 = vpop.f32.mrb[0].mxu0
        %v3033 = vadd.f32 %v2920, %v3032
        %v3034 = vpop.f32.mrb[0].mxu0
        %v3035 = vadd.f32 %v2922, %v3034
        %3036 = vdwg.mxu0
        %v3037 = vmax.f32 %v2733, 0.0
        %v3038 = vmax.f32 %v2735, 0.0
        %v3039 = vmax.f32 %v2959, 0.0
        %v3040 = vmax.f32 %v2961, 0.0
        %v3041 = vmax.f32 %v2737, 0.0
        %v3042 = vmax.f32 %v2739, 0.0
        %v3043 = vmax.f32 %v2963, 0.0
        %v3044 = vmax.f32 %v2965, 0.0
        %v3045 = vmax.f32 %v2743, 0.0
        %v3046 = vmax.f32 %v2745, 0.0
        %v3047 = vmax.f32 %v2969, 0.0
        %v3048 = vmax.f32 %v2971, 0.0
        %v3049 = vmax.f32 %v2747, 0.0
        %v3050 = vmax.f32 %v2749, 0.0
        %v3051 = vmax.f32 %v2973, 0.0
        %v3052 = vmax.f32 %v2975, 0.0
        %v3053 = vmax.f32 %v2753, 0.0
        %v3054 = vmax.f32 %v2755, 0.0
        %v3055 = vmax.f32 %v2979, 0.0
        %v3056 = vmax.f32 %v2981, 0.0
        %v3057 = vmax.f32 %v2757, 0.0
        %v3058 = vmax.f32 %v2759, 0.0
        %v3059 = vmax.f32 %v2983, 0.0
        %v3060 = vmax.f32 %v2985, 0.0
        %v3061 = vmax.f32 %v2763, 0.0
        %v3062 = vmax.f32 %v2765, 0.0
        %v3063 = vmax.f32 %v2989, 0.0
        %v3064 = vmax.f32 %v2991, 0.0
        %v3065 = vmax.f32 %v2767, 0.0
        %v3066 = vmax.f32 %v2769, 0.0
        %v3067 = vmax.f32 %v2993, 0.0
        %v3068 = vmax.f32 %v2995, 0.0
        %v3069 = vmax.f32 %v2773, 0.0
        %v3070 = vmax.f32 %v2775, 0.0
        %v3071 = vmax.f32 %v2999, 0.0
        %v3072 = vmax.f32 %v3001, 0.0
        %v3073 = vmax.f32 %v2777, 0.0
        %v3074 = vmax.f32 %v2779, 0.0
        %v3075 = vmax.f32 %v3003, 0.0
        %v3076 = vmax.f32 %v3005, 0.0
        %v3077 = vmax.f32 %v2783, 0.0
        %v3078 = vmax.f32 %v2785, 0.0
        %v3079 = vmax.f32 %v3009, 0.0
        %v3080 = vmax.f32 %v3011, 0.0
        %v3081 = vmax.f32 %v2787, 0.0
        %v3082 = vmax.f32 %v2789, 0.0
        %v3083 = vmax.f32 %v3013, 0.0
        %v3084 = vmax.f32 %v3015, 0.0
        %v3085 = vmax.f32 %v2793, 0.0
        %v3086 = vmax.f32 %v2795, 0.0
        %v3087 = vmax.f32 %v3019, 0.0
        %v3088 = vmax.f32 %v3021, 0.0
        %v3089 = vmax.f32 %v2797, 0.0
        %v3090 = vmax.f32 %v2799, 0.0
        %v3091 = vmax.f32 %v3023, 0.0
        %v3092 = vmax.f32 %v3025, 0.0
        %v3093 = vmax.f32 %v2803, 0.0
        %v3094 = vmax.f32 %v2805, 0.0
        %v3095 = vmax.f32 %v3029, 0.0
        %v3096 = vmax.f32 %v3031, 0.0
        %v3097 = vmax.f32 %v2807, 0.0
        %v3098 = vmax.f32 %v2809, 0.0
        %v3099 = vmax.f32 %v3033, 0.0
        %v3100 = vmax.f32 %v3035, 0.0
        %v3101 = vpack.c.bf16 %v3041, %v3037
        %v3102 = vpack.c.bf16 %v3042, %v3038
        %v3103 = vpack.c.bf16 %v3043, %v3039
        %v3104 = vpack.c.bf16 %v3044, %v3040
        %v3105 = vpack.c.bf16 %v3049, %v3045
        %v3106 = vpack.c.bf16 %v3050, %v3046
        %v3107 = vpack.c.bf16 %v3051, %v3047
        %v3108 = vpack.c.bf16 %v3052, %v3048
        %v3109 = vpack.c.bf16 %v3057, %v3053
        %v3110 = vpack.c.bf16 %v3058, %v3054
        %v3111 = vpack.c.bf16 %v3059, %v3055
        %v3112 = vpack.c.bf16 %v3060, %v3056
        %v3113 = vpack.c.bf16 %v3065, %v3061
        %v3114 = vpack.c.bf16 %v3066, %v3062
        %v3115 = vpack.c.bf16 %v3067, %v3063
        %v3116 = vpack.c.bf16 %v3068, %v3064
        %v3117 = vpack.c.bf16 %v3073, %v3069
        %v3118 = vpack.c.bf16 %v3074, %v3070
        %v3119 = vpack.c.bf16 %v3075, %v3071
        %v3120 = vpack.c.bf16 %v3076, %v3072
        %v3121 = vpack.c.bf16 %v3081, %v3077
        %v3122 = vpack.c.bf16 %v3082, %v3078
        %v3123 = vpack.c.bf16 %v3083, %v3079
        %v3124 = vpack.c.bf16 %v3084, %v3080
        %v3125 = vpack.c.bf16 %v3089, %v3085
        %v3126 = vpack.c.bf16 %v3090, %v3086
        %v3127 = vpack.c.bf16 %v3091, %v3087
        %v3128 = vpack.c.bf16 %v3092, %v3088
        %v3129 = vpack.c.bf16 %v3097, %v3093
        %v3130 = vpack.c.bf16 %v3098, %v3094
        %v3131 = vpack.c.bf16 %v3099, %v3095
        %v3132 = vpack.c.bf16 %v3100, %v3096
        %v3133 = vld [vmem:[#allocation8] sm:$0xff]
        %v3134 = vld [vmem:[#allocation8 + $0x8] sm:$0xff]
        %v3135 = vld [vmem:[#allocation8 + $0x10] sm:$0xff]
        %v3136 = vld [vmem:[#allocation8 + $0x18] sm:$0xff]
        %v3137 = vld [vmem:[#allocation8 + $0x20] sm:$0xff]
        %v3138 = vld [vmem:[#allocation8 + $0x28] sm:$0xff]
        %v3139 = vld [vmem:[#allocation8 + $0x30] sm:$0xff]
        %v3140 = vld [vmem:[#allocation8 + $0x38] sm:$0xff]
        %v3141 = vld [vmem:[#allocation8 + $0x40] sm:$0xff]
        %v3142 = vld [vmem:[#allocation8 + $0x48] sm:$0xff]
        %v3143 = vld [vmem:[#allocation8 + $0x50] sm:$0xff]
        %v3144 = vld [vmem:[#allocation8 + $0x58] sm:$0xff]
        %v3145 = vld [vmem:[#allocation8 + $0x60] sm:$0xff]
        %v3146 = vld [vmem:[#allocation8 + $0x68] sm:$0xff]
        %v3147 = vld [vmem:[#allocation8 + $0x70] sm:$0xff]
        %v3148 = vld [vmem:[#allocation8 + $0x78] sm:$0xff]
        %v3149 = vld [vmem:[#allocation8 + $0x80] sm:$0xff]
        %v3150 = vld [vmem:[#allocation8 + $0x88] sm:$0xff]
        %v3151 = vld [vmem:[#allocation8 + $0x90] sm:$0xff]
        %v3152 = vld [vmem:[#allocation8 + $0x98] sm:$0xff]
        %v3153 = vld [vmem:[#allocation8 + $0xa0] sm:$0xff]
        %v3154 = vld [vmem:[#allocation8 + $0xa8] sm:$0xff]
        %v3155 = vld [vmem:[#allocation8 + $0xb0] sm:$0xff]
        %v3156 = vld [vmem:[#allocation8 + $0xb8] sm:$0xff]
        %v3157 = vld [vmem:[#allocation8 + $0xc0] sm:$0xff]
        %v3158 = vld [vmem:[#allocation8 + $0xc8] sm:$0xff]
        %v3159 = vld [vmem:[#allocation8 + $0xd0] sm:$0xff]
        %v3160 = vld [vmem:[#allocation8 + $0xd8] sm:$0xff]
        %v3161 = vld [vmem:[#allocation8 + $0xe0] sm:$0xff]
        %v3162 = vld [vmem:[#allocation8 + $0xe8] sm:$0xff]
        %v3163 = vld [vmem:[#allocation8 + $0xf0] sm:$0xff]
        %v3164 = vld [vmem:[#allocation8 + $0xf8] sm:$0xff]
        %v3165 = vld [vmem:[#allocation8 + $0x100] sm:$0xff]
        %v3166 = vld [vmem:[#allocation8 + $0x108] sm:$0xff]
        %v3167 = vld [vmem:[#allocation8 + $0x110] sm:$0xff]
        %v3168 = vld [vmem:[#allocation8 + $0x118] sm:$0xff]
        %v3169 = vld [vmem:[#allocation8 + $0x120] sm:$0xff]
        %v3170 = vld [vmem:[#allocation8 + $0x128] sm:$0xff]
        %v3171 = vld [vmem:[#allocation8 + $0x130] sm:$0xff]
        %v3172 = vld [vmem:[#allocation8 + $0x138] sm:$0xff]
        %v3173 = vld [vmem:[#allocation8 + $0x140] sm:$0xff]
        %v3174 = vld [vmem:[#allocation8 + $0x148] sm:$0xff]
        %v3175 = vld [vmem:[#allocation8 + $0x150] sm:$0xff]
        %v3176 = vld [vmem:[#allocation8 + $0x158] sm:$0xff]
        %v3177 = vld [vmem:[#allocation8 + $0x160] sm:$0xff]
        %v3178 = vld [vmem:[#allocation8 + $0x168] sm:$0xff]
        %v3179 = vld [vmem:[#allocation8 + $0x170] sm:$0xff]
        %v3180 = vld [vmem:[#allocation8 + $0x178] sm:$0xff]
        %v3181 = vld [vmem:[#allocation8 + $0x180] sm:$0xff]
        %v3182 = vld [vmem:[#allocation8 + $0x188] sm:$0xff]
        %v3183 = vld [vmem:[#allocation8 + $0x190] sm:$0xff]
        %v3184 = vld [vmem:[#allocation8 + $0x198] sm:$0xff]
        %v3185 = vld [vmem:[#allocation8 + $0x1a0] sm:$0xff]
        %v3186 = vld [vmem:[#allocation8 + $0x1a8] sm:$0xff]
        %v3187 = vld [vmem:[#allocation8 + $0x1b0] sm:$0xff]
        %v3188 = vld [vmem:[#allocation8 + $0x1b8] sm:$0xff]
        %v3189 = vld [vmem:[#allocation8 + $0x1c0] sm:$0xff]
        %v3190 = vld [vmem:[#allocation8 + $0x1c8] sm:$0xff]
        %v3191 = vld [vmem:[#allocation8 + $0x1d0] sm:$0xff]
        %v3192 = vld [vmem:[#allocation8 + $0x1d8] sm:$0xff]
        %v3193 = vld [vmem:[#allocation8 + $0x1e0] sm:$0xff]
        %v3194 = vld [vmem:[#allocation8 + $0x1e8] sm:$0xff]
        %v3195 = vld [vmem:[#allocation8 + $0x1f0] sm:$0xff]
        %v3196 = vld [vmem:[#allocation8 + $0x1f8] sm:$0xff]
        %v3197 = vld [vmem:[%s6] sm:$0x3]
        %v3199 = vlaneseq
        %v3200 = vshrl.u32 %v3199, 7
        %v3201 = vsub.s32 0, %v3200
        %v3202 = vrot.slane %v3197, %v3201
        %v3203 = vlaneseq
        %v3204 = vshrl.u32 %v3203, 7
        %v3205 = vsub.s32 1, %v3204
        %v3206 = vrot.slane %v3197, %v3205
        %v3273 = vunpack.c.l.b16 %v3133
        %v3274 = vunpack.c.h.b16 %v3133
        %v3275 = vunpack.c.l.b16 %v3134
        %v3276 = vunpack.c.h.b16 %v3134
        %v3277 = vunpack.c.l.b16 %v3135
        %v3278 = vunpack.c.h.b16 %v3135
        %v3279 = vunpack.c.l.b16 %v3136
        %v3280 = vunpack.c.h.b16 %v3136
        %v3281 = vunpack.c.l.b16 %v3137
        %v3282 = vunpack.c.h.b16 %v3137
        %v3283 = vunpack.c.l.b16 %v3138
        %v3284 = vunpack.c.h.b16 %v3138
        %v3285 = vunpack.c.l.b16 %v3139
        %v3286 = vunpack.c.h.b16 %v3139
        %v3287 = vunpack.c.l.b16 %v3140
        %v3288 = vunpack.c.h.b16 %v3140
        %v3289 = vunpack.c.l.b16 %v3141
        %v3290 = vunpack.c.h.b16 %v3141
        %v3291 = vunpack.c.l.b16 %v3142
        %v3292 = vunpack.c.h.b16 %v3142
        %v3293 = vunpack.c.l.b16 %v3143
        %v3294 = vunpack.c.h.b16 %v3143
        %v3295 = vunpack.c.l.b16 %v3144
        %v3296 = vunpack.c.h.b16 %v3144
        %v3297 = vunpack.c.l.b16 %v3145
        %v3298 = vunpack.c.h.b16 %v3145
        %v3299 = vunpack.c.l.b16 %v3146
        %v3300 = vunpack.c.h.b16 %v3146
        %v3301 = vunpack.c.l.b16 %v3147
        %v3302 = vunpack.c.h.b16 %v3147
        %v3303 = vunpack.c.l.b16 %v3148
        %v3304 = vunpack.c.h.b16 %v3148
        %v3305 = vunpack.c.l.b16 %v3149
        %v3306 = vunpack.c.h.b16 %v3149
        %v3307 = vunpack.c.l.b16 %v3150
        %v3308 = vunpack.c.h.b16 %v3150
        %v3309 = vunpack.c.l.b16 %v3151
        %v3310 = vunpack.c.h.b16 %v3151
        %v3311 = vunpack.c.l.b16 %v3152
        %v3312 = vunpack.c.h.b16 %v3152
        %v3313 = vunpack.c.l.b16 %v3153
        %v3314 = vunpack.c.h.b16 %v3153
        %v3315 = vunpack.c.l.b16 %v3154
        %v3316 = vunpack.c.h.b16 %v3154
        %v3317 = vunpack.c.l.b16 %v3155
        %v3318 = vunpack.c.h.b16 %v3155
        %v3319 = vunpack.c.l.b16 %v3156
        %v3320 = vunpack.c.h.b16 %v3156
        %v3321 = vunpack.c.l.b16 %v3157
        %v3322 = vunpack.c.h.b16 %v3157
        %v3323 = vunpack.c.l.b16 %v3158
        %v3324 = vunpack.c.h.b16 %v3158
        %v3325 = vunpack.c.l.b16 %v3159
        %v3326 = vunpack.c.h.b16 %v3159
        %v3327 = vunpack.c.l.b16 %v3160
        %v3328 = vunpack.c.h.b16 %v3160
        %v3329 = vunpack.c.l.b16 %v3161
        %v3330 = vunpack.c.h.b16 %v3161
        %v3331 = vunpack.c.l.b16 %v3162
        %v3332 = vunpack.c.h.b16 %v3162
        %v3333 = vunpack.c.l.b16 %v3163
        %v3334 = vunpack.c.h.b16 %v3163
        %v3335 = vunpack.c.l.b16 %v3164
        %v3336 = vunpack.c.h.b16 %v3164
        %v3337 = vunpack.c.l.b16 %v3165
        %v3338 = vunpack.c.h.b16 %v3165
        %v3339 = vunpack.c.l.b16 %v3166
        %v3340 = vunpack.c.h.b16 %v3166
        %v3341 = vunpack.c.l.b16 %v3167
        %v3342 = vunpack.c.h.b16 %v3167
        %v3343 = vunpack.c.l.b16 %v3168
        %v3344 = vunpack.c.h.b16 %v3168
        %v3345 = vunpack.c.l.b16 %v3169
        %v3346 = vunpack.c.h.b16 %v3169
        %v3347 = vunpack.c.l.b16 %v3170
        %v3348 = vunpack.c.h.b16 %v3170
        %v3349 = vunpack.c.l.b16 %v3171
        %v3350 = vunpack.c.h.b16 %v3171
        %v3351 = vunpack.c.l.b16 %v3172
        %v3352 = vunpack.c.h.b16 %v3172
        %v3353 = vunpack.c.l.b16 %v3173
        %v3354 = vunpack.c.h.b16 %v3173
        %v3355 = vunpack.c.l.b16 %v3174
        %v3356 = vunpack.c.h.b16 %v3174
        %v3357 = vunpack.c.l.b16 %v3175
        %v3358 = vunpack.c.h.b16 %v3175
        %v3359 = vunpack.c.l.b16 %v3176
        %v3360 = vunpack.c.h.b16 %v3176
        %v3361 = vunpack.c.l.b16 %v3177
        %v3362 = vunpack.c.h.b16 %v3177
        %v3363 = vunpack.c.l.b16 %v3178
        %v3364 = vunpack.c.h.b16 %v3178
        %v3365 = vunpack.c.l.b16 %v3179
        %v3366 = vunpack.c.h.b16 %v3179
        %v3367 = vunpack.c.l.b16 %v3180
        %v3368 = vunpack.c.h.b16 %v3180
        %v3369 = vunpack.c.l.b16 %v3181
        %v3370 = vunpack.c.h.b16 %v3181
        %v3371 = vunpack.c.l.b16 %v3182
        %v3372 = vunpack.c.h.b16 %v3182
        %v3373 = vunpack.c.l.b16 %v3183
        %v3374 = vunpack.c.h.b16 %v3183
        %v3375 = vunpack.c.l.b16 %v3184
        %v3376 = vunpack.c.h.b16 %v3184
        %v3377 = vunpack.c.l.b16 %v3185
        %v3378 = vunpack.c.h.b16 %v3185
        %v3379 = vunpack.c.l.b16 %v3186
        %v3380 = vunpack.c.h.b16 %v3186
        %v3381 = vunpack.c.l.b16 %v3187
        %v3382 = vunpack.c.h.b16 %v3187
        %v3383 = vunpack.c.l.b16 %v3188
        %v3384 = vunpack.c.h.b16 %v3188
        %v3385 = vunpack.c.l.b16 %v3189
        %v3386 = vunpack.c.h.b16 %v3189
        %v3387 = vunpack.c.l.b16 %v3190
        %v3388 = vunpack.c.h.b16 %v3190
        %v3389 = vunpack.c.l.b16 %v3191
        %v3390 = vunpack.c.h.b16 %v3191
        %v3391 = vunpack.c.l.b16 %v3192
        %v3392 = vunpack.c.h.b16 %v3192
        %v3393 = vunpack.c.l.b16 %v3193
        %v3394 = vunpack.c.h.b16 %v3193
        %v3395 = vunpack.c.l.b16 %v3194
        %v3396 = vunpack.c.h.b16 %v3194
        %v3397 = vunpack.c.l.b16 %v3195
        %v3398 = vunpack.c.h.b16 %v3195
        %v3399 = vunpack.c.l.b16 %v3196
        %v3400 = vunpack.c.h.b16 %v3196
        %v3401 = vpack.c.b16 %v3275, %v3273
        %v3402 = vpack.c.b16 %v3276, %v3274
        %v3403 = vpack.c.b16 %v3279, %v3277
        %v3404 = vpack.c.b16 %v3280, %v3278
        %v3405 = vpack.c.b16 %v3283, %v3281
        %v3406 = vpack.c.b16 %v3284, %v3282
        %v3407 = vpack.c.b16 %v3287, %v3285
        %v3408 = vpack.c.b16 %v3288, %v3286
        %v3409 = vpack.c.b16 %v3291, %v3289
        %v3410 = vpack.c.b16 %v3292, %v3290
        %v3411 = vpack.c.b16 %v3295, %v3293
        %v3412 = vpack.c.b16 %v3296, %v3294
        %v3413 = vpack.c.b16 %v3299, %v3297
        %v3414 = vpack.c.b16 %v3300, %v3298
        %v3415 = vpack.c.b16 %v3303, %v3301
        %v3416 = vpack.c.b16 %v3304, %v3302
        %v3417 = vpack.c.b16 %v3307, %v3305
        %v3418 = vpack.c.b16 %v3308, %v3306
        %v3419 = vpack.c.b16 %v3311, %v3309
        %v3420 = vpack.c.b16 %v3312, %v3310
        %v3421 = vpack.c.b16 %v3315, %v3313
        %v3422 = vpack.c.b16 %v3316, %v3314
        %v3423 = vpack.c.b16 %v3319, %v3317
        %v3424 = vpack.c.b16 %v3320, %v3318
        %v3425 = vpack.c.b16 %v3323, %v3321
        %v3426 = vpack.c.b16 %v3324, %v3322
        %v3427 = vpack.c.b16 %v3327, %v3325
        %v3428 = vpack.c.b16 %v3328, %v3326
        %v3429 = vpack.c.b16 %v3331, %v3329
        %v3430 = vpack.c.b16 %v3332, %v3330
        %v3431 = vpack.c.b16 %v3335, %v3333
        %v3432 = vpack.c.b16 %v3336, %v3334
        %v3433 = vpack.c.b16 %v3339, %v3337
        %v3434 = vpack.c.b16 %v3340, %v3338
        %v3435 = vpack.c.b16 %v3343, %v3341
        %v3436 = vpack.c.b16 %v3344, %v3342
        %v3437 = vpack.c.b16 %v3347, %v3345
        %v3438 = vpack.c.b16 %v3348, %v3346
        %v3439 = vpack.c.b16 %v3351, %v3349
        %v3440 = vpack.c.b16 %v3352, %v3350
        %v3441 = vpack.c.b16 %v3355, %v3353
        %v3442 = vpack.c.b16 %v3356, %v3354
        %v3443 = vpack.c.b16 %v3359, %v3357
        %v3444 = vpack.c.b16 %v3360, %v3358
        %v3445 = vpack.c.b16 %v3363, %v3361
        %v3446 = vpack.c.b16 %v3364, %v3362
        %v3447 = vpack.c.b16 %v3367, %v3365
        %v3448 = vpack.c.b16 %v3368, %v3366
        %v3449 = vpack.c.b16 %v3371, %v3369
        %v3450 = vpack.c.b16 %v3372, %v3370
        %v3451 = vpack.c.b16 %v3375, %v3373
        %v3452 = vpack.c.b16 %v3376, %v3374
        %v3453 = vpack.c.b16 %v3379, %v3377
        %v3454 = vpack.c.b16 %v3380, %v3378
        %v3455 = vpack.c.b16 %v3383, %v3381
        %v3456 = vpack.c.b16 %v3384, %v3382
        %v3457 = vpack.c.b16 %v3387, %v3385
        %v3458 = vpack.c.b16 %v3388, %v3386
        %v3459 = vpack.c.b16 %v3391, %v3389
        %v3460 = vpack.c.b16 %v3392, %v3390
        %v3461 = vpack.c.b16 %v3395, %v3393
        %v3462 = vpack.c.b16 %v3396, %v3394
        %v3463 = vpack.c.b16 %v3399, %v3397
        %v3464 = vpack.c.b16 %v3400, %v3398
        %3529 = vmatprep.subr.bf16.mxu0 %v3402
        %3530 = vmatpush1.bf16.msra.mxu0 %v3401
        %3531 = vmatprep.subr.bf16.mxu0 %v3404
        %3532 = vmatpush1.bf16.msra.mxu0 %v3403
        %3533 = vmatprep.subr.bf16.mxu0 %v3406
        %3534 = vmatpush1.bf16.msra.mxu0 %v3405
        %3535 = vmatprep.subr.bf16.mxu0 %v3408
        %3536 = vmatpush1.bf16.msra.mxu0 %v3407
        %3537 = vmatprep.subr.bf16.mxu0 %v3410
        %3538 = vmatpush1.bf16.msra.mxu0 %v3409
        %3539 = vmatprep.subr.bf16.mxu0 %v3412
        %3540 = vmatpush1.bf16.msra.mxu0 %v3411
        %3541 = vmatprep.subr.bf16.mxu0 %v3414
        %3542 = vmatpush1.bf16.msra.mxu0 %v3413
        %3543 = vmatprep.subr.bf16.mxu0 %v3416
        %3544 = vmatpush1.bf16.msra.mxu0 %v3415
        %3545 = vmatprep.subr.bf16.mxu0 %v3418
        %3546 = vmatpush1.bf16.msra.mxu0 %v3417
        %3547 = vmatprep.subr.bf16.mxu0 %v3420
        %3548 = vmatpush1.bf16.msra.mxu0 %v3419
        %3549 = vmatprep.subr.bf16.mxu0 %v3422
        %3550 = vmatpush1.bf16.msra.mxu0 %v3421
        %3551 = vmatprep.subr.bf16.mxu0 %v3424
        %3552 = vmatpush1.bf16.msra.mxu0 %v3423
        %3553 = vmatprep.subr.bf16.mxu0 %v3426
        %3554 = vmatpush1.bf16.msra.mxu0 %v3425
        %3555 = vmatprep.subr.bf16.mxu0 %v3428
        %3556 = vmatpush1.bf16.msra.mxu0 %v3427
        %3557 = vmatprep.subr.bf16.mxu0 %v3430
        %3558 = vmatpush1.bf16.msra.mxu0 %v3429
        %3559 = vmatprep.subr.bf16.mxu0 %v3432
        %3560 = vmatpush1.bf16.msra.mxu0 %v3431
        %3561 = vmatprep.mubr.bf16.mxu0 %v3102
        %3562 = vmatmul.mubr.bf16.gmra.mrb[0].mxu0 %v3101
        %v3563 = vpop.f32.mrb[0].mxu0
        %v3564 = vadd.f32 %v3202, %v3563
        %v3565 = vpop.f32.mrb[0].mxu0
        %v3566 = vadd.f32 %v3206, %v3565
        %v3567 = vpop.f32.mrb[0].mxu0
        %v3568 = vadd.f32 %v3202, %v3567
        %v3569 = vpop.f32.mrb[0].mxu0
        %v3570 = vadd.f32 %v3206, %v3569
        %3571 = vmatprep.mubr.bf16.mxu0 %v3106
        %3572 = vmatmul.mubr.bf16.gmra.mrb[0].mxu0 %v3105
        %v3573 = vpop.f32.mrb[0].mxu0
        %v3574 = vadd.f32 %v3202, %v3573
        %v3575 = vpop.f32.mrb[0].mxu0
        %v3576 = vadd.f32 %v3206, %v3575
        %v3577 = vpop.f32.mrb[0].mxu0
        %v3578 = vadd.f32 %v3202, %v3577
        %v3579 = vpop.f32.mrb[0].mxu0
        %v3580 = vadd.f32 %v3206, %v3579
        %3581 = vmatprep.mubr.bf16.mxu0 %v3110
        %3582 = vmatmul.mubr.bf16.gmra.mrb[0].mxu0 %v3109
        %v3583 = vpop.f32.mrb[0].mxu0
        %v3584 = vadd.f32 %v3202, %v3583
        %v3585 = vpop.f32.mrb[0].mxu0
        %v3586 = vadd.f32 %v3206, %v3585
        %v3587 = vpop.f32.mrb[0].mxu0
        %v3588 = vadd.f32 %v3202, %v3587
        %v3589 = vpop.f32.mrb[0].mxu0
        %v3590 = vadd.f32 %v3206, %v3589
        %3591 = vmatprep.mubr.bf16.mxu0 %v3114
        %3592 = vmatmul.mubr.bf16.gmra.mrb[0].mxu0 %v3113
        %v3593 = vpop.f32.mrb[0].mxu0
        %v3594 = vadd.f32 %v3202, %v3593
        %v3595 = vpop.f32.mrb[0].mxu0
        %v3596 = vadd.f32 %v3206, %v3595
        %v3597 = vpop.f32.mrb[0].mxu0
        %v3598 = vadd.f32 %v3202, %v3597
        %v3599 = vpop.f32.mrb[0].mxu0
        %v3600 = vadd.f32 %v3206, %v3599
        %3601 = vmatprep.mubr.bf16.mxu0 %v3118
        %3602 = vmatmul.mubr.bf16.gmra.mrb[0].mxu0 %v3117
        %v3603 = vpop.f32.mrb[0].mxu0
        %v3604 = vadd.f32 %v3202, %v3603
        %v3605 = vpop.f32.mrb[0].mxu0
        %v3606 = vadd.f32 %v3206, %v3605
        %v3607 = vpop.f32.mrb[0].mxu0
        %v3608 = vadd.f32 %v3202, %v3607
        %v3609 = vpop.f32.mrb[0].mxu0
        %v3610 = vadd.f32 %v3206, %v3609
        %3611 = vmatprep.mubr.bf16.mxu0 %v3122
        %3612 = vmatmul.mubr.bf16.gmra.mrb[0].mxu0 %v3121
        %v3613 = vpop.f32.mrb[0].mxu0
        %v3614 = vadd.f32 %v3202, %v3613
        %v3615 = vpop.f32.mrb[0].mxu0
        %v3616 = vadd.f32 %v3206, %v3615
        %v3617 = vpop.f32.mrb[0].mxu0
        %v3618 = vadd.f32 %v3202, %v3617
        %v3619 = vpop.f32.mrb[0].mxu0
        %v3620 = vadd.f32 %v3206, %v3619
        %3621 = vmatprep.mubr.bf16.mxu0 %v3126
        %3622 = vmatmul.mubr.bf16.gmra.mrb[0].mxu0 %v3125
        %v3623 = vpop.f32.mrb[0].mxu0
        %v3624 = vadd.f32 %v3202, %v3623
        %v3625 = vpop.f32.mrb[0].mxu0
        %v3626 = vadd.f32 %v3206, %v3625
        %v3627 = vpop.f32.mrb[0].mxu0
        %v3628 = vadd.f32 %v3202, %v3627
        %v3629 = vpop.f32.mrb[0].mxu0
        %v3630 = vadd.f32 %v3206, %v3629
        %3631 = vmatprep.mubr.bf16.mxu0 %v3130
        %3632 = vmatmul.mubr.bf16.gmra.mrb[0].mxu0 %v3129
        %v3633 = vpop.f32.mrb[0].mxu0
        %v3634 = vadd.f32 %v3202, %v3633
        %v3635 = vpop.f32.mrb[0].mxu0
        %v3636 = vadd.f32 %v3206, %v3635
        %v3637 = vpop.f32.mrb[0].mxu0
        %v3638 = vadd.f32 %v3202, %v3637
        %v3639 = vpop.f32.mrb[0].mxu0
        %v3640 = vadd.f32 %v3206, %v3639
        %3641 = vdwg.mxu0
        %3642 = vmatprep.subr.bf16.mxu0 %v3434
        %3643 = vmatpush1.bf16.msra.mxu0 %v3433
        %3644 = vmatprep.subr.bf16.mxu0 %v3436
        %3645 = vmatpush1.bf16.msra.mxu0 %v3435
        %3646 = vmatprep.subr.bf16.mxu0 %v3438
        %3647 = vmatpush1.bf16.msra.mxu0 %v3437
        %3648 = vmatprep.subr.bf16.mxu0 %v3440
        %3649 = vmatpush1.bf16.msra.mxu0 %v3439
        %3650 = vmatprep.subr.bf16.mxu0 %v3442
        %3651 = vmatpush1.bf16.msra.mxu0 %v3441
        %3652 = vmatprep.subr.bf16.mxu0 %v3444
        %3653 = vmatpush1.bf16.msra.mxu0 %v3443
        %3654 = vmatprep.subr.bf16.mxu0 %v3446
        %3655 = vmatpush1.bf16.msra.mxu0 %v3445
        %3656 = vmatprep.subr.bf16.mxu0 %v3448
        %3657 = vmatpush1.bf16.msra.mxu0 %v3447
        %3658 = vmatprep.subr.bf16.mxu0 %v3450
        %3659 = vmatpush1.bf16.msra.mxu0 %v3449
        %3660 = vmatprep.subr.bf16.mxu0 %v3452
        %3661 = vmatpush1.bf16.msra.mxu0 %v3451
        %3662 = vmatprep.subr.bf16.mxu0 %v3454
        %3663 = vmatpush1.bf16.msra.mxu0 %v3453
        %3664 = vmatprep.subr.bf16.mxu0 %v3456
        %3665 = vmatpush1.bf16.msra.mxu0 %v3455
        %3666 = vmatprep.subr.bf16.mxu0 %v3458
        %3667 = vmatpush1.bf16.msra.mxu0 %v3457
        %3668 = vmatprep.subr.bf16.mxu0 %v3460
        %3669 = vmatpush1.bf16.msra.mxu0 %v3459
        %3670 = vmatprep.subr.bf16.mxu0 %v3462
        %3671 = vmatpush1.bf16.msra.mxu0 %v3461
        %3672 = vmatprep.subr.bf16.mxu0 %v3464
        %3673 = vmatpush1.bf16.msra.mxu0 %v3463
        %3674 = vmatprep.mubr.bf16.mxu0 %v3104
        %3675 = vmatmul.mubr.bf16.gmra.mrb[0].mxu0 %v3103
        %v3676 = vpop.f32.mrb[0].mxu0
        %v3677 = vadd.f32 %v3564, %v3676
        %v3678 = vpop.f32.mrb[0].mxu0
        %v3679 = vadd.f32 %v3566, %v3678
        %v3680 = vpop.f32.mrb[0].mxu0
        %v3681 = vadd.f32 %v3568, %v3680
        %v3682 = vpop.f32.mrb[0].mxu0
        %v3683 = vadd.f32 %v3570, %v3682
        %3684 = vmatprep.mubr.bf16.mxu0 %v3108
        %3685 = vmatmul.mubr.bf16.gmra.mrb[0].mxu0 %v3107
        %v3686 = vpop.f32.mrb[0].mxu0
        %v3687 = vadd.f32 %v3574, %v3686
        %v3688 = vpop.f32.mrb[0].mxu0
        %v3689 = vadd.f32 %v3576, %v3688
        %v3690 = vpop.f32.mrb[0].mxu0
        %v3691 = vadd.f32 %v3578, %v3690
        %v3692 = vpop.f32.mrb[0].mxu0
        %v3693 = vadd.f32 %v3580, %v3692
        %3694 = vmatprep.mubr.bf16.mxu0 %v3112
        %3695 = vmatmul.mubr.bf16.gmra.mrb[0].mxu0 %v3111
        %v3696 = vpop.f32.mrb[0].mxu0
        %v3697 = vadd.f32 %v3584, %v3696
        %v3698 = vpop.f32.mrb[0].mxu0
        %v3699 = vadd.f32 %v3586, %v3698
        %v3700 = vpop.f32.mrb[0].mxu0
        %v3701 = vadd.f32 %v3588, %v3700
        %v3702 = vpop.f32.mrb[0].mxu0
        %v3703 = vadd.f32 %v3590, %v3702
        %3704 = vmatprep.mubr.bf16.mxu0 %v3116
        %3705 = vmatmul.mubr.bf16.gmra.mrb[0].mxu0 %v3115
        %v3706 = vpop.f32.mrb[0].mxu0
        %v3707 = vadd.f32 %v3594, %v3706
        %v3708 = vpop.f32.mrb[0].mxu0
        %v3709 = vadd.f32 %v3596, %v3708
        %v3710 = vpop.f32.mrb[0].mxu0
        %v3711 = vadd.f32 %v3598, %v3710
        %v3712 = vpop.f32.mrb[0].mxu0
        %v3713 = vadd.f32 %v3600, %v3712
        %3714 = vmatprep.mubr.bf16.mxu0 %v3120
        %3715 = vmatmul.mubr.bf16.gmra.mrb[0].mxu0 %v3119
        %v3716 = vpop.f32.mrb[0].mxu0
        %v3717 = vadd.f32 %v3604, %v3716
        %v3718 = vpop.f32.mrb[0].mxu0
        %v3719 = vadd.f32 %v3606, %v3718
        %v3720 = vpop.f32.mrb[0].mxu0
        %v3721 = vadd.f32 %v3608, %v3720
        %v3722 = vpop.f32.mrb[0].mxu0
        %v3723 = vadd.f32 %v3610, %v3722
        %3724 = vmatprep.mubr.bf16.mxu0 %v3124
        %3725 = vmatmul.mubr.bf16.gmra.mrb[0].mxu0 %v3123
        %v3726 = vpop.f32.mrb[0].mxu0
        %v3727 = vadd.f32 %v3614, %v3726
        %v3728 = vpop.f32.mrb[0].mxu0
        %v3729 = vadd.f32 %v3616, %v3728
        %v3730 = vpop.f32.mrb[0].mxu0
        %v3731 = vadd.f32 %v3618, %v3730
        %v3732 = vpop.f32.mrb[0].mxu0
        %v3733 = vadd.f32 %v3620, %v3732
        %3734 = vmatprep.mubr.bf16.mxu0 %v3128
        %3735 = vmatmul.mubr.bf16.gmra.mrb[0].mxu0 %v3127
        %v3736 = vpop.f32.mrb[0].mxu0
        %v3737 = vadd.f32 %v3624, %v3736
        %v3738 = vpop.f32.mrb[0].mxu0
        %v3739 = vadd.f32 %v3626, %v3738
        %v3740 = vpop.f32.mrb[0].mxu0
        %v3741 = vadd.f32 %v3628, %v3740
        %v3742 = vpop.f32.mrb[0].mxu0
        %v3743 = vadd.f32 %v3630, %v3742
        %3744 = vmatprep.mubr.bf16.mxu0 %v3132
        %3745 = vmatmul.mubr.bf16.gmra.mrb[0].mxu0 %v3131
        %v3746 = vpop.f32.mrb[0].mxu0
        %v3747 = vadd.f32 %v3634, %v3746
        %v3748 = vpop.f32.mrb[0].mxu0
        %v3749 = vadd.f32 %v3636, %v3748
        %v3750 = vpop.f32.mrb[0].mxu0
        %v3751 = vadd.f32 %v3638, %v3750
        %v3752 = vpop.f32.mrb[0].mxu0
        %v3753 = vadd.f32 %v3640, %v3752
        %3754 = vdwg.mxu0
        %v3755 = vmax.f32 %v3677, 0.0
        %v3756 = vmax.f32 %v3679, 0.0
        %v3757 = vmax.f32 %v3681, 0.0
        %v3758 = vmax.f32 %v3683, 0.0
        %v3759 = vmax.f32 %v3687, 0.0
        %v3760 = vmax.f32 %v3689, 0.0
        %v3761 = vmax.f32 %v3691, 0.0
        %v3762 = vmax.f32 %v3693, 0.0
        %v3763 = vmax.f32 %v3697, 0.0
        %v3764 = vmax.f32 %v3699, 0.0
        %v3765 = vmax.f32 %v3701, 0.0
        %v3766 = vmax.f32 %v3703, 0.0
        %v3767 = vmax.f32 %v3707, 0.0
        %v3768 = vmax.f32 %v3709, 0.0
        %v3769 = vmax.f32 %v3711, 0.0
        %v3770 = vmax.f32 %v3713, 0.0
        %v3771 = vmax.f32 %v3717, 0.0
        %v3772 = vmax.f32 %v3719, 0.0
        %v3773 = vmax.f32 %v3721, 0.0
        %v3774 = vmax.f32 %v3723, 0.0
        %v3775 = vmax.f32 %v3727, 0.0
        %v3776 = vmax.f32 %v3729, 0.0
        %v3777 = vmax.f32 %v3731, 0.0
        %v3778 = vmax.f32 %v3733, 0.0
        %v3779 = vmax.f32 %v3737, 0.0
        %v3780 = vmax.f32 %v3739, 0.0
        %v3781 = vmax.f32 %v3741, 0.0
        %v3782 = vmax.f32 %v3743, 0.0
        %v3783 = vmax.f32 %v3747, 0.0
        %v3784 = vmax.f32 %v3749, 0.0
        %v3785 = vmax.f32 %v3751, 0.0
        %v3786 = vmax.f32 %v3753, 0.0
        %v3787 = vpack.c.bf16 %v3757, %v3755
        %v3788 = vpack.c.bf16 %v3758, %v3756
        %v3789 = vpack.c.bf16 %v3761, %v3759
        %v3790 = vpack.c.bf16 %v3762, %v3760
        %v3791 = vpack.c.bf16 %v3765, %v3763
        %v3792 = vpack.c.bf16 %v3766, %v3764
        %v3793 = vpack.c.bf16 %v3769, %v3767
        %v3794 = vpack.c.bf16 %v3770, %v3768
        %v3795 = vpack.c.bf16 %v3773, %v3771
        %v3796 = vpack.c.bf16 %v3774, %v3772
        %v3797 = vpack.c.bf16 %v3777, %v3775
        %v3798 = vpack.c.bf16 %v3778, %v3776
        %v3799 = vpack.c.bf16 %v3781, %v3779
        %v3800 = vpack.c.bf16 %v3782, %v3780
        %v3801 = vpack.c.bf16 %v3785, %v3783
        %v3802 = vpack.c.bf16 %v3786, %v3784
        %v3819 = vunpack.c.l.b16 %v3787
        %v3820 = vunpack.c.l.b16 %v3788
        %v3821 = vunpack.c.h.b16 %v3787
        %v3822 = vunpack.c.h.b16 %v3788
        %v3823 = vunpack.c.l.b16 %v3789
        %v3824 = vunpack.c.l.b16 %v3790
        %v3825 = vunpack.c.h.b16 %v3789
        %v3826 = vunpack.c.h.b16 %v3790
        %v3827 = vunpack.c.l.b16 %v3791
        %v3828 = vunpack.c.l.b16 %v3792
        %v3829 = vunpack.c.h.b16 %v3791
        %v3830 = vunpack.c.h.b16 %v3792
        %v3831 = vunpack.c.l.b16 %v3793
        %v3832 = vunpack.c.l.b16 %v3794
        %v3833 = vunpack.c.h.b16 %v3793
        %v3834 = vunpack.c.h.b16 %v3794
        %v3835 = vunpack.c.l.b16 %v3795
        %v3836 = vunpack.c.l.b16 %v3796
        %v3837 = vunpack.c.h.b16 %v3795
        %v3838 = vunpack.c.h.b16 %v3796
        %v3839 = vunpack.c.l.b16 %v3797
        %v3840 = vunpack.c.l.b16 %v3798
        %v3841 = vunpack.c.h.b16 %v3797
        %v3842 = vunpack.c.h.b16 %v3798
        %v3843 = vunpack.c.l.b16 %v3799
        %v3844 = vunpack.c.l.b16 %v3800
        %v3845 = vunpack.c.h.b16 %v3799
        %v3846 = vunpack.c.h.b16 %v3800
        %v3847 = vunpack.c.l.b16 %v3801
        %v3848 = vunpack.c.l.b16 %v3802
        %v3849 = vunpack.c.h.b16 %v3801
        %v3850 = vunpack.c.h.b16 %v3802
        %v3851 = vpack.c.b16 %v3820, %v3819
        %v3852 = vpack.c.b16 %v3822, %v3821
        %v3853 = vpack.c.b16 %v3824, %v3823
        %v3854 = vpack.c.b16 %v3826, %v3825
        %v3855 = vpack.c.b16 %v3828, %v3827
        %v3856 = vpack.c.b16 %v3830, %v3829
        %v3857 = vpack.c.b16 %v3832, %v3831
        %v3858 = vpack.c.b16 %v3834, %v3833
        %v3859 = vpack.c.b16 %v3836, %v3835
        %v3860 = vpack.c.b16 %v3838, %v3837
        %v3861 = vpack.c.b16 %v3840, %v3839
        %v3862 = vpack.c.b16 %v3842, %v3841
        %v3863 = vpack.c.b16 %v3844, %v3843
        %v3864 = vpack.c.b16 %v3846, %v3845
        %v3865 = vpack.c.b16 %v3848, %v3847
        %v3866 = vpack.c.b16 %v3850, %v3849
        %3883 = vst [vmem:[%s348] sm:$0xff] %v3851
        %3884 = vst [vmem:[%s348 + $0x8] sm:$0xff] %v3852
        %3885 = vst [vmem:[%s348 + $0x10] sm:$0xff] %v3853
        %3886 = vst [vmem:[%s348 + $0x18] sm:$0xff] %v3854
        %3887 = vst [vmem:[%s348 + $0x20] sm:$0xff] %v3855
        %3888 = vst [vmem:[%s348 + $0x28] sm:$0xff] %v3856
        %3889 = vst [vmem:[%s348 + $0x30] sm:$0xff] %v3857
        %3890 = vst [vmem:[%s348 + $0x38] sm:$0xff] %v3858
        %3891 = vst [vmem:[%s348 + $0x40] sm:$0xff] %v3859
        %3892 = vst [vmem:[%s348 + $0x48] sm:$0xff] %v3860
        %3893 = vst [vmem:[%s348 + $0x50] sm:$0xff] %v3861
        %3894 = vst [vmem:[%s348 + $0x58] sm:$0xff] %v3862
        %3895 = vst [vmem:[%s348 + $0x60] sm:$0xff] %v3863
        %3896 = vst [vmem:[%s348 + $0x68] sm:$0xff] %v3864
        %3897 = vst [vmem:[%s348 + $0x70] sm:$0xff] %v3865
        %3898 = vst [vmem:[%s348 + $0x78] sm:$0xff] %v3866
        %s3899 = sand.u32 %s186, 1
        %s3900 = scalar_lea.sflag [#allocation4], %s3899
        %s3901 = sand.u32 %s186, 1
        %s3902 = smul.addr %s3901, 128
        %s3903 = scalar_lea.vmem [#allocation10], %s3902
        // Predicated region
        $region65: #{tpu_custom_call.1} parent=47 // pred_check
          %p3904 = pneg %p196
        $region66: #{tpu_custom_call.1} parent=47 // pred_check_branch
          %3906 = sbr.rel (%p3904) target = $region68
        $region67: #{tpu_custom_call.1} parent=47 // pred_region
          %s3907 = smul.u32 16, %s26
          %s3908 = ssub.s32 25, %s3907
          %p3909 = scmp.lt.s32.totalorder %s3908, 16
          %s3910 = scalar_select %p3909, %s3908, 16
          %s3911 = smul.u32 64, %s3910
          %s3912 = smul.u32 %s3911, 2
          %s3914 = ssub.s32 2048, %s3912
          %3915 = vsyncadd %s3900, %s3914
          %p3916 = scmp.ne.s32.totalorder 0, %s3912
          %s3917 = smul.addr %s3907, 2
          %s3918 = smul.addr %s3917, 64
          %s3919 = scalar_lea.hbm %s7, %s3918
          %s3920 = smul.u32 8, %s3910
          %s3921 = sshll.u32 %s3903, 4
          %s3922 = int_to_ptr.vmem [resolvable:$true] %s3921
          %s3923 = sshll.u32 %s3920, 4
          %3927 = dma.vmem_to_hbm [thread:$0]  (%p3916), %s3922, %s3923, %s3919, %s3900, 128, 128, 8
        $region68: #{tpu_custom_call.1} parent=47 // pred_fallthru
          _
      $region48: #{tpu_custom_call.1} parent=5 // pred_fallthru
        _
      %p3928 = scmp.le.s32.totalorder 2, %s21
      // Predicated region
      $region69: #{tpu_custom_call.1} parent=5 // pred_check
        %p3929 = pneg %p3928
      $region70: #{tpu_custom_call.1} parent=5 // pred_check_branch
        %3931 = sbr.rel (%p3929) target = $region72
      $region71: #{tpu_custom_call.1} parent=5 // pred_region
        %s3932 = ssub.s32 %s21, 2
        // Predicated region
        $region73: #{tpu_custom_call.1} parent=71 // pred_check
          %p3933 = pneg %p202
        $region74: #{tpu_custom_call.1} parent=71 // pred_check_branch
          %3935 = sbr.rel (%p3933) target = $region76
        $region75: #{tpu_custom_call.1} parent=71 // pred_region
          %s3936 = sand.u32 %s187, 1
          %s3937 = scalar_lea.sflag [#allocation4], %s3936
          %s3938 = sand.u32 %s187, 1
          %s3939 = smul.addr %s3938, 128
          %s3940 = scalar_lea.vmem [#allocation10], %s3939
          %3941 = dma.done %s3937, 2048
        $region76: #{tpu_custom_call.1} parent=71 // pred_fallthru
          _
      $region72: #{tpu_custom_call.1} parent=5 // pred_fallthru
        _
    $region6: #{tpu_custom_call.1} parent=1 // loop_footer
      %s25 = sadd.s32 1, %s21
    $region7: #{tpu_custom_call.1} parent=1 // loop_footer_branch
      %20 = sbr.rel target = $region3
    $region8: #{tpu_custom_call.1} parent=1 // loop_exit
      _
    %3942 = vsyncpa [#allocation3], 1
    %s3943 = scalar_lea.sflag [#allocation3], 1
    %3944 = vsyncpa %s3943, 1
    %3945 = vsyncpa [#allocation6], 1
    %3946 = vsyncpa [#allocation9], 1
    %3947 = vsyncpa [#allocation4], 1
    %s3948 = scalar_lea.sflag [#allocation4], 1
    %3949 = vsyncpa %s3948, 1

</llo_original>
